<compile_context>
chip_gen: v6e
topology: v6e:2x2x1
jax: 0.10.0
libtpu: 0.0.40
codegen_flags: <defaults>
</compile_context>

<pallas_src>
import jax
import jax.numpy as jnp
from jax.experimental import pallas as pl
from jax.experimental.pallas import tpu as pltpu

# ---- model hyperparameters (small, consistent with the module) ----
D_MODEL = 32
N_HEAD = 4
HEAD_DIM = D_MODEL // N_HEAD
DIM_FF = 64
SEQ = 8
BATCH = 2
NUM_LAYERS = 2
EPS = 1e-5  # PyTorch layer_norm_eps default

SB = SEQ * BATCH  # flattened token axis (seq-major, batch-minor: row r = s*BATCH + b)


def _layernorm(x, w, b):
    mu = jnp.mean(x, axis=-1, keepdims=True)
    var = jnp.mean((x - mu) ** 2, axis=-1, keepdims=True)
    return (x - mu) * jax.lax.rsqrt(var + EPS) * w + b


def fused_encoder_kernel(x_ref, wqkv_ref, bqkv_ref, wo_ref, bo_ref,
                         n1w_ref, n1b_ref, w1_ref, b1_ref, w2_ref, b2_ref,
                         n2w_ref, n2b_ref, fnw_ref, fnb_ref, o_ref):
    """All encoder layers + final LayerNorm on the whole (S*B, D) activation slab."""
    x = x_ref[...].astype(jnp.float32)                               # (SB, D)

    # Block-diagonal (per-batch-element) additive attention mask in the flattened
    # (seq-major, batch-minor) row ordering; hoisted out of the layer loop.
    rows = jax.lax.broadcasted_iota(jnp.int32, (SB, SB), 0)
    cols = jax.lax.broadcasted_iota(jnp.int32, (SB, SB), 1)
    bias = jnp.where((rows % BATCH) == (cols % BATCH), 0.0, -1e30).astype(jnp.float32)

    for l in range(NUM_LAYERS):                                      # static layer loop
        # ---- self-attention (matches F.multi_head_attention_forward, eval mode) ----
        qkv = jnp.dot(x, wqkv_ref[l], preferred_element_type=jnp.float32) + bqkv_ref[l]
        q = qkv[:, :D_MODEL]                      # 1/sqrt(head_dim) pre-folded into W/b
        k = qkv[:, D_MODEL:2 * D_MODEL]
        v = qkv[:, 2 * D_MODEL:]

        # head-major stacks: (H, SB, Hd) via cheap lane slices + major-axis stack
        qh = jnp.stack([q[:, h * HEAD_DIM:(h + 1) * HEAD_DIM] for h in range(N_HEAD)], axis=0)
        kh = jnp.stack([k[:, h * HEAD_DIM:(h + 1) * HEAD_DIM] for h in range(N_HEAD)], axis=0)
        vh = jnp.stack([v[:, h * HEAD_DIM:(h + 1) * HEAD_DIM] for h in range(N_HEAD)], axis=0)

        s = jnp.einsum('hqd,hkd->hqk', qh, kh,
                       preferred_element_type=jnp.float32)           # (H, SB, SB)
        s = s + bias[None, :, :]
        s = s - jnp.max(s, axis=-1, keepdims=True)
        p = jnp.exp(s)
        p = p * pl.reciprocal(jnp.sum(p, axis=-1, keepdims=True), approx=True)
        ctx = jnp.einsum('hqk,hkd->hqd', p, vh,
                         preferred_element_type=jnp.float32)         # (H, SB, Hd)
        attn = jnp.concatenate([ctx[h] for h in range(N_HEAD)], axis=-1)   # (SB, D)
        attn = jnp.dot(attn, wo_ref[l], preferred_element_type=jnp.float32) + bo_ref[l]

        x = _layernorm(x + attn, n1w_ref[l], n1b_ref[l])

        # ---- feed forward (ReLU, PyTorch default activation) ----
        h1 = jnp.dot(x, w1_ref[l], preferred_element_type=jnp.float32) + b1_ref[l]
        h1 = jnp.maximum(h1, 0.0)
        h2 = jnp.dot(h1, w2_ref[l], preferred_element_type=jnp.float32) + b2_ref[l]

        x = _layernorm(x + h2, n2w_ref[l], n2b_ref[l])

    # ---- final TransformerEncoder norm ----
    o_ref[...] = _layernorm(x, fnw_ref[...], fnb_ref[...]).astype(o_ref.dtype)


def init_stacked_params(key, num_layers):
    """Deterministic synthetic per-layer params, PyTorch shapes, pre-transposed to
    (in, out), biases as (1, out), q-scale folded in, stacked along a leading layer axis."""
    scale = 1.0 / (HEAD_DIM ** 0.5)
    acc = {name: [] for name in
           ("wqkv", "bqkv", "wo", "bo", "n1w", "n1b", "w1", "b1", "w2", "b2", "n2w", "n2b")}
    for i in range(num_layers):
        ks = jax.random.split(jax.random.fold_in(key, i), 8)
        wqkv = jax.random.normal(ks[0], (3 * D_MODEL, D_MODEL), jnp.float32) * 0.05
        bqkv = jax.random.normal(ks[1], (3 * D_MODEL,), jnp.float32) * 0.02
        wo = jax.random.normal(ks[2], (D_MODEL, D_MODEL), jnp.float32) * 0.05
        bo = jax.random.normal(ks[3], (D_MODEL,), jnp.float32) * 0.02
        w1 = jax.random.normal(ks[4], (DIM_FF, D_MODEL), jnp.float32) * 0.05
        b1 = jax.random.normal(ks[5], (DIM_FF,), jnp.float32) * 0.02
        w2 = jax.random.normal(ks[6], (D_MODEL, DIM_FF), jnp.float32) * 0.05
        b2 = jax.random.normal(ks[7], (D_MODEL,), jnp.float32) * 0.02

        wqkv_t = wqkv.T.at[:, :D_MODEL].multiply(scale)   # fold q-scale into weights
        bqkv_s = bqkv.at[:D_MODEL].multiply(scale)

        acc["wqkv"].append(wqkv_t)
        acc["bqkv"].append(bqkv_s.reshape(1, -1))
        acc["wo"].append(wo.T)
        acc["bo"].append(bo.reshape(1, -1))
        acc["n1w"].append(jnp.ones((1, D_MODEL), jnp.float32))
        acc["n1b"].append(jnp.zeros((1, D_MODEL), jnp.float32))
        acc["w1"].append(w1.T)
        acc["b1"].append(b1.reshape(1, -1))
        acc["w2"].append(w2.T)
        acc["b2"].append(b2.reshape(1, -1))
        acc["n2w"].append(jnp.ones((1, D_MODEL), jnp.float32))
        acc["n2b"].append(jnp.zeros((1, D_MODEL), jnp.float32))
    stack = lambda xs: jnp.stack(xs, axis=0)
    return tuple(stack(acc[name]) for name in
                 ("wqkv", "bqkv", "wo", "bo", "n1w", "n1b", "w1", "b1", "w2", "b2", "n2w", "n2b"))


@jax.jit
def transformer_encoder_forward(src, params, norm_w, norm_b):
    """src: (S, B, D) like PyTorch (batch_first=False). Returns (S, B, D)."""
    S, B, D = src.shape
    x = src.reshape(S * B, D)                  # free contiguous reshape, no transpose
    vmem_spec = pl.BlockSpec(memory_space=pltpu.MemorySpace.VMEM)
    out = pl.pallas_call(
        fused_encoder_kernel,
        out_shape=jax.ShapeDtypeStruct((S * B, D), src.dtype),
        in_specs=[vmem_spec] * (1 + len(params) + 2),
        out_specs=vmem_spec,
    )(x, *params, norm_w, norm_b)
    return out.reshape(S, B, D)


if __name__ == "__main__":
    root = jax.random.PRNGKey(0)
    kx, kp = jax.random.split(root)

    # src in PyTorch convention (seq, batch, d_model)
    src = jax.random.normal(kx, (SEQ, BATCH, D_MODEL), dtype=jnp.float32)

    params = init_stacked_params(kp, NUM_LAYERS)
    norm_w = jnp.ones((1, D_MODEL), jnp.float32)   # final TransformerEncoder norm
    norm_b = jnp.zeros((1, D_MODEL), jnp.float32)

    out = transformer_encoder_forward(src, params, norm_w, norm_b)
    jax.block_until_ready(out)
    assert out.shape == (SEQ, BATCH, D_MODEL)
    assert bool(jnp.all(jnp.isfinite(out)))
    print("KERNEL_OK")
</pallas_src>

<mosaic_0001>
module attributes {stable_mosaic.version = 11 : i64} {
  func.func @fused_encoder_kernel(%arg0: memref<16x32xf32, #tpu.memory_space<vmem>>, %arg1: memref<2x32x96xf32, #tpu.memory_space<vmem>>, %arg2: memref<2x1x96xf32, #tpu.memory_space<vmem>>, %arg3: memref<2x32x32xf32, #tpu.memory_space<vmem>>, %arg4: memref<2x1x32xf32, #tpu.memory_space<vmem>>, %arg5: memref<2x1x32xf32, #tpu.memory_space<vmem>>, %arg6: memref<2x1x32xf32, #tpu.memory_space<vmem>>, %arg7: memref<2x32x64xf32, #tpu.memory_space<vmem>>, %arg8: memref<2x1x64xf32, #tpu.memory_space<vmem>>, %arg9: memref<2x64x32xf32, #tpu.memory_space<vmem>>, %arg10: memref<2x1x32xf32, #tpu.memory_space<vmem>>, %arg11: memref<2x1x32xf32, #tpu.memory_space<vmem>>, %arg12: memref<2x1x32xf32, #tpu.memory_space<vmem>>, %arg13: memref<1x32xf32, #tpu.memory_space<vmem>>, %arg14: memref<1x32xf32, #tpu.memory_space<vmem>>, %arg15: memref<16x32xf32, #tpu.memory_space<vmem>>) attributes {dimension_semantics = [], scalar_prefetch = 0 : i64, scratch_operands = 0 : i64, tpu.core_type = #tpu.core_type<tc>} {
    %c0 = arith.constant 0 : index
    %c0_0 = arith.constant 0 : index
    %0 = vector.load %arg0[%c0, %c0_0] : memref<16x32xf32, #tpu.memory_space<vmem>>, vector<16x32xf32>
    %1 = tpu.iota {dimensions = array<i32: 0>} : vector<16x16xi32>
    %2 = tpu.iota {dimensions = array<i32: 1>} : vector<16x16xi32>
    %c2_i32 = arith.constant 2 : i32
    %c0_i32 = arith.constant 0 : i32
    %3 = arith.cmpi eq, %c2_i32, %c0_i32 : i32
    %c1_i32 = arith.constant 1 : i32
    %4 = arith.select %3, %c1_i32, %c2_i32 : i32
    %5 = vector.broadcast %4 : i32 to vector<16x16xi32>
    %6 = arith.remsi %1, %5 : vector<16x16xi32>
    %c0_i32_1 = arith.constant 0 : i32
    %7 = vector.broadcast %c0_i32_1 : i32 to vector<16x16xi32>
    %8 = arith.cmpi ne, %6, %7 : vector<16x16xi32>
    %c0_i32_2 = arith.constant 0 : i32
    %9 = vector.broadcast %c0_i32_2 : i32 to vector<16x16xi32>
    %10 = arith.cmpi slt, %6, %9 : vector<16x16xi32>
    %c0_i32_3 = arith.constant 0 : i32
    %11 = arith.cmpi slt, %4, %c0_i32_3 : i32
    %12 = vector.broadcast %11 : i1 to vector<16x16xi1>
    %13 = vector.broadcast %12 : vector<16x16xi1> to vector<16x16xi1>
    %14 = arith.xori %10, %13 : vector<16x16xi1>
    %15 = arith.andi %14, %8 : vector<16x16xi1>
    %16 = vector.broadcast %4 : i32 to vector<16x16xi32>
    %17 = arith.addi %6, %16 : vector<16x16xi32>
    %18 = arith.select %15, %17, %6 : vector<16x16xi1>, vector<16x16xi32>
    %c2_i32_4 = arith.constant 2 : i32
    %c0_i32_5 = arith.constant 0 : i32
    %19 = arith.cmpi eq, %c2_i32_4, %c0_i32_5 : i32
    %c1_i32_6 = arith.constant 1 : i32
    %20 = arith.select %19, %c1_i32_6, %c2_i32_4 : i32
    %21 = vector.broadcast %20 : i32 to vector<16x16xi32>
    %22 = arith.remsi %2, %21 : vector<16x16xi32>
    %c0_i32_7 = arith.constant 0 : i32
    %23 = vector.broadcast %c0_i32_7 : i32 to vector<16x16xi32>
    %24 = arith.cmpi ne, %22, %23 : vector<16x16xi32>
    %c0_i32_8 = arith.constant 0 : i32
    %25 = vector.broadcast %c0_i32_8 : i32 to vector<16x16xi32>
    %26 = arith.cmpi slt, %22, %25 : vector<16x16xi32>
    %c0_i32_9 = arith.constant 0 : i32
    %27 = arith.cmpi slt, %20, %c0_i32_9 : i32
    %28 = vector.broadcast %27 : i1 to vector<16x16xi1>
    %29 = vector.broadcast %28 : vector<16x16xi1> to vector<16x16xi1>
    %30 = arith.xori %26, %29 : vector<16x16xi1>
    %31 = arith.andi %30, %24 : vector<16x16xi1>
    %32 = vector.broadcast %20 : i32 to vector<16x16xi32>
    %33 = arith.addi %22, %32 : vector<16x16xi32>
    %34 = arith.select %31, %33, %22 : vector<16x16xi1>, vector<16x16xi32>
    %35 = arith.cmpi eq, %18, %34 : vector<16x16xi32>
    %cst = arith.constant 0.000000e+00 : f32
    %cst_10 = arith.constant -1.000000e+30 : f32
    %36 = vector.broadcast %cst : f32 to vector<16x16xf32>
    %37 = vector.broadcast %cst_10 : f32 to vector<16x16xf32>
    %38 = arith.select %35, %36, %37 : vector<16x16xi1>, vector<16x16xf32>
    %c0_11 = arith.constant 0 : index
    %c0_12 = arith.constant 0 : index
    %c0_13 = arith.constant 0 : index
    %39 = vector.load %arg1[%c0_11, %c0_12, %c0_13] : memref<2x32x96xf32, #tpu.memory_space<vmem>>, vector<1x32x96xf32>
    %40 = vector.shape_cast %39 : vector<1x32x96xf32> to vector<32x96xf32>
    %cst_14 = arith.constant dense<0.000000e+00> : vector<16x96xf32>
    %41 = tpu.matmul %0, %40, %cst_14 {dimension_numbers = #tpu.dot_dimension_numbers<[1], [0], [0], [1], [0, 0, 1, 1], [], []>} : vector<16x32xf32>, vector<32x96xf32>, vector<16x96xf32> -> vector<16x96xf32>
    %c0_15 = arith.constant 0 : index
    %c0_16 = arith.constant 0 : index
    %c0_17 = arith.constant 0 : index
    %42 = vector.load %arg2[%c0_15, %c0_16, %c0_17] : memref<2x1x96xf32, #tpu.memory_space<vmem>>, vector<1x1x96xf32>
    %43 = vector.shape_cast %42 : vector<1x1x96xf32> to vector<1x96xf32>
    %44 = vector.broadcast %43 : vector<1x96xf32> to vector<16x96xf32>
    %45 = arith.addf %41, %44 : vector<16x96xf32>
    %46 = vector.extract_strided_slice %45 {offsets = [0, 0], sizes = [16, 32], strides = [1, 1]} : vector<16x96xf32> to vector<16x32xf32>
    %47 = vector.extract_strided_slice %45 {offsets = [0, 32], sizes = [16, 32], strides = [1, 1]} : vector<16x96xf32> to vector<16x32xf32>
    %48 = vector.extract_strided_slice %45 {offsets = [0, 64], sizes = [16, 32], strides = [1, 1]} : vector<16x96xf32> to vector<16x32xf32>
    %49 = vector.extract_strided_slice %46 {offsets = [0, 0], sizes = [16, 8], strides = [1, 1]} : vector<16x32xf32> to vector<16x8xf32>
    %50 = vector.extract_strided_slice %46 {offsets = [0, 8], sizes = [16, 8], strides = [1, 1]} : vector<16x32xf32> to vector<16x8xf32>
    %51 = vector.extract_strided_slice %46 {offsets = [0, 16], sizes = [16, 8], strides = [1, 1]} : vector<16x32xf32> to vector<16x8xf32>
    %52 = vector.extract_strided_slice %46 {offsets = [0, 24], sizes = [16, 8], strides = [1, 1]} : vector<16x32xf32> to vector<16x8xf32>
    %53 = vector.shape_cast %49 : vector<16x8xf32> to vector<1x16x8xf32>
    %54 = vector.shape_cast %50 : vector<16x8xf32> to vector<1x16x8xf32>
    %55 = vector.shape_cast %51 : vector<16x8xf32> to vector<1x16x8xf32>
    %56 = vector.shape_cast %52 : vector<16x8xf32> to vector<1x16x8xf32>
    %57 = tpu.concatenate %53, %54, %55, %56 in 0 : vector<1x16x8xf32>, vector<1x16x8xf32>, vector<1x16x8xf32>, vector<1x16x8xf32> -> vector<4x16x8xf32>
    %58 = vector.extract_strided_slice %47 {offsets = [0, 0], sizes = [16, 8], strides = [1, 1]} : vector<16x32xf32> to vector<16x8xf32>
    %59 = vector.extract_strided_slice %47 {offsets = [0, 8], sizes = [16, 8], strides = [1, 1]} : vector<16x32xf32> to vector<16x8xf32>
    %60 = vector.extract_strided_slice %47 {offsets = [0, 16], sizes = [16, 8], strides = [1, 1]} : vector<16x32xf32> to vector<16x8xf32>
    %61 = vector.extract_strided_slice %47 {offsets = [0, 24], sizes = [16, 8], strides = [1, 1]} : vector<16x32xf32> to vector<16x8xf32>
    %62 = vector.shape_cast %58 : vector<16x8xf32> to vector<1x16x8xf32>
    %63 = vector.shape_cast %59 : vector<16x8xf32> to vector<1x16x8xf32>
    %64 = vector.shape_cast %60 : vector<16x8xf32> to vector<1x16x8xf32>
    %65 = vector.shape_cast %61 : vector<16x8xf32> to vector<1x16x8xf32>
    %66 = tpu.concatenate %62, %63, %64, %65 in 0 : vector<1x16x8xf32>, vector<1x16x8xf32>, vector<1x16x8xf32>, vector<1x16x8xf32> -> vector<4x16x8xf32>
    %67 = vector.extract_strided_slice %48 {offsets = [0, 0], sizes = [16, 8], strides = [1, 1]} : vector<16x32xf32> to vector<16x8xf32>
    %68 = vector.extract_strided_slice %48 {offsets = [0, 8], sizes = [16, 8], strides = [1, 1]} : vector<16x32xf32> to vector<16x8xf32>
    %69 = vector.extract_strided_slice %48 {offsets = [0, 16], sizes = [16, 8], strides = [1, 1]} : vector<16x32xf32> to vector<16x8xf32>
    %70 = vector.extract_strided_slice %48 {offsets = [0, 24], sizes = [16, 8], strides = [1, 1]} : vector<16x32xf32> to vector<16x8xf32>
    %71 = vector.shape_cast %67 : vector<16x8xf32> to vector<1x16x8xf32>
    %72 = vector.shape_cast %68 : vector<16x8xf32> to vector<1x16x8xf32>
    %73 = vector.shape_cast %69 : vector<16x8xf32> to vector<1x16x8xf32>
    %74 = vector.shape_cast %70 : vector<16x8xf32> to vector<1x16x8xf32>
    %75 = tpu.concatenate %71, %72, %73, %74 in 0 : vector<1x16x8xf32>, vector<1x16x8xf32>, vector<1x16x8xf32>, vector<1x16x8xf32> -> vector<4x16x8xf32>
    "tpu.trace_start"() <{level = 10 : i32, message = "hqd,hkd->hqk"}> : () -> ()
    %cst_18 = arith.constant dense<0.000000e+00> : vector<4x16x16xf32>
    %76 = tpu.matmul %57, %66, %cst_18 {dimension_numbers = #tpu.dot_dimension_numbers<[2], [2], [1], [1], [0, 0, 0, 1, 1, 1], [0], [0]>} : vector<4x16x8xf32>, vector<4x16x8xf32>, vector<4x16x16xf32> -> vector<4x16x16xf32>
    "tpu.trace_stop"() : () -> ()
    %77 = vector.shape_cast %38 : vector<16x16xf32> to vector<1x16x16xf32>
    %78 = vector.broadcast %77 : vector<1x16x16xf32> to vector<4x16x16xf32>
    %79 = arith.addf %76, %78 : vector<4x16x16xf32>
    %cst_19 = arith.constant dense<0xFF800000> : vector<4x16xf32>
    %80 = vector.multi_reduction <maximumf>, %79, %cst_19 [2] : vector<4x16x16xf32> to vector<4x16xf32>
    %81 = vector.shape_cast %80 : vector<4x16xf32> to vector<4x16x1xf32>
    %82 = vector.broadcast %81 : vector<4x16x1xf32> to vector<4x16x16xf32>
    %83 = arith.subf %79, %82 : vector<4x16x16xf32>
    %84 = math.exp %83 : vector<4x16x16xf32>
    %cst_20 = arith.constant dense<0.000000e+00> : vector<4x16xf32>
    %85 = vector.multi_reduction <add>, %84, %cst_20 [2] : vector<4x16x16xf32> to vector<4x16xf32>
    %86 = vector.shape_cast %85 : vector<4x16xf32> to vector<4x16x1xf32>
    %87 = tpu.reciprocal %86 {approx = true} : vector<4x16x1xf32> -> vector<4x16x1xf32>
    %88 = vector.broadcast %87 : vector<4x16x1xf32> to vector<4x16x16xf32>
    %89 = arith.mulf %84, %88 : vector<4x16x16xf32>
    "tpu.trace_start"() <{level = 10 : i32, message = "hqk,hkd->hqd"}> : () -> ()
    %cst_21 = arith.constant dense<0.000000e+00> : vector<4x16x8xf32>
    %90 = tpu.matmul %89, %75, %cst_21 {dimension_numbers = #tpu.dot_dimension_numbers<[2], [1], [1], [2], [0, 0, 0, 1, 1, 2], [0], [0]>} : vector<4x16x16xf32>, vector<4x16x8xf32>, vector<4x16x8xf32> -> vector<4x16x8xf32>
    "tpu.trace_stop"() : () -> ()
    %91 = vector.extract_strided_slice %90 {offsets = [0, 0, 0], sizes = [1, 16, 8], strides = [1, 1, 1]} : vector<4x16x8xf32> to vector<1x16x8xf32>
    %92 = vector.shape_cast %91 : vector<1x16x8xf32> to vector<16x8xf32>
    %93 = vector.extract_strided_slice %90 {offsets = [1, 0, 0], sizes = [1, 16, 8], strides = [1, 1, 1]} : vector<4x16x8xf32> to vector<1x16x8xf32>
    %94 = vector.shape_cast %93 : vector<1x16x8xf32> to vector<16x8xf32>
    %95 = vector.extract_strided_slice %90 {offsets = [2, 0, 0], sizes = [1, 16, 8], strides = [1, 1, 1]} : vector<4x16x8xf32> to vector<1x16x8xf32>
    %96 = vector.shape_cast %95 : vector<1x16x8xf32> to vector<16x8xf32>
    %97 = vector.extract_strided_slice %90 {offsets = [3, 0, 0], sizes = [1, 16, 8], strides = [1, 1, 1]} : vector<4x16x8xf32> to vector<1x16x8xf32>
    %98 = vector.shape_cast %97 : vector<1x16x8xf32> to vector<16x8xf32>
    %99 = tpu.concatenate %92, %94, %96, %98 in 1 : vector<16x8xf32>, vector<16x8xf32>, vector<16x8xf32>, vector<16x8xf32> -> vector<16x32xf32>
    %c0_22 = arith.constant 0 : index
    %c0_23 = arith.constant 0 : index
    %c0_24 = arith.constant 0 : index
    %100 = vector.load %arg3[%c0_22, %c0_23, %c0_24] : memref<2x32x32xf32, #tpu.memory_space<vmem>>, vector<1x32x32xf32>
    %101 = vector.shape_cast %100 : vector<1x32x32xf32> to vector<32x32xf32>
    %cst_25 = arith.constant dense<0.000000e+00> : vector<16x32xf32>
    %102 = tpu.matmul %99, %101, %cst_25 {dimension_numbers = #tpu.dot_dimension_numbers<[1], [0], [0], [1], [0, 0, 1, 1], [], []>} : vector<16x32xf32>, vector<32x32xf32>, vector<16x32xf32> -> vector<16x32xf32>
    %c0_26 = arith.constant 0 : index
    %c0_27 = arith.constant 0 : index
    %c0_28 = arith.constant 0 : index
    %103 = vector.load %arg4[%c0_26, %c0_27, %c0_28] : memref<2x1x32xf32, #tpu.memory_space<vmem>>, vector<1x1x32xf32>
    %104 = vector.shape_cast %103 : vector<1x1x32xf32> to vector<1x32xf32>
    %105 = vector.broadcast %104 : vector<1x32xf32> to vector<16x32xf32>
    %106 = arith.addf %102, %105 : vector<16x32xf32>
    %107 = arith.addf %0, %106 : vector<16x32xf32>
    %c0_29 = arith.constant 0 : index
    %c0_30 = arith.constant 0 : index
    %c0_31 = arith.constant 0 : index
    %108 = vector.load %arg5[%c0_29, %c0_30, %c0_31] : memref<2x1x32xf32, #tpu.memory_space<vmem>>, vector<1x1x32xf32>
    %109 = vector.shape_cast %108 : vector<1x1x32xf32> to vector<1x32xf32>
    %c0_32 = arith.constant 0 : index
    %c0_33 = arith.constant 0 : index
    %c0_34 = arith.constant 0 : index
    %110 = vector.load %arg6[%c0_32, %c0_33, %c0_34] : memref<2x1x32xf32, #tpu.memory_space<vmem>>, vector<1x1x32xf32>
    %111 = vector.shape_cast %110 : vector<1x1x32xf32> to vector<1x32xf32>
    %cst_35 = arith.constant dense<0.000000e+00> : vector<16xf32>
    %112 = vector.multi_reduction <add>, %107, %cst_35 [1] : vector<16x32xf32> to vector<16xf32>
    %113 = vector.shape_cast %112 : vector<16xf32> to vector<16x1xf32>
    %cst_36 = arith.constant 3.200000e+01 : f32
    %114 = vector.broadcast %cst_36 : f32 to vector<16x1xf32>
    %115 = arith.divf %113, %114 : vector<16x1xf32>
    %116 = vector.broadcast %115 : vector<16x1xf32> to vector<16x32xf32>
    %117 = arith.subf %107, %116 : vector<16x32xf32>
    %118 = arith.mulf %117, %117 : vector<16x32xf32>
    %cst_37 = arith.constant dense<0.000000e+00> : vector<16xf32>
    %119 = vector.multi_reduction <add>, %118, %cst_37 [1] : vector<16x32xf32> to vector<16xf32>
    %120 = vector.shape_cast %119 : vector<16xf32> to vector<16x1xf32>
    %cst_38 = arith.constant 3.200000e+01 : f32
    %121 = vector.broadcast %cst_38 : f32 to vector<16x1xf32>
    %122 = arith.divf %120, %121 : vector<16x1xf32>
    %123 = vector.broadcast %115 : vector<16x1xf32> to vector<16x32xf32>
    %124 = arith.subf %107, %123 : vector<16x32xf32>
    %cst_39 = arith.constant 9.99999974E-6 : f32
    %125 = vector.broadcast %cst_39 : f32 to vector<16x1xf32>
    %126 = arith.addf %122, %125 : vector<16x1xf32>
    %127 = math.rsqrt %126 : vector<16x1xf32>
    %128 = vector.broadcast %127 : vector<16x1xf32> to vector<16x32xf32>
    %129 = arith.mulf %124, %128 : vector<16x32xf32>
    %130 = vector.broadcast %109 : vector<1x32xf32> to vector<16x32xf32>
    %131 = arith.mulf %129, %130 : vector<16x32xf32>
    %132 = vector.broadcast %111 : vector<1x32xf32> to vector<16x32xf32>
    %133 = arith.addf %131, %132 : vector<16x32xf32>
    %c0_40 = arith.constant 0 : index
    %c0_41 = arith.constant 0 : index
    %c0_42 = arith.constant 0 : index
    %134 = vector.load %arg7[%c0_40, %c0_41, %c0_42] : memref<2x32x64xf32, #tpu.memory_space<vmem>>, vector<1x32x64xf32>
    %135 = vector.shape_cast %134 : vector<1x32x64xf32> to vector<32x64xf32>
    %cst_43 = arith.constant dense<0.000000e+00> : vector<16x64xf32>
    %136 = tpu.matmul %133, %135, %cst_43 {dimension_numbers = #tpu.dot_dimension_numbers<[1], [0], [0], [1], [0, 0, 1, 1], [], []>} : vector<16x32xf32>, vector<32x64xf32>, vector<16x64xf32> -> vector<16x64xf32>
    %c0_44 = arith.constant 0 : index
    %c0_45 = arith.constant 0 : index
    %c0_46 = arith.constant 0 : index
    %137 = vector.load %arg8[%c0_44, %c0_45, %c0_46] : memref<2x1x64xf32, #tpu.memory_space<vmem>>, vector<1x1x64xf32>
    %138 = vector.shape_cast %137 : vector<1x1x64xf32> to vector<1x64xf32>
    %139 = vector.broadcast %138 : vector<1x64xf32> to vector<16x64xf32>
    %140 = arith.addf %136, %139 : vector<16x64xf32>
    %cst_47 = arith.constant 0.000000e+00 : f32
    %141 = vector.broadcast %cst_47 : f32 to vector<16x64xf32>
    %142 = arith.maximumf %140, %141 : vector<16x64xf32>
    %c0_48 = arith.constant 0 : index
    %c0_49 = arith.constant 0 : index
    %c0_50 = arith.constant 0 : index
    %143 = vector.load %arg9[%c0_48, %c0_49, %c0_50] : memref<2x64x32xf32, #tpu.memory_space<vmem>>, vector<1x64x32xf32>
    %144 = vector.shape_cast %143 : vector<1x64x32xf32> to vector<64x32xf32>
    %cst_51 = arith.constant dense<0.000000e+00> : vector<16x32xf32>
    %145 = tpu.matmul %142, %144, %cst_51 {dimension_numbers = #tpu.dot_dimension_numbers<[1], [0], [0], [1], [0, 0, 1, 1], [], []>} : vector<16x64xf32>, vector<64x32xf32>, vector<16x32xf32> -> vector<16x32xf32>
    %c0_52 = arith.constant 0 : index
    %c0_53 = arith.constant 0 : index
    %c0_54 = arith.constant 0 : index
    %146 = vector.load %arg10[%c0_52, %c0_53, %c0_54] : memref<2x1x32xf32, #tpu.memory_space<vmem>>, vector<1x1x32xf32>
    %147 = vector.shape_cast %146 : vector<1x1x32xf32> to vector<1x32xf32>
    %148 = vector.broadcast %147 : vector<1x32xf32> to vector<16x32xf32>
    %149 = arith.addf %145, %148 : vector<16x32xf32>
    %150 = arith.addf %133, %149 : vector<16x32xf32>
    %c0_55 = arith.constant 0 : index
    %c0_56 = arith.constant 0 : index
    %c0_57 = arith.constant 0 : index
    %151 = vector.load %arg11[%c0_55, %c0_56, %c0_57] : memref<2x1x32xf32, #tpu.memory_space<vmem>>, vector<1x1x32xf32>
    %152 = vector.shape_cast %151 : vector<1x1x32xf32> to vector<1x32xf32>
    %c0_58 = arith.constant 0 : index
    %c0_59 = arith.constant 0 : index
    %c0_60 = arith.constant 0 : index
    %153 = vector.load %arg12[%c0_58, %c0_59, %c0_60] : memref<2x1x32xf32, #tpu.memory_space<vmem>>, vector<1x1x32xf32>
    %154 = vector.shape_cast %153 : vector<1x1x32xf32> to vector<1x32xf32>
    %cst_61 = arith.constant dense<0.000000e+00> : vector<16xf32>
    %155 = vector.multi_reduction <add>, %150, %cst_61 [1] : vector<16x32xf32> to vector<16xf32>
    %156 = vector.shape_cast %155 : vector<16xf32> to vector<16x1xf32>
    %cst_62 = arith.constant 3.200000e+01 : f32
    %157 = vector.broadcast %cst_62 : f32 to vector<16x1xf32>
    %158 = arith.divf %156, %157 : vector<16x1xf32>
    %159 = vector.broadcast %158 : vector<16x1xf32> to vector<16x32xf32>
    %160 = arith.subf %150, %159 : vector<16x32xf32>
    %161 = arith.mulf %160, %160 : vector<16x32xf32>
    %cst_63 = arith.constant dense<0.000000e+00> : vector<16xf32>
    %162 = vector.multi_reduction <add>, %161, %cst_63 [1] : vector<16x32xf32> to vector<16xf32>
    %163 = vector.shape_cast %162 : vector<16xf32> to vector<16x1xf32>
    %cst_64 = arith.constant 3.200000e+01 : f32
    %164 = vector.broadcast %cst_64 : f32 to vector<16x1xf32>
    %165 = arith.divf %163, %164 : vector<16x1xf32>
    %166 = vector.broadcast %158 : vector<16x1xf32> to vector<16x32xf32>
    %167 = arith.subf %150, %166 : vector<16x32xf32>
    %cst_65 = arith.constant 9.99999974E-6 : f32
    %168 = vector.broadcast %cst_65 : f32 to vector<16x1xf32>
    %169 = arith.addf %165, %168 : vector<16x1xf32>
    %170 = math.rsqrt %169 : vector<16x1xf32>
    %171 = vector.broadcast %170 : vector<16x1xf32> to vector<16x32xf32>
    %172 = arith.mulf %167, %171 : vector<16x32xf32>
    %173 = vector.broadcast %152 : vector<1x32xf32> to vector<16x32xf32>
    %174 = arith.mulf %172, %173 : vector<16x32xf32>
    %175 = vector.broadcast %154 : vector<1x32xf32> to vector<16x32xf32>
    %176 = arith.addf %174, %175 : vector<16x32xf32>
    %c1 = arith.constant 1 : index
    %c0_66 = arith.constant 0 : index
    %c0_67 = arith.constant 0 : index
    %177 = vector.load %arg1[%c1, %c0_66, %c0_67] : memref<2x32x96xf32, #tpu.memory_space<vmem>>, vector<1x32x96xf32>
    %178 = vector.shape_cast %177 : vector<1x32x96xf32> to vector<32x96xf32>
    %cst_68 = arith.constant dense<0.000000e+00> : vector<16x96xf32>
    %179 = tpu.matmul %176, %178, %cst_68 {dimension_numbers = #tpu.dot_dimension_numbers<[1], [0], [0], [1], [0, 0, 1, 1], [], []>} : vector<16x32xf32>, vector<32x96xf32>, vector<16x96xf32> -> vector<16x96xf32>
    %c1_69 = arith.constant 1 : index
    %c0_70 = arith.constant 0 : index
    %c0_71 = arith.constant 0 : index
    %180 = vector.load %arg2[%c1_69, %c0_70, %c0_71] : memref<2x1x96xf32, #tpu.memory_space<vmem>>, vector<1x1x96xf32>
    %181 = vector.shape_cast %180 : vector<1x1x96xf32> to vector<1x96xf32>
    %182 = vector.broadcast %181 : vector<1x96xf32> to vector<16x96xf32>
    %183 = arith.addf %179, %182 : vector<16x96xf32>
    %184 = vector.extract_strided_slice %183 {offsets = [0, 0], sizes = [16, 32], strides = [1, 1]} : vector<16x96xf32> to vector<16x32xf32>
    %185 = vector.extract_strided_slice %183 {offsets = [0, 32], sizes = [16, 32], strides = [1, 1]} : vector<16x96xf32> to vector<16x32xf32>
    %186 = vector.extract_strided_slice %183 {offsets = [0, 64], sizes = [16, 32], strides = [1, 1]} : vector<16x96xf32> to vector<16x32xf32>
    %187 = vector.extract_strided_slice %184 {offsets = [0, 0], sizes = [16, 8], strides = [1, 1]} : vector<16x32xf32> to vector<16x8xf32>
    %188 = vector.extract_strided_slice %184 {offsets = [0, 8], sizes = [16, 8], strides = [1, 1]} : vector<16x32xf32> to vector<16x8xf32>
    %189 = vector.extract_strided_slice %184 {offsets = [0, 16], sizes = [16, 8], strides = [1, 1]} : vector<16x32xf32> to vector<16x8xf32>
    %190 = vector.extract_strided_slice %184 {offsets = [0, 24], sizes = [16, 8], strides = [1, 1]} : vector<16x32xf32> to vector<16x8xf32>
    %191 = vector.shape_cast %187 : vector<16x8xf32> to vector<1x16x8xf32>
    %192 = vector.shape_cast %188 : vector<16x8xf32> to vector<1x16x8xf32>
    %193 = vector.shape_cast %189 : vector<16x8xf32> to vector<1x16x8xf32>
    %194 = vector.shape_cast %190 : vector<16x8xf32> to vector<1x16x8xf32>
    %195 = tpu.concatenate %191, %192, %193, %194 in 0 : vector<1x16x8xf32>, vector<1x16x8xf32>, vector<1x16x8xf32>, vector<1x16x8xf32> -> vector<4x16x8xf32>
    %196 = vector.extract_strided_slice %185 {offsets = [0, 0], sizes = [16, 8], strides = [1, 1]} : vector<16x32xf32> to vector<16x8xf32>
    %197 = vector.extract_strided_slice %185 {offsets = [0, 8], sizes = [16, 8], strides = [1, 1]} : vector<16x32xf32> to vector<16x8xf32>
    %198 = vector.extract_strided_slice %185 {offsets = [0, 16], sizes = [16, 8], strides = [1, 1]} : vector<16x32xf32> to vector<16x8xf32>
    %199 = vector.extract_strided_slice %185 {offsets = [0, 24], sizes = [16, 8], strides = [1, 1]} : vector<16x32xf32> to vector<16x8xf32>
    %200 = vector.shape_cast %196 : vector<16x8xf32> to vector<1x16x8xf32>
    %201 = vector.shape_cast %197 : vector<16x8xf32> to vector<1x16x8xf32>
    %202 = vector.shape_cast %198 : vector<16x8xf32> to vector<1x16x8xf32>
    %203 = vector.shape_cast %199 : vector<16x8xf32> to vector<1x16x8xf32>
    %204 = tpu.concatenate %200, %201, %202, %203 in 0 : vector<1x16x8xf32>, vector<1x16x8xf32>, vector<1x16x8xf32>, vector<1x16x8xf32> -> vector<4x16x8xf32>
    %205 = vector.extract_strided_slice %186 {offsets = [0, 0], sizes = [16, 8], strides = [1, 1]} : vector<16x32xf32> to vector<16x8xf32>
    %206 = vector.extract_strided_slice %186 {offsets = [0, 8], sizes = [16, 8], strides = [1, 1]} : vector<16x32xf32> to vector<16x8xf32>
    %207 = vector.extract_strided_slice %186 {offsets = [0, 16], sizes = [16, 8], strides = [1, 1]} : vector<16x32xf32> to vector<16x8xf32>
    %208 = vector.extract_strided_slice %186 {offsets = [0, 24], sizes = [16, 8], strides = [1, 1]} : vector<16x32xf32> to vector<16x8xf32>
    %209 = vector.shape_cast %205 : vector<16x8xf32> to vector<1x16x8xf32>
    %210 = vector.shape_cast %206 : vector<16x8xf32> to vector<1x16x8xf32>
    %211 = vector.shape_cast %207 : vector<16x8xf32> to vector<1x16x8xf32>
    %212 = vector.shape_cast %208 : vector<16x8xf32> to vector<1x16x8xf32>
    %213 = tpu.concatenate %209, %210, %211, %212 in 0 : vector<1x16x8xf32>, vector<1x16x8xf32>, vector<1x16x8xf32>, vector<1x16x8xf32> -> vector<4x16x8xf32>
    "tpu.trace_start"() <{level = 10 : i32, message = "hqd,hkd->hqk"}> : () -> ()
    %cst_72 = arith.constant dense<0.000000e+00> : vector<4x16x16xf32>
    %214 = tpu.matmul %195, %204, %cst_72 {dimension_numbers = #tpu.dot_dimension_numbers<[2], [2], [1], [1], [0, 0, 0, 1, 1, 1], [0], [0]>} : vector<4x16x8xf32>, vector<4x16x8xf32>, vector<4x16x16xf32> -> vector<4x16x16xf32>
    "tpu.trace_stop"() : () -> ()
    %215 = vector.shape_cast %38 : vector<16x16xf32> to vector<1x16x16xf32>
    %216 = vector.broadcast %215 : vector<1x16x16xf32> to vector<4x16x16xf32>
    %217 = arith.addf %214, %216 : vector<4x16x16xf32>
    %cst_73 = arith.constant dense<0xFF800000> : vector<4x16xf32>
    %218 = vector.multi_reduction <maximumf>, %217, %cst_73 [2] : vector<4x16x16xf32> to vector<4x16xf32>
    %219 = vector.shape_cast %218 : vector<4x16xf32> to vector<4x16x1xf32>
    %220 = vector.broadcast %219 : vector<4x16x1xf32> to vector<4x16x16xf32>
    %221 = arith.subf %217, %220 : vector<4x16x16xf32>
    %222 = math.exp %221 : vector<4x16x16xf32>
    %cst_74 = arith.constant dense<0.000000e+00> : vector<4x16xf32>
    %223 = vector.multi_reduction <add>, %222, %cst_74 [2] : vector<4x16x16xf32> to vector<4x16xf32>
    %224 = vector.shape_cast %223 : vector<4x16xf32> to vector<4x16x1xf32>
    %225 = tpu.reciprocal %224 {approx = true} : vector<4x16x1xf32> -> vector<4x16x1xf32>
    %226 = vector.broadcast %225 : vector<4x16x1xf32> to vector<4x16x16xf32>
    %227 = arith.mulf %222, %226 : vector<4x16x16xf32>
    "tpu.trace_start"() <{level = 10 : i32, message = "hqk,hkd->hqd"}> : () -> ()
    %cst_75 = arith.constant dense<0.000000e+00> : vector<4x16x8xf32>
    %228 = tpu.matmul %227, %213, %cst_75 {dimension_numbers = #tpu.dot_dimension_numbers<[2], [1], [1], [2], [0, 0, 0, 1, 1, 2], [0], [0]>} : vector<4x16x16xf32>, vector<4x16x8xf32>, vector<4x16x8xf32> -> vector<4x16x8xf32>
    "tpu.trace_stop"() : () -> ()
    %229 = vector.extract_strided_slice %228 {offsets = [0, 0, 0], sizes = [1, 16, 8], strides = [1, 1, 1]} : vector<4x16x8xf32> to vector<1x16x8xf32>
    %230 = vector.shape_cast %229 : vector<1x16x8xf32> to vector<16x8xf32>
    %231 = vector.extract_strided_slice %228 {offsets = [1, 0, 0], sizes = [1, 16, 8], strides = [1, 1, 1]} : vector<4x16x8xf32> to vector<1x16x8xf32>
    %232 = vector.shape_cast %231 : vector<1x16x8xf32> to vector<16x8xf32>
    %233 = vector.extract_strided_slice %228 {offsets = [2, 0, 0], sizes = [1, 16, 8], strides = [1, 1, 1]} : vector<4x16x8xf32> to vector<1x16x8xf32>
    %234 = vector.shape_cast %233 : vector<1x16x8xf32> to vector<16x8xf32>
    %235 = vector.extract_strided_slice %228 {offsets = [3, 0, 0], sizes = [1, 16, 8], strides = [1, 1, 1]} : vector<4x16x8xf32> to vector<1x16x8xf32>
    %236 = vector.shape_cast %235 : vector<1x16x8xf32> to vector<16x8xf32>
    %237 = tpu.concatenate %230, %232, %234, %236 in 1 : vector<16x8xf32>, vector<16x8xf32>, vector<16x8xf32>, vector<16x8xf32> -> vector<16x32xf32>
    %c1_76 = arith.constant 1 : index
    %c0_77 = arith.constant 0 : index
    %c0_78 = arith.constant 0 : index
    %238 = vector.load %arg3[%c1_76, %c0_77, %c0_78] : memref<2x32x32xf32, #tpu.memory_space<vmem>>, vector<1x32x32xf32>
    %239 = vector.shape_cast %238 : vector<1x32x32xf32> to vector<32x32xf32>
    %cst_79 = arith.constant dense<0.000000e+00> : vector<16x32xf32>
    %240 = tpu.matmul %237, %239, %cst_79 {dimension_numbers = #tpu.dot_dimension_numbers<[1], [0], [0], [1], [0, 0, 1, 1], [], []>} : vector<16x32xf32>, vector<32x32xf32>, vector<16x32xf32> -> vector<16x32xf32>
    %c1_80 = arith.constant 1 : index
    %c0_81 = arith.constant 0 : index
    %c0_82 = arith.constant 0 : index
    %241 = vector.load %arg4[%c1_80, %c0_81, %c0_82] : memref<2x1x32xf32, #tpu.memory_space<vmem>>, vector<1x1x32xf32>
    %242 = vector.shape_cast %241 : vector<1x1x32xf32> to vector<1x32xf32>
    %243 = vector.broadcast %242 : vector<1x32xf32> to vector<16x32xf32>
    %244 = arith.addf %240, %243 : vector<16x32xf32>
    %245 = arith.addf %176, %244 : vector<16x32xf32>
    %c1_83 = arith.constant 1 : index
    %c0_84 = arith.constant 0 : index
    %c0_85 = arith.constant 0 : index
    %246 = vector.load %arg5[%c1_83, %c0_84, %c0_85] : memref<2x1x32xf32, #tpu.memory_space<vmem>>, vector<1x1x32xf32>
    %247 = vector.shape_cast %246 : vector<1x1x32xf32> to vector<1x32xf32>
    %c1_86 = arith.constant 1 : index
    %c0_87 = arith.constant 0 : index
    %c0_88 = arith.constant 0 : index
    %248 = vector.load %arg6[%c1_86, %c0_87, %c0_88] : memref<2x1x32xf32, #tpu.memory_space<vmem>>, vector<1x1x32xf32>
    %249 = vector.shape_cast %248 : vector<1x1x32xf32> to vector<1x32xf32>
    %cst_89 = arith.constant dense<0.000000e+00> : vector<16xf32>
    %250 = vector.multi_reduction <add>, %245, %cst_89 [1] : vector<16x32xf32> to vector<16xf32>
    %251 = vector.shape_cast %250 : vector<16xf32> to vector<16x1xf32>
    %cst_90 = arith.constant 3.200000e+01 : f32
    %252 = vector.broadcast %cst_90 : f32 to vector<16x1xf32>
    %253 = arith.divf %251, %252 : vector<16x1xf32>
    %254 = vector.broadcast %253 : vector<16x1xf32> to vector<16x32xf32>
    %255 = arith.subf %245, %254 : vector<16x32xf32>
    %256 = arith.mulf %255, %255 : vector<16x32xf32>
    %cst_91 = arith.constant dense<0.000000e+00> : vector<16xf32>
    %257 = vector.multi_reduction <add>, %256, %cst_91 [1] : vector<16x32xf32> to vector<16xf32>
    %258 = vector.shape_cast %257 : vector<16xf32> to vector<16x1xf32>
    %cst_92 = arith.constant 3.200000e+01 : f32
    %259 = vector.broadcast %cst_92 : f32 to vector<16x1xf32>
    %260 = arith.divf %258, %259 : vector<16x1xf32>
    %261 = vector.broadcast %253 : vector<16x1xf32> to vector<16x32xf32>
    %262 = arith.subf %245, %261 : vector<16x32xf32>
    %cst_93 = arith.constant 9.99999974E-6 : f32
    %263 = vector.broadcast %cst_93 : f32 to vector<16x1xf32>
    %264 = arith.addf %260, %263 : vector<16x1xf32>
    %265 = math.rsqrt %264 : vector<16x1xf32>
    %266 = vector.broadcast %265 : vector<16x1xf32> to vector<16x32xf32>
    %267 = arith.mulf %262, %266 : vector<16x32xf32>
    %268 = vector.broadcast %247 : vector<1x32xf32> to vector<16x32xf32>
    %269 = arith.mulf %267, %268 : vector<16x32xf32>
    %270 = vector.broadcast %249 : vector<1x32xf32> to vector<16x32xf32>
    %271 = arith.addf %269, %270 : vector<16x32xf32>
    %c1_94 = arith.constant 1 : index
    %c0_95 = arith.constant 0 : index
    %c0_96 = arith.constant 0 : index
    %272 = vector.load %arg7[%c1_94, %c0_95, %c0_96] : memref<2x32x64xf32, #tpu.memory_space<vmem>>, vector<1x32x64xf32>
    %273 = vector.shape_cast %272 : vector<1x32x64xf32> to vector<32x64xf32>
    %cst_97 = arith.constant dense<0.000000e+00> : vector<16x64xf32>
    %274 = tpu.matmul %271, %273, %cst_97 {dimension_numbers = #tpu.dot_dimension_numbers<[1], [0], [0], [1], [0, 0, 1, 1], [], []>} : vector<16x32xf32>, vector<32x64xf32>, vector<16x64xf32> -> vector<16x64xf32>
    %c1_98 = arith.constant 1 : index
    %c0_99 = arith.constant 0 : index
    %c0_100 = arith.constant 0 : index
    %275 = vector.load %arg8[%c1_98, %c0_99, %c0_100] : memref<2x1x64xf32, #tpu.memory_space<vmem>>, vector<1x1x64xf32>
    %276 = vector.shape_cast %275 : vector<1x1x64xf32> to vector<1x64xf32>
    %277 = vector.broadcast %276 : vector<1x64xf32> to vector<16x64xf32>
    %278 = arith.addf %274, %277 : vector<16x64xf32>
    %cst_101 = arith.constant 0.000000e+00 : f32
    %279 = vector.broadcast %cst_101 : f32 to vector<16x64xf32>
    %280 = arith.maximumf %278, %279 : vector<16x64xf32>
    %c1_102 = arith.constant 1 : index
    %c0_103 = arith.constant 0 : index
    %c0_104 = arith.constant 0 : index
    %281 = vector.load %arg9[%c1_102, %c0_103, %c0_104] : memref<2x64x32xf32, #tpu.memory_space<vmem>>, vector<1x64x32xf32>
    %282 = vector.shape_cast %281 : vector<1x64x32xf32> to vector<64x32xf32>
    %cst_105 = arith.constant dense<0.000000e+00> : vector<16x32xf32>
    %283 = tpu.matmul %280, %282, %cst_105 {dimension_numbers = #tpu.dot_dimension_numbers<[1], [0], [0], [1], [0, 0, 1, 1], [], []>} : vector<16x64xf32>, vector<64x32xf32>, vector<16x32xf32> -> vector<16x32xf32>
    %c1_106 = arith.constant 1 : index
    %c0_107 = arith.constant 0 : index
    %c0_108 = arith.constant 0 : index
    %284 = vector.load %arg10[%c1_106, %c0_107, %c0_108] : memref<2x1x32xf32, #tpu.memory_space<vmem>>, vector<1x1x32xf32>
    %285 = vector.shape_cast %284 : vector<1x1x32xf32> to vector<1x32xf32>
    %286 = vector.broadcast %285 : vector<1x32xf32> to vector<16x32xf32>
    %287 = arith.addf %283, %286 : vector<16x32xf32>
    %288 = arith.addf %271, %287 : vector<16x32xf32>
    %c1_109 = arith.constant 1 : index
    %c0_110 = arith.constant 0 : index
    %c0_111 = arith.constant 0 : index
    %289 = vector.load %arg11[%c1_109, %c0_110, %c0_111] : memref<2x1x32xf32, #tpu.memory_space<vmem>>, vector<1x1x32xf32>
    %290 = vector.shape_cast %289 : vector<1x1x32xf32> to vector<1x32xf32>
    %c1_112 = arith.constant 1 : index
    %c0_113 = arith.constant 0 : index
    %c0_114 = arith.constant 0 : index
    %291 = vector.load %arg12[%c1_112, %c0_113, %c0_114] : memref<2x1x32xf32, #tpu.memory_space<vmem>>, vector<1x1x32xf32>
    %292 = vector.shape_cast %291 : vector<1x1x32xf32> to vector<1x32xf32>
    %cst_115 = arith.constant dense<0.000000e+00> : vector<16xf32>
    %293 = vector.multi_reduction <add>, %288, %cst_115 [1] : vector<16x32xf32> to vector<16xf32>
    %294 = vector.shape_cast %293 : vector<16xf32> to vector<16x1xf32>
    %cst_116 = arith.constant 3.200000e+01 : f32
    %295 = vector.broadcast %cst_116 : f32 to vector<16x1xf32>
    %296 = arith.divf %294, %295 : vector<16x1xf32>
    %297 = vector.broadcast %296 : vector<16x1xf32> to vector<16x32xf32>
    %298 = arith.subf %288, %297 : vector<16x32xf32>
    %299 = arith.mulf %298, %298 : vector<16x32xf32>
    %cst_117 = arith.constant dense<0.000000e+00> : vector<16xf32>
    %300 = vector.multi_reduction <add>, %299, %cst_117 [1] : vector<16x32xf32> to vector<16xf32>
    %301 = vector.shape_cast %300 : vector<16xf32> to vector<16x1xf32>
    %cst_118 = arith.constant 3.200000e+01 : f32
    %302 = vector.broadcast %cst_118 : f32 to vector<16x1xf32>
    %303 = arith.divf %301, %302 : vector<16x1xf32>
    %304 = vector.broadcast %296 : vector<16x1xf32> to vector<16x32xf32>
    %305 = arith.subf %288, %304 : vector<16x32xf32>
    %cst_119 = arith.constant 9.99999974E-6 : f32
    %306 = vector.broadcast %cst_119 : f32 to vector<16x1xf32>
    %307 = arith.addf %303, %306 : vector<16x1xf32>
    %308 = math.rsqrt %307 : vector<16x1xf32>
    %309 = vector.broadcast %308 : vector<16x1xf32> to vector<16x32xf32>
    %310 = arith.mulf %305, %309 : vector<16x32xf32>
    %311 = vector.broadcast %290 : vector<1x32xf32> to vector<16x32xf32>
    %312 = arith.mulf %310, %311 : vector<16x32xf32>
    %313 = vector.broadcast %292 : vector<1x32xf32> to vector<16x32xf32>
    %314 = arith.addf %312, %313 : vector<16x32xf32>
    %c0_120 = arith.constant 0 : index
    %c0_121 = arith.constant 0 : index
    %315 = vector.load %arg13[%c0_120, %c0_121] : memref<1x32xf32, #tpu.memory_space<vmem>>, vector<1x32xf32>
    %c0_122 = arith.constant 0 : index
    %c0_123 = arith.constant 0 : index
    %316 = vector.load %arg14[%c0_122, %c0_123] : memref<1x32xf32, #tpu.memory_space<vmem>>, vector<1x32xf32>
    %cst_124 = arith.constant dense<0.000000e+00> : vector<16xf32>
    %317 = vector.multi_reduction <add>, %314, %cst_124 [1] : vector<16x32xf32> to vector<16xf32>
    %318 = vector.shape_cast %317 : vector<16xf32> to vector<16x1xf32>
    %cst_125 = arith.constant 3.200000e+01 : f32
    %319 = vector.broadcast %cst_125 : f32 to vector<16x1xf32>
    %320 = arith.divf %318, %319 : vector<16x1xf32>
    %321 = vector.broadcast %320 : vector<16x1xf32> to vector<16x32xf32>
    %322 = arith.subf %314, %321 : vector<16x32xf32>
    %323 = arith.mulf %322, %322 : vector<16x32xf32>
    %cst_126 = arith.constant dense<0.000000e+00> : vector<16xf32>
    %324 = vector.multi_reduction <add>, %323, %cst_126 [1] : vector<16x32xf32> to vector<16xf32>
    %325 = vector.shape_cast %324 : vector<16xf32> to vector<16x1xf32>
    %cst_127 = arith.constant 3.200000e+01 : f32
    %326 = vector.broadcast %cst_127 : f32 to vector<16x1xf32>
    %327 = arith.divf %325, %326 : vector<16x1xf32>
    %328 = vector.broadcast %320 : vector<16x1xf32> to vector<16x32xf32>
    %329 = arith.subf %314, %328 : vector<16x32xf32>
    %cst_128 = arith.constant 9.99999974E-6 : f32
    %330 = vector.broadcast %cst_128 : f32 to vector<16x1xf32>
    %331 = arith.addf %327, %330 : vector<16x1xf32>
    %332 = math.rsqrt %331 : vector<16x1xf32>
    %333 = vector.broadcast %332 : vector<16x1xf32> to vector<16x32xf32>
    %334 = arith.mulf %329, %333 : vector<16x32xf32>
    %335 = vector.broadcast %315 : vector<1x32xf32> to vector<16x32xf32>
    %336 = arith.mulf %334, %335 : vector<16x32xf32>
    %337 = vector.broadcast %316 : vector<1x32xf32> to vector<16x32xf32>
    %338 = arith.addf %336, %337 : vector<16x32xf32>
    %c0_129 = arith.constant 0 : index
    %c0_130 = arith.constant 0 : index
    %339 = vector.load %arg15[%c0_129, %c0_130] : memref<16x32xf32, #tpu.memory_space<vmem>>, vector<16x32xf32>
    tpu.vector_store %arg15[%c0_129, %c0_130], %338 {strides = array<i32>} : memref<16x32xf32, #tpu.memory_space<vmem>>, vector<16x32xf32>,
    return
  }
}

</mosaic_0001>

<llo_original>
// kernel: transformer_encoder_forward.1
$region0: #{transformer_encoder_forward.1}
  #allocation0 [shape = 'u32[]', space=smem, size = 0x4, offset = 0x4, fixed_abs, tag = 'smem constant byte address 0x4 - core index']
  #allocation1 [shape = 'u32[144,128]{1,0:T(1,128)}', space=vmem, size = 0x12000, scoped, tag = 'internal scratch']
  %s0 = inlined_call_operand.hbm [shape: f32[16,32], index: 0, kind: input, shape index: {}]
  %s1 = inlined_call_operand.vmem [shape: f32[2,32,96], index: 1, kind: input, shape index: {}]
  %s2 = inlined_call_operand.vmem [shape: f32[2,1,96], index: 2, kind: input, shape index: {}]
  %s3 = inlined_call_operand.vmem [shape: f32[2,32,32], index: 3, kind: input, shape index: {}]
  %s4 = inlined_call_operand.vmem [shape: f32[2,1,32], index: 4, kind: input, shape index: {}]
  %s5 = inlined_call_operand.vmem [shape: f32[2,1,32], index: 5, kind: input, shape index: {}]
  %s6 = inlined_call_operand.vmem [shape: f32[2,1,32], index: 6, kind: input, shape index: {}]
  %s7 = inlined_call_operand.vmem [shape: f32[2,32,64], index: 7, kind: input, shape index: {}]
  %s8 = inlined_call_operand.vmem [shape: f32[2,1,64], index: 8, kind: input, shape index: {}]
  %s9 = inlined_call_operand.vmem [shape: f32[2,64,32], index: 9, kind: input, shape index: {}]
  %s10 = inlined_call_operand.vmem [shape: f32[2,1,32], index: 10, kind: input, shape index: {}]
  %s11 = inlined_call_operand.vmem [shape: f32[2,1,32], index: 11, kind: input, shape index: {}]
  %s12 = inlined_call_operand.vmem [shape: f32[2,1,32], index: 12, kind: input, shape index: {}]
  %s13 = inlined_call_operand.vmem [shape: f32[1,32], index: 13, kind: input, shape index: {}]
  %s14 = inlined_call_operand.vmem [shape: f32[1,32], index: 14, kind: input, shape index: {}]
  %s15 = inlined_call_operand.hbm [shape: f32[16,32], index: 15, kind: output, shape index: {}]
  %s16 = sld [smem:[#allocation0]]
  $region74: #{transformer_encoder_forward.1} parent=0
    _
  %s18 = ssub.s32 1, %s16
  %s19 = scalar_select 0, %s18, %s16
  $region1: #{transformer_encoder_forward.1} parent=0
    #allocation2 [shape = 'u8[8192]{0}', space=vmem, size = 0x2000, scoped, tag = 'input window, operand 0, single buffered']
    #allocation3 [shape = 's32[1]{0}', space=sflag, size = 0x4, scoped, tag = 'scoped memory for transformer_encoder_forward.1']
    #allocation4 [shape = 's32[1]{0}', space=sflag, size = 0x4, scoped, tag = 'scoped memory for transformer_encoder_forward.1']
    #allocation5 [shape = 'u8[8192]{0}', space=vmem, size = 0x2000, scoped, tag = 'output window, operand 0, single buffered']
    %20 = vsyncpa [#allocation3], 0
    %21 = vsyncpa [#allocation4], 0
    // Predicated region
    $region2: #{transformer_encoder_forward.1} parent=1 // pred_check
      _
    $region3: #{transformer_encoder_forward.1} parent=1 // pred_check_branch
      %23 = sbr.rel (0) target = $region5
    $region4: #{transformer_encoder_forward.1} parent=1 // pred_region
      %s25 = ssub.s32 256, 256
      %26 = vsyncadd [#allocation3], %s25
      %s27 = sshll.u32 [#allocation2], 4
      %s28 = int_to_ptr.vmem [resolvable:$true] %s27
      %33 = dma.hbm_to_vmem [thread:$0]  %s0, 256, %s28, [#allocation3], 128, 128, 8
    $region5: #{transformer_encoder_forward.1} parent=1 // pred_fallthru
      _
    // Predicated region
    $region6: #{transformer_encoder_forward.1} parent=1 // pred_check
      _
    $region7: #{transformer_encoder_forward.1} parent=1 // pred_check_branch
      %35 = sbr.rel (0) target = $region9
    $region8: #{transformer_encoder_forward.1} parent=1 // pred_region
      _
    $region9: #{transformer_encoder_forward.1} parent=1 // pred_fallthru
      _
    // Predicated region
    $region10: #{transformer_encoder_forward.1} parent=1 // pred_check
      _
    $region11: #{transformer_encoder_forward.1} parent=1 // pred_check_branch
      %37 = sbr.rel (0) target = $region13
    $region12: #{transformer_encoder_forward.1} parent=1 // pred_region
      _
    $region13: #{transformer_encoder_forward.1} parent=1 // pred_fallthru
      _
    // Predicated region
    $region14: #{transformer_encoder_forward.1} parent=1 // pred_check
      _
    $region15: #{transformer_encoder_forward.1} parent=1 // pred_check_branch
      %39 = sbr.rel (0) target = $region17
    $region16: #{transformer_encoder_forward.1} parent=1 // pred_region
      _
    $region17: #{transformer_encoder_forward.1} parent=1 // pred_fallthru
      _
    // Predicated region
    $region18: #{transformer_encoder_forward.1} parent=1 // pred_check
      _
    $region19: #{transformer_encoder_forward.1} parent=1 // pred_check_branch
      %41 = sbr.rel (0) target = $region21
    $region20: #{transformer_encoder_forward.1} parent=1 // pred_region
      _
    $region21: #{transformer_encoder_forward.1} parent=1 // pred_fallthru
      _
    // Predicated region
    $region22: #{transformer_encoder_forward.1} parent=1 // pred_check
      _
    $region23: #{transformer_encoder_forward.1} parent=1 // pred_check_branch
      %43 = sbr.rel (0) target = $region25
    $region24: #{transformer_encoder_forward.1} parent=1 // pred_region
      _
    $region25: #{transformer_encoder_forward.1} parent=1 // pred_fallthru
      _
    // Predicated region
    $region26: #{transformer_encoder_forward.1} parent=1 // pred_check
      _
    $region27: #{transformer_encoder_forward.1} parent=1 // pred_check_branch
      %45 = sbr.rel (0) target = $region29
    $region28: #{transformer_encoder_forward.1} parent=1 // pred_region
      _
    $region29: #{transformer_encoder_forward.1} parent=1 // pred_fallthru
      _
    // Predicated region
    $region30: #{transformer_encoder_forward.1} parent=1 // pred_check
      _
    $region31: #{transformer_encoder_forward.1} parent=1 // pred_check_branch
      %47 = sbr.rel (0) target = $region33
    $region32: #{transformer_encoder_forward.1} parent=1 // pred_region
      _
    $region33: #{transformer_encoder_forward.1} parent=1 // pred_fallthru
      _
    // Predicated region
    $region34: #{transformer_encoder_forward.1} parent=1 // pred_check
      _
    $region35: #{transformer_encoder_forward.1} parent=1 // pred_check_branch
      %49 = sbr.rel (0) target = $region37
    $region36: #{transformer_encoder_forward.1} parent=1 // pred_region
      _
    $region37: #{transformer_encoder_forward.1} parent=1 // pred_fallthru
      _
    // Predicated region
    $region38: #{transformer_encoder_forward.1} parent=1 // pred_check
      _
    $region39: #{transformer_encoder_forward.1} parent=1 // pred_check_branch
      %51 = sbr.rel (0) target = $region41
    $region40: #{transformer_encoder_forward.1} parent=1 // pred_region
      _
    $region41: #{transformer_encoder_forward.1} parent=1 // pred_fallthru
      _
    // Predicated region
    $region42: #{transformer_encoder_forward.1} parent=1 // pred_check
      _
    $region43: #{transformer_encoder_forward.1} parent=1 // pred_check_branch
      %53 = sbr.rel (0) target = $region45
    $region44: #{transformer_encoder_forward.1} parent=1 // pred_region
      _
    $region45: #{transformer_encoder_forward.1} parent=1 // pred_fallthru
      _
    // Predicated region
    $region46: #{transformer_encoder_forward.1} parent=1 // pred_check
      _
    $region47: #{transformer_encoder_forward.1} parent=1 // pred_check_branch
      %55 = sbr.rel (0) target = $region49
    $region48: #{transformer_encoder_forward.1} parent=1 // pred_region
      _
    $region49: #{transformer_encoder_forward.1} parent=1 // pred_fallthru
      _
    // Predicated region
    $region50: #{transformer_encoder_forward.1} parent=1 // pred_check
      _
    $region51: #{transformer_encoder_forward.1} parent=1 // pred_check_branch
      %57 = sbr.rel (0) target = $region53
    $region52: #{transformer_encoder_forward.1} parent=1 // pred_region
      _
    $region53: #{transformer_encoder_forward.1} parent=1 // pred_fallthru
      _
    // Predicated region
    $region54: #{transformer_encoder_forward.1} parent=1 // pred_check
      _
    $region55: #{transformer_encoder_forward.1} parent=1 // pred_check_branch
      %59 = sbr.rel (0) target = $region57
    $region56: #{transformer_encoder_forward.1} parent=1 // pred_region
      _
    $region57: #{transformer_encoder_forward.1} parent=1 // pred_fallthru
      _
    // Predicated region
    $region58: #{transformer_encoder_forward.1} parent=1 // pred_check
      _
    $region59: #{transformer_encoder_forward.1} parent=1 // pred_check_branch
      %61 = sbr.rel (0) target = $region61
    $region60: #{transformer_encoder_forward.1} parent=1 // pred_region
      _
    $region61: #{transformer_encoder_forward.1} parent=1 // pred_fallthru
      _
    // Predicated region
    $region62: #{transformer_encoder_forward.1} parent=1 // pred_check
      _
    $region63: #{transformer_encoder_forward.1} parent=1 // pred_check_branch
      %63 = sbr.rel (0) target = $region65
    $region64: #{transformer_encoder_forward.1} parent=1 // pred_region
      %64 = dma.done [#allocation3], 256
    $region65: #{transformer_encoder_forward.1} parent=1 // pred_fallthru
      _
    %v65 = vld [vmem:[#allocation2] sm:$0xff]
    %v66 = vld [vmem:[#allocation2 + $0x8] sm:$0xff]
    %v67 = vlaneseq
    %v68 = vshrl.u32 %v67, 7
    %v69 = vadd.s32 %v68, 8
    %v70 = vlaneseq
    %v71 = vand.u32 %v70, 127
    %vm72 = vcmp.lt.s32.totalorder %v68, 0
    %v73 = vsub.s32 0, %v68
    %v74 = vsel %vm72, %v73, %v68
    %v75 = vshrl.u32 %v74, 1
    %v76 = vand.u32 %v74, 1
    %v77 = vsub.s32 0, %v76
    %v78 = vsel %vm72, %v77, %v76
    %vm79 = vcmp.lt.s32.totalorder %v69, 0
    %v80 = vsub.s32 0, %v69
    %v81 = vsel %vm79, %v80, %v69
    %v82 = vshrl.u32 %v81, 1
    %v83 = vand.u32 %v81, 1
    %v84 = vsub.s32 0, %v83
    %v85 = vsel %vm79, %v84, %v83
    %vm86 = vcmp.ne.s32.totalorder %v78, 0
    %vm87 = vcmp.ne.s32.totalorder %v85, 0
    %vm88 = vcmp.lt.s32.totalorder %v78, 0
    %vm89 = vcmp.lt.s32.totalorder %v85, 0
    %vm90 = vmand %vm88, %vm86
    %vm91 = vmand %vm89, %vm87
    %v92 = vadd.s32 %v78, 2
    %v93 = vadd.s32 %v85, 2
    %v94 = vsel %vm90, %v92, %v78
    %v95 = vsel %vm91, %v93, %v85
    %vm96 = vcmp.lt.s32.totalorder %v71, 0
    %v97 = vsub.s32 0, %v71
    %v98 = vsel %vm96, %v97, %v71
    %v99 = vshrl.u32 %v98, 1
    %v100 = vand.u32 %v98, 1
    %v101 = vsub.s32 0, %v100
    %v102 = vsel %vm96, %v101, %v100
    %vm103 = vcmp.ne.s32.totalorder %v102, 0
    %vm104 = vcmp.lt.s32.totalorder %v102, 0
    %vm105 = vmand %vm104, %vm103
    %v106 = vadd.s32 %v102, 2
    %v107 = vsel %vm105, %v106, %v102
    %vm108 = vcmp.eq.s32.totalorder %v94, %v107
    %vm109 = vcmp.eq.s32.totalorder %v95, %v107
    %v110 = vsel %vm108, 0.0, -1e+30
    %v111 = vsel %vm109, 0.0, -1e+30
    %v112 = vld [vmem:[%s1] sm:$0xff]
    %v113 = vld [vmem:[%s1 + $0x8] sm:$0xff]
    %v114 = vld [vmem:[%s1 + $0x10] sm:$0xff]
    %v115 = vld [vmem:[%s1 + $0x18] sm:$0xff]
    %v116 = vld [vmem:[%s2] sm:$0x1]
    %v118 = vlaneseq
    %v119 = vshrl.u32 %v118, 7
    %v120 = vsub.s32 0, %v119
    %v121 = vrot.slane %v116, %v120
    %vm123 = vcmask 261120
    %v125 = vsel %vm123, %v65, 0
    %v128 = vsel %vm123, %v66, 0
    %130 = vmatprep.subr.mxu0 0.0
    %131 = vmatpush1.msra.mxu0 0.0
    %132 = vmatprep.subr.mxu0 0.0
    %133 = vmatpush1.msra.mxu0 0.0
    %134 = vmatprep.subr.mxu0 0.0
    %135 = vmatpush1.msra.mxu0 0.0
    %136 = vmatprep.subr.mxu0 0.0
    %137 = vmatpush1.msra.mxu0 0.0
    %138 = vmatprep.subr.mxu0 0.0
    %139 = vmatpush1.msra.mxu0 0.0
    %140 = vmatprep.subr.mxu0 0.0
    %141 = vmatpush1.msra.mxu0 0.0
    %142 = vmatprep.subr.mxu0 0.0
    %143 = vmatpush1.msra.mxu0 0.0
    %144 = vmatprep.subr.mxu0 0.0
    %145 = vmatpush1.msra.mxu0 0.0
    %146 = vmatprep.subr.mxu0 0.0
    %147 = vmatpush1.msra.mxu0 0.0
    %148 = vmatprep.subr.mxu0 0.0
    %149 = vmatpush1.msra.mxu0 0.0
    %150 = vmatprep.subr.mxu0 0.0
    %151 = vmatpush1.msra.mxu0 0.0
    %152 = vmatprep.subr.mxu0 0.0
    %153 = vmatpush1.msra.mxu0 0.0
    %154 = vmatprep.subr.mxu0 0.0
    %155 = vmatpush1.msra.mxu0 %v115
    %156 = vmatprep.subr.mxu0 0.0
    %157 = vmatpush1.msra.mxu0 %v114
    %158 = vmatprep.subr.mxu0 0.0
    %159 = vmatpush1.msra.mxu0 %v113
    %160 = vmatprep.subr.mxu0 0.0
    %161 = vmatpush1.msra.mxu0 %v112
    %162 = vmatprep.subr.mxu0 0.0
    %163 = vmatpush2.msra.mxu0 0.0
    %164 = vmatprep.subr.mxu0 0.0
    %165 = vmatpush2.msra.mxu0 0.0
    %166 = vmatprep.subr.mxu0 0.0
    %167 = vmatpush2.msra.mxu0 0.0
    %168 = vmatprep.subr.mxu0 0.0
    %169 = vmatpush2.msra.mxu0 0.0
    %170 = vmatprep.subr.mxu0 0.0
    %171 = vmatpush2.msra.mxu0 0.0
    %172 = vmatprep.subr.mxu0 0.0
    %173 = vmatpush2.msra.mxu0 0.0
    %174 = vmatprep.subr.mxu0 0.0
    %175 = vmatpush2.msra.mxu0 0.0
    %176 = vmatprep.subr.mxu0 0.0
    %177 = vmatpush2.msra.mxu0 0.0
    %178 = vmatprep.subr.mxu0 0.0
    %179 = vmatpush2.msra.mxu0 0.0
    %180 = vmatprep.subr.mxu0 0.0
    %181 = vmatpush2.msra.mxu0 0.0
    %182 = vmatprep.subr.mxu0 0.0
    %183 = vmatpush2.msra.mxu0 0.0
    %184 = vmatprep.subr.mxu0 0.0
    %185 = vmatpush2.msra.mxu0 0.0
    %186 = vmatprep.subr.mxu0 0.0
    %187 = vmatpush2.msra.mxu0 0.0
    %188 = vmatprep.subr.mxu0 0.0
    %189 = vmatpush2.msra.mxu0 0.0
    %190 = vmatprep.subr.mxu0 0.0
    %191 = vmatpush2.msra.mxu0 0.0
    %192 = vmatprep.subr.mxu0 0.0
    %193 = vmatpush2.msra.mxu0 0.0
    %194 = vmatprep.mubr.f32.mxu0 0.0
    %195 = vmatmul.mubr.f32.gmra.mxu0 %v125
    %v196 = vpop.f32.mrf.mxu0
    %v197 = vadd.f32 %v121, %v196
    %v198 = vpop.f32.mrf.mxu0
    %199 = vmatprep.mubr.f32.mxu0 0.0
    %200 = vmatmul.mubr.f32.gmra.mxu0 %v128
    %v201 = vpop.f32.mrf.mxu0
    %v202 = vadd.f32 %v121, %v201
    %v203 = vpop.f32.mrf.mxu0
    %204 = vdwg.mxu0
    %207 = vrot.lane.b32.xlu0 %v197, 120
    %v208 = vpop.permute.xlu0 %207
    %209 = vrot.lane.b32.xlu0 %v202, 120
    %v210 = vpop.permute.xlu0 %209
    %211 = vrot.lane.b32.xlu0 %v197, 112
    %v212 = vpop.permute.xlu0 %211
    %213 = vrot.lane.b32.xlu0 %v202, 112
    %v214 = vpop.permute.xlu0 %213
    %215 = vrot.lane.b32.xlu0 %v197, 104
    %v216 = vpop.permute.xlu0 %215
    %217 = vrot.lane.b32.xlu0 %v202, 104
    %v218 = vpop.permute.xlu0 %217
    %219 = vrot.lane.b32.xlu0 %v197, 96
    %v220 = vpop.permute.xlu0 %219
    %221 = vrot.lane.b32.xlu0 %v202, 96
    %v222 = vpop.permute.xlu0 %221
    %vm223 = vcmask 64512
    %v224 = vsel %vm223, %v197, 0
    %v226 = vsel %vm223, %v202, 0
    %v228 = vsel %vm223, %v220, 0
    %v230 = vsel %vm223, %v222, 0
    %232 = vmatprep.subr.mxu0 0.0
    %233 = vmatpush1.xpose.msra.mxu0 0.0
    %234 = vmatprep.subr.mxu0 0.0
    %235 = vmatpush1.xpose.msra.mxu0 0.0
    %236 = vmatprep.subr.mxu0 0.0
    %237 = vmatpush1.xpose.msra.mxu0 0.0
    %238 = vmatprep.subr.mxu0 0.0
    %239 = vmatpush1.xpose.msra.mxu0 0.0
    %240 = vmatprep.subr.mxu0 0.0
    %241 = vmatpush1.xpose.msra.mxu0 0.0
    %242 = vmatprep.subr.mxu0 0.0
    %243 = vmatpush1.xpose.msra.mxu0 0.0
    %244 = vmatprep.subr.mxu0 0.0
    %245 = vmatpush1.xpose.msra.mxu0 0.0
    %246 = vmatprep.subr.mxu0 0.0
    %247 = vmatpush1.xpose.msra.mxu0 0.0
    %248 = vmatprep.subr.mxu0 0.0
    %249 = vmatpush1.xpose.msra.mxu0 0.0
    %250 = vmatprep.subr.mxu0 0.0
    %251 = vmatpush1.xpose.msra.mxu0 0.0
    %252 = vmatprep.subr.mxu0 0.0
    %253 = vmatpush1.xpose.msra.mxu0 0.0
    %254 = vmatprep.subr.mxu0 0.0
    %255 = vmatpush1.xpose.msra.mxu0 0.0
    %256 = vmatprep.subr.mxu0 0.0
    %257 = vmatpush1.xpose.msra.mxu0 0.0
    %258 = vmatprep.subr.mxu0 0.0
    %259 = vmatpush1.xpose.msra.mxu0 0.0
    %260 = vmatprep.subr.mxu0 0.0
    %261 = vmatpush1.xpose.msra.mxu0 %v230
    %262 = vmatprep.subr.mxu0 0.0
    %263 = vmatpush1.xpose.msra.mxu0 %v228
    %264 = vmatprep.subr.mxu0 0.0
    %265 = vmatpush2.xpose.msra.mxu0 0.0
    %266 = vmatprep.subr.mxu0 0.0
    %267 = vmatpush2.xpose.msra.mxu0 0.0
    %268 = vmatprep.subr.mxu0 0.0
    %269 = vmatpush2.xpose.msra.mxu0 0.0
    %270 = vmatprep.subr.mxu0 0.0
    %271 = vmatpush2.xpose.msra.mxu0 0.0
    %272 = vmatprep.subr.mxu0 0.0
    %273 = vmatpush2.xpose.msra.mxu0 0.0
    %274 = vmatprep.subr.mxu0 0.0
    %275 = vmatpush2.xpose.msra.mxu0 0.0
    %276 = vmatprep.subr.mxu0 0.0
    %277 = vmatpush2.xpose.msra.mxu0 0.0
    %278 = vmatprep.subr.mxu0 0.0
    %279 = vmatpush2.xpose.msra.mxu0 0.0
    %280 = vmatprep.subr.mxu0 0.0
    %281 = vmatpush2.xpose.msra.mxu0 0.0
    %282 = vmatprep.subr.mxu0 0.0
    %283 = vmatpush2.xpose.msra.mxu0 0.0
    %284 = vmatprep.subr.mxu0 0.0
    %285 = vmatpush2.xpose.msra.mxu0 0.0
    %286 = vmatprep.subr.mxu0 0.0
    %287 = vmatpush2.xpose.msra.mxu0 0.0
    %288 = vmatprep.subr.mxu0 0.0
    %289 = vmatpush2.xpose.msra.mxu0 0.0
    %290 = vmatprep.subr.mxu0 0.0
    %291 = vmatpush2.xpose.msra.mxu0 0.0
    %292 = vmatprep.subr.mxu0 0.0
    %293 = vmatpush2.xpose.msra.mxu0 0.0
    %294 = vmatprep.subr.mxu0 0.0
    %295 = vmatpush2.xpose.msra.mxu0 0.0
    %296 = vmatprep.mubr.f32.mxu0 0.0
    %297 = vmatmul.mubr.f32.gmra.mxu0 %v224
    %v298 = vpop.f32.mrf.mxu0
    %v299 = vadd.f32 %v110, %v298
    %v300 = vpop.f32.mrf.mxu0
    %301 = vmatprep.mubr.f32.mxu0 0.0
    %302 = vmatmul.mubr.f32.gmra.mxu0 %v226
    %v303 = vpop.f32.mrf.mxu0
    %v304 = vadd.f32 %v111, %v303
    %v305 = vpop.f32.mrf.mxu0
    %306 = vdwg.mxu0
    %307 = vrot.lane.b32.xlu0 %v208, 96
    %v308 = vpop.permute.xlu0 %307
    %309 = vrot.lane.b32.xlu0 %v210, 96
    %v310 = vpop.permute.xlu0 %309
    %v311 = vsel %vm223, %v208, 0
    %v313 = vsel %vm223, %v210, 0
    %v315 = vsel %vm223, %v308, 0
    %v317 = vsel %vm223, %v310, 0
    %319 = vmatprep.subr.mxu0 0.0
    %320 = vmatpush1.xpose.msra.mxu0 0.0
    %321 = vmatprep.subr.mxu0 0.0
    %322 = vmatpush1.xpose.msra.mxu0 0.0
    %323 = vmatprep.subr.mxu0 0.0
    %324 = vmatpush1.xpose.msra.mxu0 0.0
    %325 = vmatprep.subr.mxu0 0.0
    %326 = vmatpush1.xpose.msra.mxu0 0.0
    %327 = vmatprep.subr.mxu0 0.0
    %328 = vmatpush1.xpose.msra.mxu0 0.0
    %329 = vmatprep.subr.mxu0 0.0
    %330 = vmatpush1.xpose.msra.mxu0 0.0
    %331 = vmatprep.subr.mxu0 0.0
    %332 = vmatpush1.xpose.msra.mxu0 0.0
    %333 = vmatprep.subr.mxu0 0.0
    %334 = vmatpush1.xpose.msra.mxu0 0.0
    %335 = vmatprep.subr.mxu0 0.0
    %336 = vmatpush1.xpose.msra.mxu0 0.0
    %337 = vmatprep.subr.mxu0 0.0
    %338 = vmatpush1.xpose.msra.mxu0 0.0
    %339 = vmatprep.subr.mxu0 0.0
    %340 = vmatpush1.xpose.msra.mxu0 0.0
    %341 = vmatprep.subr.mxu0 0.0
    %342 = vmatpush1.xpose.msra.mxu0 0.0
    %343 = vmatprep.subr.mxu0 0.0
    %344 = vmatpush1.xpose.msra.mxu0 0.0
    %345 = vmatprep.subr.mxu0 0.0
    %346 = vmatpush1.xpose.msra.mxu0 0.0
    %347 = vmatprep.subr.mxu0 0.0
    %348 = vmatpush1.xpose.msra.mxu0 %v317
    %349 = vmatprep.subr.mxu0 0.0
    %350 = vmatpush1.xpose.msra.mxu0 %v315
    %351 = vmatprep.subr.mxu0 0.0
    %352 = vmatpush2.xpose.msra.mxu0 0.0
    %353 = vmatprep.subr.mxu0 0.0
    %354 = vmatpush2.xpose.msra.mxu0 0.0
    %355 = vmatprep.subr.mxu0 0.0
    %356 = vmatpush2.xpose.msra.mxu0 0.0
    %357 = vmatprep.subr.mxu0 0.0
    %358 = vmatpush2.xpose.msra.mxu0 0.0
    %359 = vmatprep.subr.mxu0 0.0
    %360 = vmatpush2.xpose.msra.mxu0 0.0
    %361 = vmatprep.subr.mxu0 0.0
    %362 = vmatpush2.xpose.msra.mxu0 0.0
    %363 = vmatprep.subr.mxu0 0.0
    %364 = vmatpush2.xpose.msra.mxu0 0.0
    %365 = vmatprep.subr.mxu0 0.0
    %366 = vmatpush2.xpose.msra.mxu0 0.0
    %367 = vmatprep.subr.mxu0 0.0
    %368 = vmatpush2.xpose.msra.mxu0 0.0
    %369 = vmatprep.subr.mxu0 0.0
    %370 = vmatpush2.xpose.msra.mxu0 0.0
    %371 = vmatprep.subr.mxu0 0.0
    %372 = vmatpush2.xpose.msra.mxu0 0.0
    %373 = vmatprep.subr.mxu0 0.0
    %374 = vmatpush2.xpose.msra.mxu0 0.0
    %375 = vmatprep.subr.mxu0 0.0
    %376 = vmatpush2.xpose.msra.mxu0 0.0
    %377 = vmatprep.subr.mxu0 0.0
    %378 = vmatpush2.xpose.msra.mxu0 0.0
    %379 = vmatprep.subr.mxu0 0.0
    %380 = vmatpush2.xpose.msra.mxu0 0.0
    %381 = vmatprep.subr.mxu0 0.0
    %382 = vmatpush2.xpose.msra.mxu0 0.0
    %383 = vmatprep.mubr.f32.mxu0 0.0
    %384 = vmatmul.mubr.f32.gmra.mxu0 %v311
    %v385 = vpop.f32.mrf.mxu0
    %v386 = vadd.f32 %v110, %v385
    %v387 = vpop.f32.mrf.mxu0
    %388 = vmatprep.mubr.f32.mxu0 0.0
    %389 = vmatmul.mubr.f32.gmra.mxu0 %v313
    %v390 = vpop.f32.mrf.mxu0
    %v391 = vadd.f32 %v111, %v390
    %v392 = vpop.f32.mrf.mxu0
    %393 = vdwg.mxu0
    %394 = vrot.lane.b32.xlu0 %v212, 96
    %v395 = vpop.permute.xlu0 %394
    %396 = vrot.lane.b32.xlu0 %v214, 96
    %v397 = vpop.permute.xlu0 %396
    %v398 = vsel %vm223, %v212, 0
    %v400 = vsel %vm223, %v214, 0
    %v402 = vsel %vm223, %v395, 0
    %v404 = vsel %vm223, %v397, 0
    %406 = vmatprep.subr.mxu0 0.0
    %407 = vmatpush1.xpose.msra.mxu0 0.0
    %408 = vmatprep.subr.mxu0 0.0
    %409 = vmatpush1.xpose.msra.mxu0 0.0
    %410 = vmatprep.subr.mxu0 0.0
    %411 = vmatpush1.xpose.msra.mxu0 0.0
    %412 = vmatprep.subr.mxu0 0.0
    %413 = vmatpush1.xpose.msra.mxu0 0.0
    %414 = vmatprep.subr.mxu0 0.0
    %415 = vmatpush1.xpose.msra.mxu0 0.0
    %416 = vmatprep.subr.mxu0 0.0
    %417 = vmatpush1.xpose.msra.mxu0 0.0
    %418 = vmatprep.subr.mxu0 0.0
    %419 = vmatpush1.xpose.msra.mxu0 0.0
    %420 = vmatprep.subr.mxu0 0.0
    %421 = vmatpush1.xpose.msra.mxu0 0.0
    %422 = vmatprep.subr.mxu0 0.0
    %423 = vmatpush1.xpose.msra.mxu0 0.0
    %424 = vmatprep.subr.mxu0 0.0
    %425 = vmatpush1.xpose.msra.mxu0 0.0
    %426 = vmatprep.subr.mxu0 0.0
    %427 = vmatpush1.xpose.msra.mxu0 0.0
    %428 = vmatprep.subr.mxu0 0.0
    %429 = vmatpush1.xpose.msra.mxu0 0.0
    %430 = vmatprep.subr.mxu0 0.0
    %431 = vmatpush1.xpose.msra.mxu0 0.0
    %432 = vmatprep.subr.mxu0 0.0
    %433 = vmatpush1.xpose.msra.mxu0 0.0
    %434 = vmatprep.subr.mxu0 0.0
    %435 = vmatpush1.xpose.msra.mxu0 %v404
    %436 = vmatprep.subr.mxu0 0.0
    %437 = vmatpush1.xpose.msra.mxu0 %v402
    %438 = vmatprep.subr.mxu0 0.0
    %439 = vmatpush2.xpose.msra.mxu0 0.0
    %440 = vmatprep.subr.mxu0 0.0
    %441 = vmatpush2.xpose.msra.mxu0 0.0
    %442 = vmatprep.subr.mxu0 0.0
    %443 = vmatpush2.xpose.msra.mxu0 0.0
    %444 = vmatprep.subr.mxu0 0.0
    %445 = vmatpush2.xpose.msra.mxu0 0.0
    %446 = vmatprep.subr.mxu0 0.0
    %447 = vmatpush2.xpose.msra.mxu0 0.0
    %448 = vmatprep.subr.mxu0 0.0
    %449 = vmatpush2.xpose.msra.mxu0 0.0
    %450 = vmatprep.subr.mxu0 0.0
    %451 = vmatpush2.xpose.msra.mxu0 0.0
    %452 = vmatprep.subr.mxu0 0.0
    %453 = vmatpush2.xpose.msra.mxu0 0.0
    %454 = vmatprep.subr.mxu0 0.0
    %455 = vmatpush2.xpose.msra.mxu0 0.0
    %456 = vmatprep.subr.mxu0 0.0
    %457 = vmatpush2.xpose.msra.mxu0 0.0
    %458 = vmatprep.subr.mxu0 0.0
    %459 = vmatpush2.xpose.msra.mxu0 0.0
    %460 = vmatprep.subr.mxu0 0.0
    %461 = vmatpush2.xpose.msra.mxu0 0.0
    %462 = vmatprep.subr.mxu0 0.0
    %463 = vmatpush2.xpose.msra.mxu0 0.0
    %464 = vmatprep.subr.mxu0 0.0
    %465 = vmatpush2.xpose.msra.mxu0 0.0
    %466 = vmatprep.subr.mxu0 0.0
    %467 = vmatpush2.xpose.msra.mxu0 0.0
    %468 = vmatprep.subr.mxu0 0.0
    %469 = vmatpush2.xpose.msra.mxu0 0.0
    %470 = vmatprep.mubr.f32.mxu0 0.0
    %471 = vmatmul.mubr.f32.gmra.mxu0 %v398
    %v472 = vpop.f32.mrf.mxu0
    %v473 = vadd.f32 %v110, %v472
    %v474 = vpop.f32.mrf.mxu0
    %475 = vmatprep.mubr.f32.mxu0 0.0
    %476 = vmatmul.mubr.f32.gmra.mxu0 %v400
    %v477 = vpop.f32.mrf.mxu0
    %v478 = vadd.f32 %v111, %v477
    %v479 = vpop.f32.mrf.mxu0
    %480 = vdwg.mxu0
    %481 = vrot.lane.b32.xlu0 %v216, 96
    %v482 = vpop.permute.xlu0 %481
    %483 = vrot.lane.b32.xlu0 %v218, 96
    %v484 = vpop.permute.xlu0 %483
    %v485 = vsel %vm223, %v216, 0
    %v487 = vsel %vm223, %v218, 0
    %v489 = vsel %vm223, %v482, 0
    %v491 = vsel %vm223, %v484, 0
    %493 = vmatprep.subr.mxu0 0.0
    %494 = vmatpush1.xpose.msra.mxu0 0.0
    %495 = vmatprep.subr.mxu0 0.0
    %496 = vmatpush1.xpose.msra.mxu0 0.0
    %497 = vmatprep.subr.mxu0 0.0
    %498 = vmatpush1.xpose.msra.mxu0 0.0
    %499 = vmatprep.subr.mxu0 0.0
    %500 = vmatpush1.xpose.msra.mxu0 0.0
    %501 = vmatprep.subr.mxu0 0.0
    %502 = vmatpush1.xpose.msra.mxu0 0.0
    %503 = vmatprep.subr.mxu0 0.0
    %504 = vmatpush1.xpose.msra.mxu0 0.0
    %505 = vmatprep.subr.mxu0 0.0
    %506 = vmatpush1.xpose.msra.mxu0 0.0
    %507 = vmatprep.subr.mxu0 0.0
    %508 = vmatpush1.xpose.msra.mxu0 0.0
    %509 = vmatprep.subr.mxu0 0.0
    %510 = vmatpush1.xpose.msra.mxu0 0.0
    %511 = vmatprep.subr.mxu0 0.0
    %512 = vmatpush1.xpose.msra.mxu0 0.0
    %513 = vmatprep.subr.mxu0 0.0
    %514 = vmatpush1.xpose.msra.mxu0 0.0
    %515 = vmatprep.subr.mxu0 0.0
    %516 = vmatpush1.xpose.msra.mxu0 0.0
    %517 = vmatprep.subr.mxu0 0.0
    %518 = vmatpush1.xpose.msra.mxu0 0.0
    %519 = vmatprep.subr.mxu0 0.0
    %520 = vmatpush1.xpose.msra.mxu0 0.0
    %521 = vmatprep.subr.mxu0 0.0
    %522 = vmatpush1.xpose.msra.mxu0 %v491
    %523 = vmatprep.subr.mxu0 0.0
    %524 = vmatpush1.xpose.msra.mxu0 %v489
    %525 = vmatprep.subr.mxu0 0.0
    %526 = vmatpush2.xpose.msra.mxu0 0.0
    %527 = vmatprep.subr.mxu0 0.0
    %528 = vmatpush2.xpose.msra.mxu0 0.0
    %529 = vmatprep.subr.mxu0 0.0
    %530 = vmatpush2.xpose.msra.mxu0 0.0
    %531 = vmatprep.subr.mxu0 0.0
    %532 = vmatpush2.xpose.msra.mxu0 0.0
    %533 = vmatprep.subr.mxu0 0.0
    %534 = vmatpush2.xpose.msra.mxu0 0.0
    %535 = vmatprep.subr.mxu0 0.0
    %536 = vmatpush2.xpose.msra.mxu0 0.0
    %537 = vmatprep.subr.mxu0 0.0
    %538 = vmatpush2.xpose.msra.mxu0 0.0
    %539 = vmatprep.subr.mxu0 0.0
    %540 = vmatpush2.xpose.msra.mxu0 0.0
    %541 = vmatprep.subr.mxu0 0.0
    %542 = vmatpush2.xpose.msra.mxu0 0.0
    %543 = vmatprep.subr.mxu0 0.0
    %544 = vmatpush2.xpose.msra.mxu0 0.0
    %545 = vmatprep.subr.mxu0 0.0
    %546 = vmatpush2.xpose.msra.mxu0 0.0
    %547 = vmatprep.subr.mxu0 0.0
    %548 = vmatpush2.xpose.msra.mxu0 0.0
    %549 = vmatprep.subr.mxu0 0.0
    %550 = vmatpush2.xpose.msra.mxu0 0.0
    %551 = vmatprep.subr.mxu0 0.0
    %552 = vmatpush2.xpose.msra.mxu0 0.0
    %553 = vmatprep.subr.mxu0 0.0
    %554 = vmatpush2.xpose.msra.mxu0 0.0
    %555 = vmatprep.subr.mxu0 0.0
    %556 = vmatpush2.xpose.msra.mxu0 0.0
    %557 = vmatprep.mubr.f32.mxu0 0.0
    %558 = vmatmul.mubr.f32.gmra.mxu0 %v485
    %v559 = vpop.f32.mrf.mxu0
    %v560 = vadd.f32 %v110, %v559
    %v561 = vpop.f32.mrf.mxu0
    %562 = vmatprep.mubr.f32.mxu0 0.0
    %563 = vmatmul.mubr.f32.gmra.mxu0 %v487
    %v564 = vpop.f32.mrf.mxu0
    %v565 = vadd.f32 %v111, %v564
    %v566 = vpop.f32.mrf.mxu0
    %567 = vdwg.mxu0
    %vm568 = vcmask 130048
    %v569 = vsel %vm568, %v299, -inf
    %570 = vmax.xlane.f32.xlu0 %v569
    %v571 = vpop.xlane.xlu0 %570
    %v572 = vsel %vm568, %v304, -inf
    %573 = vmax.xlane.f32.xlu0 %v572
    %v574 = vpop.xlane.xlu0 %573
    %v575 = vsel %vm568, %v386, -inf
    %576 = vmax.xlane.f32.xlu0 %v575
    %v577 = vpop.xlane.xlu0 %576
    %v578 = vsel %vm568, %v391, -inf
    %579 = vmax.xlane.f32.xlu0 %v578
    %v580 = vpop.xlane.xlu0 %579
    %v581 = vsel %vm568, %v473, -inf
    %582 = vmax.xlane.f32.xlu0 %v581
    %v583 = vpop.xlane.xlu0 %582
    %v584 = vsel %vm568, %v478, -inf
    %585 = vmax.xlane.f32.xlu0 %v584
    %v586 = vpop.xlane.xlu0 %585
    %v587 = vsel %vm568, %v560, -inf
    %588 = vmax.xlane.f32.xlu0 %v587
    %v589 = vpop.xlane.xlu0 %588
    %v590 = vsel %vm568, %v565, -inf
    %591 = vmax.xlane.f32.xlu0 %v590
    %v592 = vpop.xlane.xlu0 %591
    %v593 = vsub.f32 %v299, %v571
    %v594 = vsub.f32 %v304, %v574
    %v595 = vsub.f32 %v386, %v577
    %v596 = vsub.f32 %v391, %v580
    %v597 = vsub.f32 %v473, %v583
    %v598 = vsub.f32 %v478, %v586
    %v599 = vsub.f32 %v560, %v589
    %v600 = vsub.f32 %v565, %v592
    %v601 = vmul.f32 %v593, 1.442695
    %v602 = vpow.pop %v601
    %v603 = vmul.f32 %v594, 1.442695
    %v604 = vpow.pop %v603
    %v605 = vmul.f32 %v595, 1.442695
    %v606 = vpow.pop %v605
    %v607 = vmul.f32 %v596, 1.442695
    %v608 = vpow.pop %v607
    %v609 = vmul.f32 %v597, 1.442695
    %v610 = vpow.pop %v609
    %v611 = vmul.f32 %v598, 1.442695
    %v612 = vpow.pop %v611
    %v613 = vmul.f32 %v599, 1.442695
    %v614 = vpow.pop %v613
    %v615 = vmul.f32 %v600, 1.442695
    %v616 = vpow.pop %v615
    %v617 = vsel %vm568, %v602, 0.0
    %618 = vadd.xlane.f32.xlu0 %v617
    %v619 = vpop.xlane.xlu0 %618
    %v620 = vsel %vm568, %v604, 0.0
    %621 = vadd.xlane.f32.xlu0 %v620
    %v622 = vpop.xlane.xlu0 %621
    %v623 = vsel %vm568, %v606, 0.0
    %624 = vadd.xlane.f32.xlu0 %v623
    %v625 = vpop.xlane.xlu0 %624
    %v626 = vsel %vm568, %v608, 0.0
    %627 = vadd.xlane.f32.xlu0 %v626
    %v628 = vpop.xlane.xlu0 %627
    %v629 = vsel %vm568, %v610, 0.0
    %630 = vadd.xlane.f32.xlu0 %v629
    %v631 = vpop.xlane.xlu0 %630
    %v632 = vsel %vm568, %v612, 0.0
    %633 = vadd.xlane.f32.xlu0 %v632
    %v634 = vpop.xlane.xlu0 %633
    %v635 = vsel %vm568, %v614, 0.0
    %636 = vadd.xlane.f32.xlu0 %v635
    %v637 = vpop.xlane.xlu0 %636
    %v638 = vsel %vm568, %v616, 0.0
    %639 = vadd.xlane.f32.xlu0 %v638
    %v640 = vpop.xlane.xlu0 %639
    %v641 = vrcp.pop %v619
    %v642 = vrcp.pop %v622
    %v643 = vrcp.pop %v625
    %v644 = vrcp.pop %v628
    %v645 = vrcp.pop %v631
    %v646 = vrcp.pop %v634
    %v647 = vrcp.pop %v637
    %v648 = vrcp.pop %v640
    %v649 = vmul.f32 %v602, %v641
    %v650 = vmul.f32 %v604, %v642
    %v651 = vmul.f32 %v606, %v643
    %v652 = vmul.f32 %v608, %v644
    %v653 = vmul.f32 %v610, %v645
    %v654 = vmul.f32 %v612, %v646
    %v655 = vmul.f32 %v614, %v647
    %v656 = vmul.f32 %v616, %v648
    %657 = vrot.lane.b32.xlu0 %v197, 64
    %v658 = vpop.permute.xlu0 %657
    %659 = vrot.lane.b32.xlu0 %v202, 64
    %v660 = vpop.permute.xlu0 %659
    %v664 = vsel %vm568, %v649, 0
    %v667 = vsel %vm568, %v650, 0
    %669 = vmatprep.subr.mxu0 0.0
    %670 = vmatpush1.msra.mxu0 0.0
    %671 = vmatprep.subr.mxu0 0.0
    %672 = vmatpush1.msra.mxu0 0.0
    %673 = vmatprep.subr.mxu0 0.0
    %674 = vmatpush1.msra.mxu0 0.0
    %675 = vmatprep.subr.mxu0 0.0
    %676 = vmatpush1.msra.mxu0 0.0
    %677 = vmatprep.subr.mxu0 0.0
    %678 = vmatpush1.msra.mxu0 0.0
    %679 = vmatprep.subr.mxu0 0.0
    %680 = vmatpush1.msra.mxu0 0.0
    %681 = vmatprep.subr.mxu0 0.0
    %682 = vmatpush1.msra.mxu0 0.0
    %683 = vmatprep.subr.mxu0 0.0
    %684 = vmatpush1.msra.mxu0 0.0
    %685 = vmatprep.subr.mxu0 0.0
    %686 = vmatpush1.msra.mxu0 0.0
    %687 = vmatprep.subr.mxu0 0.0
    %688 = vmatpush1.msra.mxu0 0.0
    %689 = vmatprep.subr.mxu0 0.0
    %690 = vmatpush1.msra.mxu0 0.0
    %691 = vmatprep.subr.mxu0 0.0
    %692 = vmatpush1.msra.mxu0 0.0
    %693 = vmatprep.subr.mxu0 0.0
    %694 = vmatpush1.msra.mxu0 0.0
    %695 = vmatprep.subr.mxu0 0.0
    %696 = vmatpush1.msra.mxu0 0.0
    %697 = vmatprep.subr.mxu0 0.0
    %698 = vmatpush1.msra.mxu0 %v660
    %699 = vmatprep.subr.mxu0 0.0
    %700 = vmatpush1.msra.mxu0 %v658
    %701 = vmatprep.subr.mxu0 0.0
    %702 = vmatpush2.msra.mxu0 0.0
    %703 = vmatprep.subr.mxu0 0.0
    %704 = vmatpush2.msra.mxu0 0.0
    %705 = vmatprep.subr.mxu0 0.0
    %706 = vmatpush2.msra.mxu0 0.0
    %707 = vmatprep.subr.mxu0 0.0
    %708 = vmatpush2.msra.mxu0 0.0
    %709 = vmatprep.subr.mxu0 0.0
    %710 = vmatpush2.msra.mxu0 0.0
    %711 = vmatprep.subr.mxu0 0.0
    %712 = vmatpush2.msra.mxu0 0.0
    %713 = vmatprep.subr.mxu0 0.0
    %714 = vmatpush2.msra.mxu0 0.0
    %715 = vmatprep.subr.mxu0 0.0
    %716 = vmatpush2.msra.mxu0 0.0
    %717 = vmatprep.subr.mxu0 0.0
    %718 = vmatpush2.msra.mxu0 0.0
    %719 = vmatprep.subr.mxu0 0.0
    %720 = vmatpush2.msra.mxu0 0.0
    %721 = vmatprep.subr.mxu0 0.0
    %722 = vmatpush2.msra.mxu0 0.0
    %723 = vmatprep.subr.mxu0 0.0
    %724 = vmatpush2.msra.mxu0 0.0
    %725 = vmatprep.subr.mxu0 0.0
    %726 = vmatpush2.msra.mxu0 0.0
    %727 = vmatprep.subr.mxu0 0.0
    %728 = vmatpush2.msra.mxu0 0.0
    %729 = vmatprep.subr.mxu0 0.0
    %730 = vmatpush2.msra.mxu0 0.0
    %731 = vmatprep.subr.mxu0 0.0
    %732 = vmatpush2.msra.mxu0 0.0
    %733 = vmatprep.mubr.f32.mxu0 0.0
    %734 = vmatmul.mubr.f32.gmra.mxu0 %v664
    %v735 = vpop.f32.mrf.mxu0
    %v736 = vadd.f32 0.0, %v735
    %v737 = vpop.f32.mrf.mxu0
    %738 = vmatprep.mubr.f32.mxu0 0.0
    %739 = vmatmul.mubr.f32.gmra.mxu0 %v667
    %v740 = vpop.f32.mrf.mxu0
    %v741 = vadd.f32 0.0, %v740
    %v742 = vpop.f32.mrf.mxu0
    %743 = vdwg.mxu0
    %744 = vrot.lane.b32.xlu0 %v208, 64
    %v745 = vpop.permute.xlu0 %744
    %746 = vrot.lane.b32.xlu0 %v210, 64
    %v747 = vpop.permute.xlu0 %746
    %v751 = vsel %vm568, %v651, 0
    %v754 = vsel %vm568, %v652, 0
    %756 = vmatprep.subr.mxu0 0.0
    %757 = vmatpush1.msra.mxu0 0.0
    %758 = vmatprep.subr.mxu0 0.0
    %759 = vmatpush1.msra.mxu0 0.0
    %760 = vmatprep.subr.mxu0 0.0
    %761 = vmatpush1.msra.mxu0 0.0
    %762 = vmatprep.subr.mxu0 0.0
    %763 = vmatpush1.msra.mxu0 0.0
    %764 = vmatprep.subr.mxu0 0.0
    %765 = vmatpush1.msra.mxu0 0.0
    %766 = vmatprep.subr.mxu0 0.0
    %767 = vmatpush1.msra.mxu0 0.0
    %768 = vmatprep.subr.mxu0 0.0
    %769 = vmatpush1.msra.mxu0 0.0
    %770 = vmatprep.subr.mxu0 0.0
    %771 = vmatpush1.msra.mxu0 0.0
    %772 = vmatprep.subr.mxu0 0.0
    %773 = vmatpush1.msra.mxu0 0.0
    %774 = vmatprep.subr.mxu0 0.0
    %775 = vmatpush1.msra.mxu0 0.0
    %776 = vmatprep.subr.mxu0 0.0
    %777 = vmatpush1.msra.mxu0 0.0
    %778 = vmatprep.subr.mxu0 0.0
    %779 = vmatpush1.msra.mxu0 0.0
    %780 = vmatprep.subr.mxu0 0.0
    %781 = vmatpush1.msra.mxu0 0.0
    %782 = vmatprep.subr.mxu0 0.0
    %783 = vmatpush1.msra.mxu0 0.0
    %784 = vmatprep.subr.mxu0 0.0
    %785 = vmatpush1.msra.mxu0 %v747
    %786 = vmatprep.subr.mxu0 0.0
    %787 = vmatpush1.msra.mxu0 %v745
    %788 = vmatprep.subr.mxu0 0.0
    %789 = vmatpush2.msra.mxu0 0.0
    %790 = vmatprep.subr.mxu0 0.0
    %791 = vmatpush2.msra.mxu0 0.0
    %792 = vmatprep.subr.mxu0 0.0
    %793 = vmatpush2.msra.mxu0 0.0
    %794 = vmatprep.subr.mxu0 0.0
    %795 = vmatpush2.msra.mxu0 0.0
    %796 = vmatprep.subr.mxu0 0.0
    %797 = vmatpush2.msra.mxu0 0.0
    %798 = vmatprep.subr.mxu0 0.0
    %799 = vmatpush2.msra.mxu0 0.0
    %800 = vmatprep.subr.mxu0 0.0
    %801 = vmatpush2.msra.mxu0 0.0
    %802 = vmatprep.subr.mxu0 0.0
    %803 = vmatpush2.msra.mxu0 0.0
    %804 = vmatprep.subr.mxu0 0.0
    %805 = vmatpush2.msra.mxu0 0.0
    %806 = vmatprep.subr.mxu0 0.0
    %807 = vmatpush2.msra.mxu0 0.0
    %808 = vmatprep.subr.mxu0 0.0
    %809 = vmatpush2.msra.mxu0 0.0
    %810 = vmatprep.subr.mxu0 0.0
    %811 = vmatpush2.msra.mxu0 0.0
    %812 = vmatprep.subr.mxu0 0.0
    %813 = vmatpush2.msra.mxu0 0.0
    %814 = vmatprep.subr.mxu0 0.0
    %815 = vmatpush2.msra.mxu0 0.0
    %816 = vmatprep.subr.mxu0 0.0
    %817 = vmatpush2.msra.mxu0 0.0
    %818 = vmatprep.subr.mxu0 0.0
    %819 = vmatpush2.msra.mxu0 0.0
    %820 = vmatprep.mubr.f32.mxu0 0.0
    %821 = vmatmul.mubr.f32.gmra.mxu0 %v751
    %v822 = vpop.f32.mrf.mxu0
    %v823 = vadd.f32 0.0, %v822
    %v824 = vpop.f32.mrf.mxu0
    %825 = vmatprep.mubr.f32.mxu0 0.0
    %826 = vmatmul.mubr.f32.gmra.mxu0 %v754
    %v827 = vpop.f32.mrf.mxu0
    %v828 = vadd.f32 0.0, %v827
    %v829 = vpop.f32.mrf.mxu0
    %830 = vdwg.mxu0
    %831 = vrot.lane.b32.xlu0 %v212, 64
    %v832 = vpop.permute.xlu0 %831
    %833 = vrot.lane.b32.xlu0 %v214, 64
    %v834 = vpop.permute.xlu0 %833
    %v838 = vsel %vm568, %v653, 0
    %v841 = vsel %vm568, %v654, 0
    %843 = vmatprep.subr.mxu0 0.0
    %844 = vmatpush1.msra.mxu0 0.0
    %845 = vmatprep.subr.mxu0 0.0
    %846 = vmatpush1.msra.mxu0 0.0
    %847 = vmatprep.subr.mxu0 0.0
    %848 = vmatpush1.msra.mxu0 0.0
    %849 = vmatprep.subr.mxu0 0.0
    %850 = vmatpush1.msra.mxu0 0.0
    %851 = vmatprep.subr.mxu0 0.0
    %852 = vmatpush1.msra.mxu0 0.0
    %853 = vmatprep.subr.mxu0 0.0
    %854 = vmatpush1.msra.mxu0 0.0
    %855 = vmatprep.subr.mxu0 0.0
    %856 = vmatpush1.msra.mxu0 0.0
    %857 = vmatprep.subr.mxu0 0.0
    %858 = vmatpush1.msra.mxu0 0.0
    %859 = vmatprep.subr.mxu0 0.0
    %860 = vmatpush1.msra.mxu0 0.0
    %861 = vmatprep.subr.mxu0 0.0
    %862 = vmatpush1.msra.mxu0 0.0
    %863 = vmatprep.subr.mxu0 0.0
    %864 = vmatpush1.msra.mxu0 0.0
    %865 = vmatprep.subr.mxu0 0.0
    %866 = vmatpush1.msra.mxu0 0.0
    %867 = vmatprep.subr.mxu0 0.0
    %868 = vmatpush1.msra.mxu0 0.0
    %869 = vmatprep.subr.mxu0 0.0
    %870 = vmatpush1.msra.mxu0 0.0
    %871 = vmatprep.subr.mxu0 0.0
    %872 = vmatpush1.msra.mxu0 %v834
    %873 = vmatprep.subr.mxu0 0.0
    %874 = vmatpush1.msra.mxu0 %v832
    %875 = vmatprep.subr.mxu0 0.0
    %876 = vmatpush2.msra.mxu0 0.0
    %877 = vmatprep.subr.mxu0 0.0
    %878 = vmatpush2.msra.mxu0 0.0
    %879 = vmatprep.subr.mxu0 0.0
    %880 = vmatpush2.msra.mxu0 0.0
    %881 = vmatprep.subr.mxu0 0.0
    %882 = vmatpush2.msra.mxu0 0.0
    %883 = vmatprep.subr.mxu0 0.0
    %884 = vmatpush2.msra.mxu0 0.0
    %885 = vmatprep.subr.mxu0 0.0
    %886 = vmatpush2.msra.mxu0 0.0
    %887 = vmatprep.subr.mxu0 0.0
    %888 = vmatpush2.msra.mxu0 0.0
    %889 = vmatprep.subr.mxu0 0.0
    %890 = vmatpush2.msra.mxu0 0.0
    %891 = vmatprep.subr.mxu0 0.0
    %892 = vmatpush2.msra.mxu0 0.0
    %893 = vmatprep.subr.mxu0 0.0
    %894 = vmatpush2.msra.mxu0 0.0
    %895 = vmatprep.subr.mxu0 0.0
    %896 = vmatpush2.msra.mxu0 0.0
    %897 = vmatprep.subr.mxu0 0.0
    %898 = vmatpush2.msra.mxu0 0.0
    %899 = vmatprep.subr.mxu0 0.0
    %900 = vmatpush2.msra.mxu0 0.0
    %901 = vmatprep.subr.mxu0 0.0
    %902 = vmatpush2.msra.mxu0 0.0
    %903 = vmatprep.subr.mxu0 0.0
    %904 = vmatpush2.msra.mxu0 0.0
    %905 = vmatprep.subr.mxu0 0.0
    %906 = vmatpush2.msra.mxu0 0.0
    %907 = vmatprep.mubr.f32.mxu0 0.0
    %908 = vmatmul.mubr.f32.gmra.mxu0 %v838
    %v909 = vpop.f32.mrf.mxu0
    %v910 = vadd.f32 0.0, %v909
    %v911 = vpop.f32.mrf.mxu0
    %912 = vmatprep.mubr.f32.mxu0 0.0
    %913 = vmatmul.mubr.f32.gmra.mxu0 %v841
    %v914 = vpop.f32.mrf.mxu0
    %v915 = vadd.f32 0.0, %v914
    %v916 = vpop.f32.mrf.mxu0
    %917 = vdwg.mxu0
    %918 = vrot.lane.b32.xlu0 %v216, 64
    %v919 = vpop.permute.xlu0 %918
    %920 = vrot.lane.b32.xlu0 %v218, 64
    %v921 = vpop.permute.xlu0 %920
    %v925 = vsel %vm568, %v655, 0
    %v928 = vsel %vm568, %v656, 0
    %930 = vmatprep.subr.mxu0 0.0
    %931 = vmatpush1.msra.mxu0 0.0
    %932 = vmatprep.subr.mxu0 0.0
    %933 = vmatpush1.msra.mxu0 0.0
    %934 = vmatprep.subr.mxu0 0.0
    %935 = vmatpush1.msra.mxu0 0.0
    %936 = vmatprep.subr.mxu0 0.0
    %937 = vmatpush1.msra.mxu0 0.0
    %938 = vmatprep.subr.mxu0 0.0
    %939 = vmatpush1.msra.mxu0 0.0
    %940 = vmatprep.subr.mxu0 0.0
    %941 = vmatpush1.msra.mxu0 0.0
    %942 = vmatprep.subr.mxu0 0.0
    %943 = vmatpush1.msra.mxu0 0.0
    %944 = vmatprep.subr.mxu0 0.0
    %945 = vmatpush1.msra.mxu0 0.0
    %946 = vmatprep.subr.mxu0 0.0
    %947 = vmatpush1.msra.mxu0 0.0
    %948 = vmatprep.subr.mxu0 0.0
    %949 = vmatpush1.msra.mxu0 0.0
    %950 = vmatprep.subr.mxu0 0.0
    %951 = vmatpush1.msra.mxu0 0.0
    %952 = vmatprep.subr.mxu0 0.0
    %953 = vmatpush1.msra.mxu0 0.0
    %954 = vmatprep.subr.mxu0 0.0
    %955 = vmatpush1.msra.mxu0 0.0
    %956 = vmatprep.subr.mxu0 0.0
    %957 = vmatpush1.msra.mxu0 0.0
    %958 = vmatprep.subr.mxu0 0.0
    %959 = vmatpush1.msra.mxu0 %v921
    %960 = vmatprep.subr.mxu0 0.0
    %961 = vmatpush1.msra.mxu0 %v919
    %962 = vmatprep.subr.mxu0 0.0
    %963 = vmatpush2.msra.mxu0 0.0
    %964 = vmatprep.subr.mxu0 0.0
    %965 = vmatpush2.msra.mxu0 0.0
    %966 = vmatprep.subr.mxu0 0.0
    %967 = vmatpush2.msra.mxu0 0.0
    %968 = vmatprep.subr.mxu0 0.0
    %969 = vmatpush2.msra.mxu0 0.0
    %970 = vmatprep.subr.mxu0 0.0
    %971 = vmatpush2.msra.mxu0 0.0
    %972 = vmatprep.subr.mxu0 0.0
    %973 = vmatpush2.msra.mxu0 0.0
    %974 = vmatprep.subr.mxu0 0.0
    %975 = vmatpush2.msra.mxu0 0.0
    %976 = vmatprep.subr.mxu0 0.0
    %977 = vmatpush2.msra.mxu0 0.0
    %978 = vmatprep.subr.mxu0 0.0
    %979 = vmatpush2.msra.mxu0 0.0
    %980 = vmatprep.subr.mxu0 0.0
    %981 = vmatpush2.msra.mxu0 0.0
    %982 = vmatprep.subr.mxu0 0.0
    %983 = vmatpush2.msra.mxu0 0.0
    %984 = vmatprep.subr.mxu0 0.0
    %985 = vmatpush2.msra.mxu0 0.0
    %986 = vmatprep.subr.mxu0 0.0
    %987 = vmatpush2.msra.mxu0 0.0
    %988 = vmatprep.subr.mxu0 0.0
    %989 = vmatpush2.msra.mxu0 0.0
    %990 = vmatprep.subr.mxu0 0.0
    %991 = vmatpush2.msra.mxu0 0.0
    %992 = vmatprep.subr.mxu0 0.0
    %993 = vmatpush2.msra.mxu0 0.0
    %994 = vmatprep.mubr.f32.mxu0 0.0
    %995 = vmatmul.mubr.f32.gmra.mxu0 %v925
    %v996 = vpop.f32.mrf.mxu0
    %v997 = vadd.f32 0.0, %v996
    %v998 = vpop.f32.mrf.mxu0
    %999 = vmatprep.mubr.f32.mxu0 0.0
    %1000 = vmatmul.mubr.f32.gmra.mxu0 %v928
    %v1001 = vpop.f32.mrf.mxu0
    %v1002 = vadd.f32 0.0, %v1001
    %v1003 = vpop.f32.mrf.mxu0
    %1004 = vdwg.mxu0
    %1007 = vrot.lane.b32.xlu0 %v823, 8
    %v1008 = vpop.permute.xlu0 %1007
    %1009 = vrot.lane.b32.xlu0 %v828, 8
    %v1010 = vpop.permute.xlu0 %1009
    %1015 = vrot.lane.b32.xlu0 %v910, 16
    %v1016 = vpop.permute.xlu0 %1015
    %1017 = vrot.lane.b32.xlu0 %v915, 16
    %v1018 = vpop.permute.xlu0 %1017
    %1023 = vrot.lane.b32.xlu0 %v997, 24
    %v1024 = vpop.permute.xlu0 %1023
    %1025 = vrot.lane.b32.xlu0 %v1002, 24
    %v1026 = vpop.permute.xlu0 %1025
    %v1029 = vsel %vm223, %v736, %v1008
    %v1030 = vsel %vm223, %v741, %v1010
    %v1031 = vsel %vm568, %v1029, %v1016
    %v1032 = vsel %vm568, %v1030, %v1018
    %vm1033 = vcmask 195584
    %v1034 = vsel %vm1033, %v1031, %v1024
    %v1035 = vsel %vm1033, %v1032, %v1026
    %v1036 = vld [vmem:[%s3] sm:$0xff]
    %v1037 = vld [vmem:[%s3 + $0x8] sm:$0xff]
    %v1038 = vld [vmem:[%s3 + $0x10] sm:$0xff]
    %v1039 = vld [vmem:[%s3 + $0x18] sm:$0xff]
    %v1040 = vld [vmem:[%s4] sm:$0x1]
    %v1042 = vlaneseq
    %v1043 = vshrl.u32 %v1042, 7
    %v1044 = vsub.s32 0, %v1043
    %v1045 = vrot.slane %v1040, %v1044
    %v1048 = vsel %vm123, %v1034, 0
    %v1051 = vsel %vm123, %v1035, 0
    %1053 = vmatprep.subr.mxu0 0.0
    %1054 = vmatpush1.msra.mxu0 0.0
    %1055 = vmatprep.subr.mxu0 0.0
    %1056 = vmatpush1.msra.mxu0 0.0
    %1057 = vmatprep.subr.mxu0 0.0
    %1058 = vmatpush1.msra.mxu0 0.0
    %1059 = vmatprep.subr.mxu0 0.0
    %1060 = vmatpush1.msra.mxu0 0.0
    %1061 = vmatprep.subr.mxu0 0.0
    %1062 = vmatpush1.msra.mxu0 0.0
    %1063 = vmatprep.subr.mxu0 0.0
    %1064 = vmatpush1.msra.mxu0 0.0
    %1065 = vmatprep.subr.mxu0 0.0
    %1066 = vmatpush1.msra.mxu0 0.0
    %1067 = vmatprep.subr.mxu0 0.0
    %1068 = vmatpush1.msra.mxu0 0.0
    %1069 = vmatprep.subr.mxu0 0.0
    %1070 = vmatpush1.msra.mxu0 0.0
    %1071 = vmatprep.subr.mxu0 0.0
    %1072 = vmatpush1.msra.mxu0 0.0
    %1073 = vmatprep.subr.mxu0 0.0
    %1074 = vmatpush1.msra.mxu0 0.0
    %1075 = vmatprep.subr.mxu0 0.0
    %1076 = vmatpush1.msra.mxu0 0.0
    %1077 = vmatprep.subr.mxu0 0.0
    %1078 = vmatpush1.msra.mxu0 %v1039
    %1079 = vmatprep.subr.mxu0 0.0
    %1080 = vmatpush1.msra.mxu0 %v1038
    %1081 = vmatprep.subr.mxu0 0.0
    %1082 = vmatpush1.msra.mxu0 %v1037
    %1083 = vmatprep.subr.mxu0 0.0
    %1084 = vmatpush1.msra.mxu0 %v1036
    %1085 = vmatprep.subr.mxu0 0.0
    %1086 = vmatpush2.msra.mxu0 0.0
    %1087 = vmatprep.subr.mxu0 0.0
    %1088 = vmatpush2.msra.mxu0 0.0
    %1089 = vmatprep.subr.mxu0 0.0
    %1090 = vmatpush2.msra.mxu0 0.0
    %1091 = vmatprep.subr.mxu0 0.0
    %1092 = vmatpush2.msra.mxu0 0.0
    %1093 = vmatprep.subr.mxu0 0.0
    %1094 = vmatpush2.msra.mxu0 0.0
    %1095 = vmatprep.subr.mxu0 0.0
    %1096 = vmatpush2.msra.mxu0 0.0
    %1097 = vmatprep.subr.mxu0 0.0
    %1098 = vmatpush2.msra.mxu0 0.0
    %1099 = vmatprep.subr.mxu0 0.0
    %1100 = vmatpush2.msra.mxu0 0.0
    %1101 = vmatprep.subr.mxu0 0.0
    %1102 = vmatpush2.msra.mxu0 0.0
    %1103 = vmatprep.subr.mxu0 0.0
    %1104 = vmatpush2.msra.mxu0 0.0
    %1105 = vmatprep.subr.mxu0 0.0
    %1106 = vmatpush2.msra.mxu0 0.0
    %1107 = vmatprep.subr.mxu0 0.0
    %1108 = vmatpush2.msra.mxu0 0.0
    %1109 = vmatprep.subr.mxu0 0.0
    %1110 = vmatpush2.msra.mxu0 0.0
    %1111 = vmatprep.subr.mxu0 0.0
    %1112 = vmatpush2.msra.mxu0 0.0
    %1113 = vmatprep.subr.mxu0 0.0
    %1114 = vmatpush2.msra.mxu0 0.0
    %1115 = vmatprep.subr.mxu0 0.0
    %1116 = vmatpush2.msra.mxu0 0.0
    %1117 = vmatprep.mubr.f32.mxu0 0.0
    %1118 = vmatmul.mubr.f32.gmra.mxu0 %v1048
    %v1119 = vpop.f32.mrf.mxu0
    %v1120 = vadd.f32 %v1045, %v1119
    %v1121 = vpop.f32.mrf.mxu0
    %1122 = vmatprep.mubr.f32.mxu0 0.0
    %1123 = vmatmul.mubr.f32.gmra.mxu0 %v1051
    %v1124 = vpop.f32.mrf.mxu0
    %v1125 = vadd.f32 %v1045, %v1124
    %v1126 = vpop.f32.mrf.mxu0
    %1127 = vdwg.mxu0
    %v1128 = vadd.f32 %v65, %v1120
    %v1129 = vadd.f32 %v66, %v1125
    %v1130 = vld [vmem:[%s5] sm:$0x1]
    %v1131 = vld [vmem:[%s6] sm:$0x1]
    %v1132 = vsel %vm123, %v1128, 0.0
    %1133 = vadd.xlane.f32.xlu0 %v1132
    %v1134 = vpop.xlane.xlu0 %1133
    %v1135 = vsel %vm123, %v1129, 0.0
    %1136 = vadd.xlane.f32.xlu0 %v1135
    %v1137 = vpop.xlane.xlu0 %1136
    %v1138 = vrcp.pop 32.0
    %v1139 = vmul.f32 %v1134, %v1138
    %v1140 = vmul.f32 %v1137, %v1138
    %v1141 = vsub.f32 %v1128, %v1139
    %v1142 = vsub.f32 %v1129, %v1140
    %v1143 = vmul.f32 %v1141, %v1141
    %v1144 = vmul.f32 %v1142, %v1142
    %v1145 = vsel %vm123, %v1143, 0.0
    %1146 = vadd.xlane.f32.xlu0 %v1145
    %v1147 = vpop.xlane.xlu0 %1146
    %v1148 = vsel %vm123, %v1144, 0.0
    %1149 = vadd.xlane.f32.xlu0 %v1148
    %v1150 = vpop.xlane.xlu0 %1149
    %v1151 = vmul.f32 %v1147, %v1138
    %v1152 = vmul.f32 %v1150, %v1138
    %v1153 = vadd.f32 %v1151, 1e-05
    %v1154 = vadd.f32 %v1152, 1e-05
    %v1155 = vrsqrt.pop %v1153
    %v1156 = vrsqrt.pop %v1154
    %v1157 = vmul.f32 %v1141, %v1155
    %v1158 = vmul.f32 %v1142, %v1156
    %v1160 = vlaneseq
    %v1161 = vshrl.u32 %v1160, 7
    %v1162 = vsub.s32 0, %v1161
    %v1163 = vrot.slane %v1130, %v1162
    %v1165 = vmul.f32 %v1157, %v1163
    %v1166 = vmul.f32 %v1158, %v1163
    %v1168 = vlaneseq
    %v1169 = vshrl.u32 %v1168, 7
    %v1170 = vsub.s32 0, %v1169
    %v1171 = vrot.slane %v1131, %v1170
    %v1173 = vadd.f32 %v1165, %v1171
    %v1174 = vadd.f32 %v1166, %v1171
    %v1175 = vld [vmem:[%s7] sm:$0xff]
    %v1176 = vld [vmem:[%s7 + $0x8] sm:$0xff]
    %v1177 = vld [vmem:[%s7 + $0x10] sm:$0xff]
    %v1178 = vld [vmem:[%s7 + $0x18] sm:$0xff]
    %v1179 = vld [vmem:[%s8] sm:$0x1]
    %v1181 = vlaneseq
    %v1182 = vshrl.u32 %v1181, 7
    %v1183 = vsub.s32 0, %v1182
    %v1184 = vrot.slane %v1179, %v1183
    %v1187 = vsel %vm123, %v1173, 0
    %v1190 = vsel %vm123, %v1174, 0
    %1192 = vmatprep.subr.mxu0 0.0
    %1193 = vmatpush1.msra.mxu0 0.0
    %1194 = vmatprep.subr.mxu0 0.0
    %1195 = vmatpush1.msra.mxu0 0.0
    %1196 = vmatprep.subr.mxu0 0.0
    %1197 = vmatpush1.msra.mxu0 0.0
    %1198 = vmatprep.subr.mxu0 0.0
    %1199 = vmatpush1.msra.mxu0 0.0
    %1200 = vmatprep.subr.mxu0 0.0
    %1201 = vmatpush1.msra.mxu0 0.0
    %1202 = vmatprep.subr.mxu0 0.0
    %1203 = vmatpush1.msra.mxu0 0.0
    %1204 = vmatprep.subr.mxu0 0.0
    %1205 = vmatpush1.msra.mxu0 0.0
    %1206 = vmatprep.subr.mxu0 0.0
    %1207 = vmatpush1.msra.mxu0 0.0
    %1208 = vmatprep.subr.mxu0 0.0
    %1209 = vmatpush1.msra.mxu0 0.0
    %1210 = vmatprep.subr.mxu0 0.0
    %1211 = vmatpush1.msra.mxu0 0.0
    %1212 = vmatprep.subr.mxu0 0.0
    %1213 = vmatpush1.msra.mxu0 0.0
    %1214 = vmatprep.subr.mxu0 0.0
    %1215 = vmatpush1.msra.mxu0 0.0
    %1216 = vmatprep.subr.mxu0 0.0
    %1217 = vmatpush1.msra.mxu0 %v1178
    %1218 = vmatprep.subr.mxu0 0.0
    %1219 = vmatpush1.msra.mxu0 %v1177
    %1220 = vmatprep.subr.mxu0 0.0
    %1221 = vmatpush1.msra.mxu0 %v1176
    %1222 = vmatprep.subr.mxu0 0.0
    %1223 = vmatpush1.msra.mxu0 %v1175
    %1224 = vmatprep.subr.mxu0 0.0
    %1225 = vmatpush2.msra.mxu0 0.0
    %1226 = vmatprep.subr.mxu0 0.0
    %1227 = vmatpush2.msra.mxu0 0.0
    %1228 = vmatprep.subr.mxu0 0.0
    %1229 = vmatpush2.msra.mxu0 0.0
    %1230 = vmatprep.subr.mxu0 0.0
    %1231 = vmatpush2.msra.mxu0 0.0
    %1232 = vmatprep.subr.mxu0 0.0
    %1233 = vmatpush2.msra.mxu0 0.0
    %1234 = vmatprep.subr.mxu0 0.0
    %1235 = vmatpush2.msra.mxu0 0.0
    %1236 = vmatprep.subr.mxu0 0.0
    %1237 = vmatpush2.msra.mxu0 0.0
    %1238 = vmatprep.subr.mxu0 0.0
    %1239 = vmatpush2.msra.mxu0 0.0
    %1240 = vmatprep.subr.mxu0 0.0
    %1241 = vmatpush2.msra.mxu0 0.0
    %1242 = vmatprep.subr.mxu0 0.0
    %1243 = vmatpush2.msra.mxu0 0.0
    %1244 = vmatprep.subr.mxu0 0.0
    %1245 = vmatpush2.msra.mxu0 0.0
    %1246 = vmatprep.subr.mxu0 0.0
    %1247 = vmatpush2.msra.mxu0 0.0
    %1248 = vmatprep.subr.mxu0 0.0
    %1249 = vmatpush2.msra.mxu0 0.0
    %1250 = vmatprep.subr.mxu0 0.0
    %1251 = vmatpush2.msra.mxu0 0.0
    %1252 = vmatprep.subr.mxu0 0.0
    %1253 = vmatpush2.msra.mxu0 0.0
    %1254 = vmatprep.subr.mxu0 0.0
    %1255 = vmatpush2.msra.mxu0 0.0
    %1256 = vmatprep.mubr.f32.mxu0 0.0
    %1257 = vmatmul.mubr.f32.gmra.mxu0 %v1187
    %v1258 = vpop.f32.mrf.mxu0
    %v1259 = vadd.f32 %v1184, %v1258
    %v1260 = vpop.f32.mrf.mxu0
    %1261 = vmatprep.mubr.f32.mxu0 0.0
    %1262 = vmatmul.mubr.f32.gmra.mxu0 %v1190
    %v1263 = vpop.f32.mrf.mxu0
    %v1264 = vadd.f32 %v1184, %v1263
    %v1265 = vpop.f32.mrf.mxu0
    %1266 = vdwg.mxu0
    %v1267 = vmax.f32 %v1259, 0.0
    %v1268 = vmax.f32 %v1264, 0.0
    %v1269 = vld [vmem:[%s9] sm:$0xff]
    %v1270 = vld [vmem:[%s9 + $0x8] sm:$0xff]
    %v1271 = vld [vmem:[%s9 + $0x10] sm:$0xff]
    %v1272 = vld [vmem:[%s9 + $0x18] sm:$0xff]
    %v1273 = vld [vmem:[%s9 + $0x20] sm:$0xff]
    %v1274 = vld [vmem:[%s9 + $0x28] sm:$0xff]
    %v1275 = vld [vmem:[%s9 + $0x30] sm:$0xff]
    %v1276 = vld [vmem:[%s9 + $0x38] sm:$0xff]
    %v1277 = vld [vmem:[%s10] sm:$0x1]
    %v1279 = vlaneseq
    %v1280 = vshrl.u32 %v1279, 7
    %v1281 = vsub.s32 0, %v1280
    %v1282 = vrot.slane %v1277, %v1281
    %vm1284 = vcmask 523264
    %v1286 = vsel %vm1284, %v1267, 0
    %v1289 = vsel %vm1284, %v1268, 0
    %1291 = vmatprep.subr.mxu0 0.0
    %1292 = vmatpush1.msra.mxu0 0.0
    %1293 = vmatprep.subr.mxu0 0.0
    %1294 = vmatpush1.msra.mxu0 0.0
    %1295 = vmatprep.subr.mxu0 0.0
    %1296 = vmatpush1.msra.mxu0 0.0
    %1297 = vmatprep.subr.mxu0 0.0
    %1298 = vmatpush1.msra.mxu0 0.0
    %1299 = vmatprep.subr.mxu0 0.0
    %1300 = vmatpush1.msra.mxu0 0.0
    %1301 = vmatprep.subr.mxu0 0.0
    %1302 = vmatpush1.msra.mxu0 0.0
    %1303 = vmatprep.subr.mxu0 0.0
    %1304 = vmatpush1.msra.mxu0 0.0
    %1305 = vmatprep.subr.mxu0 0.0
    %1306 = vmatpush1.msra.mxu0 0.0
    %1307 = vmatprep.subr.mxu0 0.0
    %1308 = vmatpush1.msra.mxu0 %v1276
    %1309 = vmatprep.subr.mxu0 0.0
    %1310 = vmatpush1.msra.mxu0 %v1275
    %1311 = vmatprep.subr.mxu0 0.0
    %1312 = vmatpush1.msra.mxu0 %v1274
    %1313 = vmatprep.subr.mxu0 0.0
    %1314 = vmatpush1.msra.mxu0 %v1273
    %1315 = vmatprep.subr.mxu0 0.0
    %1316 = vmatpush1.msra.mxu0 %v1272
    %1317 = vmatprep.subr.mxu0 0.0
    %1318 = vmatpush1.msra.mxu0 %v1271
    %1319 = vmatprep.subr.mxu0 0.0
    %1320 = vmatpush1.msra.mxu0 %v1270
    %1321 = vmatprep.subr.mxu0 0.0
    %1322 = vmatpush1.msra.mxu0 %v1269
    %1323 = vmatprep.subr.mxu0 0.0
    %1324 = vmatpush2.msra.mxu0 0.0
    %1325 = vmatprep.subr.mxu0 0.0
    %1326 = vmatpush2.msra.mxu0 0.0
    %1327 = vmatprep.subr.mxu0 0.0
    %1328 = vmatpush2.msra.mxu0 0.0
    %1329 = vmatprep.subr.mxu0 0.0
    %1330 = vmatpush2.msra.mxu0 0.0
    %1331 = vmatprep.subr.mxu0 0.0
    %1332 = vmatpush2.msra.mxu0 0.0
    %1333 = vmatprep.subr.mxu0 0.0
    %1334 = vmatpush2.msra.mxu0 0.0
    %1335 = vmatprep.subr.mxu0 0.0
    %1336 = vmatpush2.msra.mxu0 0.0
    %1337 = vmatprep.subr.mxu0 0.0
    %1338 = vmatpush2.msra.mxu0 0.0
    %1339 = vmatprep.subr.mxu0 0.0
    %1340 = vmatpush2.msra.mxu0 0.0
    %1341 = vmatprep.subr.mxu0 0.0
    %1342 = vmatpush2.msra.mxu0 0.0
    %1343 = vmatprep.subr.mxu0 0.0
    %1344 = vmatpush2.msra.mxu0 0.0
    %1345 = vmatprep.subr.mxu0 0.0
    %1346 = vmatpush2.msra.mxu0 0.0
    %1347 = vmatprep.subr.mxu0 0.0
    %1348 = vmatpush2.msra.mxu0 0.0
    %1349 = vmatprep.subr.mxu0 0.0
    %1350 = vmatpush2.msra.mxu0 0.0
    %1351 = vmatprep.subr.mxu0 0.0
    %1352 = vmatpush2.msra.mxu0 0.0
    %1353 = vmatprep.subr.mxu0 0.0
    %1354 = vmatpush2.msra.mxu0 0.0
    %1355 = vmatprep.mubr.f32.mxu0 0.0
    %1356 = vmatmul.mubr.f32.gmra.mxu0 %v1286
    %v1357 = vpop.f32.mrf.mxu0
    %v1358 = vadd.f32 %v1282, %v1357
    %v1359 = vpop.f32.mrf.mxu0
    %1360 = vmatprep.mubr.f32.mxu0 0.0
    %1361 = vmatmul.mubr.f32.gmra.mxu0 %v1289
    %v1362 = vpop.f32.mrf.mxu0
    %v1363 = vadd.f32 %v1282, %v1362
    %v1364 = vpop.f32.mrf.mxu0
    %1365 = vdwg.mxu0
    %v1366 = vadd.f32 %v1173, %v1358
    %v1367 = vadd.f32 %v1174, %v1363
    %v1368 = vld [vmem:[%s11] sm:$0x1]
    %v1369 = vld [vmem:[%s12] sm:$0x1]
    %v1370 = vsel %vm123, %v1366, 0.0
    %1371 = vadd.xlane.f32.xlu0 %v1370
    %v1372 = vpop.xlane.xlu0 %1371
    %v1373 = vsel %vm123, %v1367, 0.0
    %1374 = vadd.xlane.f32.xlu0 %v1373
    %v1375 = vpop.xlane.xlu0 %1374
    %v1376 = vmul.f32 %v1372, %v1138
    %v1377 = vmul.f32 %v1375, %v1138
    %v1378 = vsub.f32 %v1366, %v1376
    %v1379 = vsub.f32 %v1367, %v1377
    %v1380 = vmul.f32 %v1378, %v1378
    %v1381 = vmul.f32 %v1379, %v1379
    %v1382 = vsel %vm123, %v1380, 0.0
    %1383 = vadd.xlane.f32.xlu0 %v1382
    %v1384 = vpop.xlane.xlu0 %1383
    %v1385 = vsel %vm123, %v1381, 0.0
    %1386 = vadd.xlane.f32.xlu0 %v1385
    %v1387 = vpop.xlane.xlu0 %1386
    %v1388 = vmul.f32 %v1384, %v1138
    %v1389 = vmul.f32 %v1387, %v1138
    %v1390 = vadd.f32 %v1388, 1e-05
    %v1391 = vadd.f32 %v1389, 1e-05
    %v1392 = vrsqrt.pop %v1390
    %v1393 = vrsqrt.pop %v1391
    %v1394 = vmul.f32 %v1378, %v1392
    %v1395 = vmul.f32 %v1379, %v1393
    %v1397 = vlaneseq
    %v1398 = vshrl.u32 %v1397, 7
    %v1399 = vsub.s32 0, %v1398
    %v1400 = vrot.slane %v1368, %v1399
    %v1402 = vmul.f32 %v1394, %v1400
    %v1403 = vmul.f32 %v1395, %v1400
    %v1405 = vlaneseq
    %v1406 = vshrl.u32 %v1405, 7
    %v1407 = vsub.s32 0, %v1406
    %v1408 = vrot.slane %v1369, %v1407
    %v1410 = vadd.f32 %v1402, %v1408
    %v1411 = vadd.f32 %v1403, %v1408
    %s1412 = scalar_lea.vmem %s1, 32
    %v1413 = vld [vmem:[%s1412] sm:$0xff]
    %v1414 = vld [vmem:[%s1412 + $0x8] sm:$0xff]
    %v1415 = vld [vmem:[%s1412 + $0x10] sm:$0xff]
    %v1416 = vld [vmem:[%s1412 + $0x18] sm:$0xff]
    %s1417 = scalar_lea.vmem %s2, 1
    %v1418 = vld [vmem:[%s1417] sm:$0x1]
    %v1420 = vlaneseq
    %v1421 = vshrl.u32 %v1420, 7
    %v1422 = vsub.s32 0, %v1421
    %v1423 = vrot.slane %v1418, %v1422
    %v1426 = vsel %vm123, %v1410, 0
    %v1429 = vsel %vm123, %v1411, 0
    %1431 = vmatprep.subr.mxu0 0.0
    %1432 = vmatpush1.msra.mxu0 0.0
    %1433 = vmatprep.subr.mxu0 0.0
    %1434 = vmatpush1.msra.mxu0 0.0
    %1435 = vmatprep.subr.mxu0 0.0
    %1436 = vmatpush1.msra.mxu0 0.0
    %1437 = vmatprep.subr.mxu0 0.0
    %1438 = vmatpush1.msra.mxu0 0.0
    %1439 = vmatprep.subr.mxu0 0.0
    %1440 = vmatpush1.msra.mxu0 0.0
    %1441 = vmatprep.subr.mxu0 0.0
    %1442 = vmatpush1.msra.mxu0 0.0
    %1443 = vmatprep.subr.mxu0 0.0
    %1444 = vmatpush1.msra.mxu0 0.0
    %1445 = vmatprep.subr.mxu0 0.0
    %1446 = vmatpush1.msra.mxu0 0.0
    %1447 = vmatprep.subr.mxu0 0.0
    %1448 = vmatpush1.msra.mxu0 0.0
    %1449 = vmatprep.subr.mxu0 0.0
    %1450 = vmatpush1.msra.mxu0 0.0
    %1451 = vmatprep.subr.mxu0 0.0
    %1452 = vmatpush1.msra.mxu0 0.0
    %1453 = vmatprep.subr.mxu0 0.0
    %1454 = vmatpush1.msra.mxu0 0.0
    %1455 = vmatprep.subr.mxu0 0.0
    %1456 = vmatpush1.msra.mxu0 %v1416
    %1457 = vmatprep.subr.mxu0 0.0
    %1458 = vmatpush1.msra.mxu0 %v1415
    %1459 = vmatprep.subr.mxu0 0.0
    %1460 = vmatpush1.msra.mxu0 %v1414
    %1461 = vmatprep.subr.mxu0 0.0
    %1462 = vmatpush1.msra.mxu0 %v1413
    %1463 = vmatprep.subr.mxu0 0.0
    %1464 = vmatpush2.msra.mxu0 0.0
    %1465 = vmatprep.subr.mxu0 0.0
    %1466 = vmatpush2.msra.mxu0 0.0
    %1467 = vmatprep.subr.mxu0 0.0
    %1468 = vmatpush2.msra.mxu0 0.0
    %1469 = vmatprep.subr.mxu0 0.0
    %1470 = vmatpush2.msra.mxu0 0.0
    %1471 = vmatprep.subr.mxu0 0.0
    %1472 = vmatpush2.msra.mxu0 0.0
    %1473 = vmatprep.subr.mxu0 0.0
    %1474 = vmatpush2.msra.mxu0 0.0
    %1475 = vmatprep.subr.mxu0 0.0
    %1476 = vmatpush2.msra.mxu0 0.0
    %1477 = vmatprep.subr.mxu0 0.0
    %1478 = vmatpush2.msra.mxu0 0.0
    %1479 = vmatprep.subr.mxu0 0.0
    %1480 = vmatpush2.msra.mxu0 0.0
    %1481 = vmatprep.subr.mxu0 0.0
    %1482 = vmatpush2.msra.mxu0 0.0
    %1483 = vmatprep.subr.mxu0 0.0
    %1484 = vmatpush2.msra.mxu0 0.0
    %1485 = vmatprep.subr.mxu0 0.0
    %1486 = vmatpush2.msra.mxu0 0.0
    %1487 = vmatprep.subr.mxu0 0.0
    %1488 = vmatpush2.msra.mxu0 0.0
    %1489 = vmatprep.subr.mxu0 0.0
    %1490 = vmatpush2.msra.mxu0 0.0
    %1491 = vmatprep.subr.mxu0 0.0
    %1492 = vmatpush2.msra.mxu0 0.0
    %1493 = vmatprep.subr.mxu0 0.0
    %1494 = vmatpush2.msra.mxu0 0.0
    %1495 = vmatprep.mubr.f32.mxu0 0.0
    %1496 = vmatmul.mubr.f32.gmra.mxu0 %v1426
    %v1497 = vpop.f32.mrf.mxu0
    %v1498 = vadd.f32 %v1423, %v1497
    %v1499 = vpop.f32.mrf.mxu0
    %1500 = vmatprep.mubr.f32.mxu0 0.0
    %1501 = vmatmul.mubr.f32.gmra.mxu0 %v1429
    %v1502 = vpop.f32.mrf.mxu0
    %v1503 = vadd.f32 %v1423, %v1502
    %v1504 = vpop.f32.mrf.mxu0
    %1505 = vdwg.mxu0
    %1508 = vrot.lane.b32.xlu0 %v1498, 120
    %v1509 = vpop.permute.xlu0 %1508
    %1510 = vrot.lane.b32.xlu0 %v1503, 120
    %v1511 = vpop.permute.xlu0 %1510
    %1512 = vrot.lane.b32.xlu0 %v1498, 112
    %v1513 = vpop.permute.xlu0 %1512
    %1514 = vrot.lane.b32.xlu0 %v1503, 112
    %v1515 = vpop.permute.xlu0 %1514
    %1516 = vrot.lane.b32.xlu0 %v1498, 104
    %v1517 = vpop.permute.xlu0 %1516
    %1518 = vrot.lane.b32.xlu0 %v1503, 104
    %v1519 = vpop.permute.xlu0 %1518
    %1520 = vrot.lane.b32.xlu0 %v1498, 96
    %v1521 = vpop.permute.xlu0 %1520
    %1522 = vrot.lane.b32.xlu0 %v1503, 96
    %v1523 = vpop.permute.xlu0 %1522
    %v1524 = vsel %vm223, %v1498, 0
    %v1526 = vsel %vm223, %v1503, 0
    %v1528 = vsel %vm223, %v1521, 0
    %v1530 = vsel %vm223, %v1523, 0
    %1532 = vmatprep.subr.mxu0 0.0
    %1533 = vmatpush1.xpose.msra.mxu0 0.0
    %1534 = vmatprep.subr.mxu0 0.0
    %1535 = vmatpush1.xpose.msra.mxu0 0.0
    %1536 = vmatprep.subr.mxu0 0.0
    %1537 = vmatpush1.xpose.msra.mxu0 0.0
    %1538 = vmatprep.subr.mxu0 0.0
    %1539 = vmatpush1.xpose.msra.mxu0 0.0
    %1540 = vmatprep.subr.mxu0 0.0
    %1541 = vmatpush1.xpose.msra.mxu0 0.0
    %1542 = vmatprep.subr.mxu0 0.0
    %1543 = vmatpush1.xpose.msra.mxu0 0.0
    %1544 = vmatprep.subr.mxu0 0.0
    %1545 = vmatpush1.xpose.msra.mxu0 0.0
    %1546 = vmatprep.subr.mxu0 0.0
    %1547 = vmatpush1.xpose.msra.mxu0 0.0
    %1548 = vmatprep.subr.mxu0 0.0
    %1549 = vmatpush1.xpose.msra.mxu0 0.0
    %1550 = vmatprep.subr.mxu0 0.0
    %1551 = vmatpush1.xpose.msra.mxu0 0.0
    %1552 = vmatprep.subr.mxu0 0.0
    %1553 = vmatpush1.xpose.msra.mxu0 0.0
    %1554 = vmatprep.subr.mxu0 0.0
    %1555 = vmatpush1.xpose.msra.mxu0 0.0
    %1556 = vmatprep.subr.mxu0 0.0
    %1557 = vmatpush1.xpose.msra.mxu0 0.0
    %1558 = vmatprep.subr.mxu0 0.0
    %1559 = vmatpush1.xpose.msra.mxu0 0.0
    %1560 = vmatprep.subr.mxu0 0.0
    %1561 = vmatpush1.xpose.msra.mxu0 %v1530
    %1562 = vmatprep.subr.mxu0 0.0
    %1563 = vmatpush1.xpose.msra.mxu0 %v1528
    %1564 = vmatprep.subr.mxu0 0.0
    %1565 = vmatpush2.xpose.msra.mxu0 0.0
    %1566 = vmatprep.subr.mxu0 0.0
    %1567 = vmatpush2.xpose.msra.mxu0 0.0
    %1568 = vmatprep.subr.mxu0 0.0
    %1569 = vmatpush2.xpose.msra.mxu0 0.0
    %1570 = vmatprep.subr.mxu0 0.0
    %1571 = vmatpush2.xpose.msra.mxu0 0.0
    %1572 = vmatprep.subr.mxu0 0.0
    %1573 = vmatpush2.xpose.msra.mxu0 0.0
    %1574 = vmatprep.subr.mxu0 0.0
    %1575 = vmatpush2.xpose.msra.mxu0 0.0
    %1576 = vmatprep.subr.mxu0 0.0
    %1577 = vmatpush2.xpose.msra.mxu0 0.0
    %1578 = vmatprep.subr.mxu0 0.0
    %1579 = vmatpush2.xpose.msra.mxu0 0.0
    %1580 = vmatprep.subr.mxu0 0.0
    %1581 = vmatpush2.xpose.msra.mxu0 0.0
    %1582 = vmatprep.subr.mxu0 0.0
    %1583 = vmatpush2.xpose.msra.mxu0 0.0
    %1584 = vmatprep.subr.mxu0 0.0
    %1585 = vmatpush2.xpose.msra.mxu0 0.0
    %1586 = vmatprep.subr.mxu0 0.0
    %1587 = vmatpush2.xpose.msra.mxu0 0.0
    %1588 = vmatprep.subr.mxu0 0.0
    %1589 = vmatpush2.xpose.msra.mxu0 0.0
    %1590 = vmatprep.subr.mxu0 0.0
    %1591 = vmatpush2.xpose.msra.mxu0 0.0
    %1592 = vmatprep.subr.mxu0 0.0
    %1593 = vmatpush2.xpose.msra.mxu0 0.0
    %1594 = vmatprep.subr.mxu0 0.0
    %1595 = vmatpush2.xpose.msra.mxu0 0.0
    %1596 = vmatprep.mubr.f32.mxu0 0.0
    %1597 = vmatmul.mubr.f32.gmra.mxu0 %v1524
    %v1598 = vpop.f32.mrf.mxu0
    %v1599 = vadd.f32 %v110, %v1598
    %v1600 = vpop.f32.mrf.mxu0
    %1601 = vmatprep.mubr.f32.mxu0 0.0
    %1602 = vmatmul.mubr.f32.gmra.mxu0 %v1526
    %v1603 = vpop.f32.mrf.mxu0
    %v1604 = vadd.f32 %v111, %v1603
    %v1605 = vpop.f32.mrf.mxu0
    %1606 = vdwg.mxu0
    %1607 = vrot.lane.b32.xlu0 %v1509, 96
    %v1608 = vpop.permute.xlu0 %1607
    %1609 = vrot.lane.b32.xlu0 %v1511, 96
    %v1610 = vpop.permute.xlu0 %1609
    %v1611 = vsel %vm223, %v1509, 0
    %v1613 = vsel %vm223, %v1511, 0
    %v1615 = vsel %vm223, %v1608, 0
    %v1617 = vsel %vm223, %v1610, 0
    %1619 = vmatprep.subr.mxu0 0.0
    %1620 = vmatpush1.xpose.msra.mxu0 0.0
    %1621 = vmatprep.subr.mxu0 0.0
    %1622 = vmatpush1.xpose.msra.mxu0 0.0
    %1623 = vmatprep.subr.mxu0 0.0
    %1624 = vmatpush1.xpose.msra.mxu0 0.0
    %1625 = vmatprep.subr.mxu0 0.0
    %1626 = vmatpush1.xpose.msra.mxu0 0.0
    %1627 = vmatprep.subr.mxu0 0.0
    %1628 = vmatpush1.xpose.msra.mxu0 0.0
    %1629 = vmatprep.subr.mxu0 0.0
    %1630 = vmatpush1.xpose.msra.mxu0 0.0
    %1631 = vmatprep.subr.mxu0 0.0
    %1632 = vmatpush1.xpose.msra.mxu0 0.0
    %1633 = vmatprep.subr.mxu0 0.0
    %1634 = vmatpush1.xpose.msra.mxu0 0.0
    %1635 = vmatprep.subr.mxu0 0.0
    %1636 = vmatpush1.xpose.msra.mxu0 0.0
    %1637 = vmatprep.subr.mxu0 0.0
    %1638 = vmatpush1.xpose.msra.mxu0 0.0
    %1639 = vmatprep.subr.mxu0 0.0
    %1640 = vmatpush1.xpose.msra.mxu0 0.0
    %1641 = vmatprep.subr.mxu0 0.0
    %1642 = vmatpush1.xpose.msra.mxu0 0.0
    %1643 = vmatprep.subr.mxu0 0.0
    %1644 = vmatpush1.xpose.msra.mxu0 0.0
    %1645 = vmatprep.subr.mxu0 0.0
    %1646 = vmatpush1.xpose.msra.mxu0 0.0
    %1647 = vmatprep.subr.mxu0 0.0
    %1648 = vmatpush1.xpose.msra.mxu0 %v1617
    %1649 = vmatprep.subr.mxu0 0.0
    %1650 = vmatpush1.xpose.msra.mxu0 %v1615
    %1651 = vmatprep.subr.mxu0 0.0
    %1652 = vmatpush2.xpose.msra.mxu0 0.0
    %1653 = vmatprep.subr.mxu0 0.0
    %1654 = vmatpush2.xpose.msra.mxu0 0.0
    %1655 = vmatprep.subr.mxu0 0.0
    %1656 = vmatpush2.xpose.msra.mxu0 0.0
    %1657 = vmatprep.subr.mxu0 0.0
    %1658 = vmatpush2.xpose.msra.mxu0 0.0
    %1659 = vmatprep.subr.mxu0 0.0
    %1660 = vmatpush2.xpose.msra.mxu0 0.0
    %1661 = vmatprep.subr.mxu0 0.0
    %1662 = vmatpush2.xpose.msra.mxu0 0.0
    %1663 = vmatprep.subr.mxu0 0.0
    %1664 = vmatpush2.xpose.msra.mxu0 0.0
    %1665 = vmatprep.subr.mxu0 0.0
    %1666 = vmatpush2.xpose.msra.mxu0 0.0
    %1667 = vmatprep.subr.mxu0 0.0
    %1668 = vmatpush2.xpose.msra.mxu0 0.0
    %1669 = vmatprep.subr.mxu0 0.0
    %1670 = vmatpush2.xpose.msra.mxu0 0.0
    %1671 = vmatprep.subr.mxu0 0.0
    %1672 = vmatpush2.xpose.msra.mxu0 0.0
    %1673 = vmatprep.subr.mxu0 0.0
    %1674 = vmatpush2.xpose.msra.mxu0 0.0
    %1675 = vmatprep.subr.mxu0 0.0
    %1676 = vmatpush2.xpose.msra.mxu0 0.0
    %1677 = vmatprep.subr.mxu0 0.0
    %1678 = vmatpush2.xpose.msra.mxu0 0.0
    %1679 = vmatprep.subr.mxu0 0.0
    %1680 = vmatpush2.xpose.msra.mxu0 0.0
    %1681 = vmatprep.subr.mxu0 0.0
    %1682 = vmatpush2.xpose.msra.mxu0 0.0
    %1683 = vmatprep.mubr.f32.mxu0 0.0
    %1684 = vmatmul.mubr.f32.gmra.mxu0 %v1611
    %v1685 = vpop.f32.mrf.mxu0
    %v1686 = vadd.f32 %v110, %v1685
    %v1687 = vpop.f32.mrf.mxu0
    %1688 = vmatprep.mubr.f32.mxu0 0.0
    %1689 = vmatmul.mubr.f32.gmra.mxu0 %v1613
    %v1690 = vpop.f32.mrf.mxu0
    %v1691 = vadd.f32 %v111, %v1690
    %v1692 = vpop.f32.mrf.mxu0
    %1693 = vdwg.mxu0
    %1694 = vrot.lane.b32.xlu0 %v1513, 96
    %v1695 = vpop.permute.xlu0 %1694
    %1696 = vrot.lane.b32.xlu0 %v1515, 96
    %v1697 = vpop.permute.xlu0 %1696
    %v1698 = vsel %vm223, %v1513, 0
    %v1700 = vsel %vm223, %v1515, 0
    %v1702 = vsel %vm223, %v1695, 0
    %v1704 = vsel %vm223, %v1697, 0
    %1706 = vmatprep.subr.mxu0 0.0
    %1707 = vmatpush1.xpose.msra.mxu0 0.0
    %1708 = vmatprep.subr.mxu0 0.0
    %1709 = vmatpush1.xpose.msra.mxu0 0.0
    %1710 = vmatprep.subr.mxu0 0.0
    %1711 = vmatpush1.xpose.msra.mxu0 0.0
    %1712 = vmatprep.subr.mxu0 0.0
    %1713 = vmatpush1.xpose.msra.mxu0 0.0
    %1714 = vmatprep.subr.mxu0 0.0
    %1715 = vmatpush1.xpose.msra.mxu0 0.0
    %1716 = vmatprep.subr.mxu0 0.0
    %1717 = vmatpush1.xpose.msra.mxu0 0.0
    %1718 = vmatprep.subr.mxu0 0.0
    %1719 = vmatpush1.xpose.msra.mxu0 0.0
    %1720 = vmatprep.subr.mxu0 0.0
    %1721 = vmatpush1.xpose.msra.mxu0 0.0
    %1722 = vmatprep.subr.mxu0 0.0
    %1723 = vmatpush1.xpose.msra.mxu0 0.0
    %1724 = vmatprep.subr.mxu0 0.0
    %1725 = vmatpush1.xpose.msra.mxu0 0.0
    %1726 = vmatprep.subr.mxu0 0.0
    %1727 = vmatpush1.xpose.msra.mxu0 0.0
    %1728 = vmatprep.subr.mxu0 0.0
    %1729 = vmatpush1.xpose.msra.mxu0 0.0
    %1730 = vmatprep.subr.mxu0 0.0
    %1731 = vmatpush1.xpose.msra.mxu0 0.0
    %1732 = vmatprep.subr.mxu0 0.0
    %1733 = vmatpush1.xpose.msra.mxu0 0.0
    %1734 = vmatprep.subr.mxu0 0.0
    %1735 = vmatpush1.xpose.msra.mxu0 %v1704
    %1736 = vmatprep.subr.mxu0 0.0
    %1737 = vmatpush1.xpose.msra.mxu0 %v1702
    %1738 = vmatprep.subr.mxu0 0.0
    %1739 = vmatpush2.xpose.msra.mxu0 0.0
    %1740 = vmatprep.subr.mxu0 0.0
    %1741 = vmatpush2.xpose.msra.mxu0 0.0
    %1742 = vmatprep.subr.mxu0 0.0
    %1743 = vmatpush2.xpose.msra.mxu0 0.0
    %1744 = vmatprep.subr.mxu0 0.0
    %1745 = vmatpush2.xpose.msra.mxu0 0.0
    %1746 = vmatprep.subr.mxu0 0.0
    %1747 = vmatpush2.xpose.msra.mxu0 0.0
    %1748 = vmatprep.subr.mxu0 0.0
    %1749 = vmatpush2.xpose.msra.mxu0 0.0
    %1750 = vmatprep.subr.mxu0 0.0
    %1751 = vmatpush2.xpose.msra.mxu0 0.0
    %1752 = vmatprep.subr.mxu0 0.0
    %1753 = vmatpush2.xpose.msra.mxu0 0.0
    %1754 = vmatprep.subr.mxu0 0.0
    %1755 = vmatpush2.xpose.msra.mxu0 0.0
    %1756 = vmatprep.subr.mxu0 0.0
    %1757 = vmatpush2.xpose.msra.mxu0 0.0
    %1758 = vmatprep.subr.mxu0 0.0
    %1759 = vmatpush2.xpose.msra.mxu0 0.0
    %1760 = vmatprep.subr.mxu0 0.0
    %1761 = vmatpush2.xpose.msra.mxu0 0.0
    %1762 = vmatprep.subr.mxu0 0.0
    %1763 = vmatpush2.xpose.msra.mxu0 0.0
    %1764 = vmatprep.subr.mxu0 0.0
    %1765 = vmatpush2.xpose.msra.mxu0 0.0
    %1766 = vmatprep.subr.mxu0 0.0
    %1767 = vmatpush2.xpose.msra.mxu0 0.0
    %1768 = vmatprep.subr.mxu0 0.0
    %1769 = vmatpush2.xpose.msra.mxu0 0.0
    %1770 = vmatprep.mubr.f32.mxu0 0.0
    %1771 = vmatmul.mubr.f32.gmra.mxu0 %v1698
    %v1772 = vpop.f32.mrf.mxu0
    %v1773 = vadd.f32 %v110, %v1772
    %v1774 = vpop.f32.mrf.mxu0
    %1775 = vmatprep.mubr.f32.mxu0 0.0
    %1776 = vmatmul.mubr.f32.gmra.mxu0 %v1700
    %v1777 = vpop.f32.mrf.mxu0
    %v1778 = vadd.f32 %v111, %v1777
    %v1779 = vpop.f32.mrf.mxu0
    %1780 = vdwg.mxu0
    %1781 = vrot.lane.b32.xlu0 %v1517, 96
    %v1782 = vpop.permute.xlu0 %1781
    %1783 = vrot.lane.b32.xlu0 %v1519, 96
    %v1784 = vpop.permute.xlu0 %1783
    %v1785 = vsel %vm223, %v1517, 0
    %v1787 = vsel %vm223, %v1519, 0
    %v1789 = vsel %vm223, %v1782, 0
    %v1791 = vsel %vm223, %v1784, 0
    %1793 = vmatprep.subr.mxu0 0.0
    %1794 = vmatpush1.xpose.msra.mxu0 0.0
    %1795 = vmatprep.subr.mxu0 0.0
    %1796 = vmatpush1.xpose.msra.mxu0 0.0
    %1797 = vmatprep.subr.mxu0 0.0
    %1798 = vmatpush1.xpose.msra.mxu0 0.0
    %1799 = vmatprep.subr.mxu0 0.0
    %1800 = vmatpush1.xpose.msra.mxu0 0.0
    %1801 = vmatprep.subr.mxu0 0.0
    %1802 = vmatpush1.xpose.msra.mxu0 0.0
    %1803 = vmatprep.subr.mxu0 0.0
    %1804 = vmatpush1.xpose.msra.mxu0 0.0
    %1805 = vmatprep.subr.mxu0 0.0
    %1806 = vmatpush1.xpose.msra.mxu0 0.0
    %1807 = vmatprep.subr.mxu0 0.0
    %1808 = vmatpush1.xpose.msra.mxu0 0.0
    %1809 = vmatprep.subr.mxu0 0.0
    %1810 = vmatpush1.xpose.msra.mxu0 0.0
    %1811 = vmatprep.subr.mxu0 0.0
    %1812 = vmatpush1.xpose.msra.mxu0 0.0
    %1813 = vmatprep.subr.mxu0 0.0
    %1814 = vmatpush1.xpose.msra.mxu0 0.0
    %1815 = vmatprep.subr.mxu0 0.0
    %1816 = vmatpush1.xpose.msra.mxu0 0.0
    %1817 = vmatprep.subr.mxu0 0.0
    %1818 = vmatpush1.xpose.msra.mxu0 0.0
    %1819 = vmatprep.subr.mxu0 0.0
    %1820 = vmatpush1.xpose.msra.mxu0 0.0
    %1821 = vmatprep.subr.mxu0 0.0
    %1822 = vmatpush1.xpose.msra.mxu0 %v1791
    %1823 = vmatprep.subr.mxu0 0.0
    %1824 = vmatpush1.xpose.msra.mxu0 %v1789
    %1825 = vmatprep.subr.mxu0 0.0
    %1826 = vmatpush2.xpose.msra.mxu0 0.0
    %1827 = vmatprep.subr.mxu0 0.0
    %1828 = vmatpush2.xpose.msra.mxu0 0.0
    %1829 = vmatprep.subr.mxu0 0.0
    %1830 = vmatpush2.xpose.msra.mxu0 0.0
    %1831 = vmatprep.subr.mxu0 0.0
    %1832 = vmatpush2.xpose.msra.mxu0 0.0
    %1833 = vmatprep.subr.mxu0 0.0
    %1834 = vmatpush2.xpose.msra.mxu0 0.0
    %1835 = vmatprep.subr.mxu0 0.0
    %1836 = vmatpush2.xpose.msra.mxu0 0.0
    %1837 = vmatprep.subr.mxu0 0.0
    %1838 = vmatpush2.xpose.msra.mxu0 0.0
    %1839 = vmatprep.subr.mxu0 0.0
    %1840 = vmatpush2.xpose.msra.mxu0 0.0
    %1841 = vmatprep.subr.mxu0 0.0
    %1842 = vmatpush2.xpose.msra.mxu0 0.0
    %1843 = vmatprep.subr.mxu0 0.0
    %1844 = vmatpush2.xpose.msra.mxu0 0.0
    %1845 = vmatprep.subr.mxu0 0.0
    %1846 = vmatpush2.xpose.msra.mxu0 0.0
    %1847 = vmatprep.subr.mxu0 0.0
    %1848 = vmatpush2.xpose.msra.mxu0 0.0
    %1849 = vmatprep.subr.mxu0 0.0
    %1850 = vmatpush2.xpose.msra.mxu0 0.0
    %1851 = vmatprep.subr.mxu0 0.0
    %1852 = vmatpush2.xpose.msra.mxu0 0.0
    %1853 = vmatprep.subr.mxu0 0.0
    %1854 = vmatpush2.xpose.msra.mxu0 0.0
    %1855 = vmatprep.subr.mxu0 0.0
    %1856 = vmatpush2.xpose.msra.mxu0 0.0
    %1857 = vmatprep.mubr.f32.mxu0 0.0
    %1858 = vmatmul.mubr.f32.gmra.mxu0 %v1785
    %v1859 = vpop.f32.mrf.mxu0
    %v1860 = vadd.f32 %v110, %v1859
    %v1861 = vpop.f32.mrf.mxu0
    %1862 = vmatprep.mubr.f32.mxu0 0.0
    %1863 = vmatmul.mubr.f32.gmra.mxu0 %v1787
    %v1864 = vpop.f32.mrf.mxu0
    %v1865 = vadd.f32 %v111, %v1864
    %v1866 = vpop.f32.mrf.mxu0
    %1867 = vdwg.mxu0
    %v1868 = vsel %vm568, %v1599, -inf
    %1869 = vmax.xlane.f32.xlu0 %v1868
    %v1870 = vpop.xlane.xlu0 %1869
    %v1871 = vsel %vm568, %v1604, -inf
    %1872 = vmax.xlane.f32.xlu0 %v1871
    %v1873 = vpop.xlane.xlu0 %1872
    %v1874 = vsel %vm568, %v1686, -inf
    %1875 = vmax.xlane.f32.xlu0 %v1874
    %v1876 = vpop.xlane.xlu0 %1875
    %v1877 = vsel %vm568, %v1691, -inf
    %1878 = vmax.xlane.f32.xlu0 %v1877
    %v1879 = vpop.xlane.xlu0 %1878
    %v1880 = vsel %vm568, %v1773, -inf
    %1881 = vmax.xlane.f32.xlu0 %v1880
    %v1882 = vpop.xlane.xlu0 %1881
    %v1883 = vsel %vm568, %v1778, -inf
    %1884 = vmax.xlane.f32.xlu0 %v1883
    %v1885 = vpop.xlane.xlu0 %1884
    %v1886 = vsel %vm568, %v1860, -inf
    %1887 = vmax.xlane.f32.xlu0 %v1886
    %v1888 = vpop.xlane.xlu0 %1887
    %v1889 = vsel %vm568, %v1865, -inf
    %1890 = vmax.xlane.f32.xlu0 %v1889
    %v1891 = vpop.xlane.xlu0 %1890
    %v1892 = vsub.f32 %v1599, %v1870
    %v1893 = vsub.f32 %v1604, %v1873
    %v1894 = vsub.f32 %v1686, %v1876
    %v1895 = vsub.f32 %v1691, %v1879
    %v1896 = vsub.f32 %v1773, %v1882
    %v1897 = vsub.f32 %v1778, %v1885
    %v1898 = vsub.f32 %v1860, %v1888
    %v1899 = vsub.f32 %v1865, %v1891
    %v1900 = vmul.f32 %v1892, 1.442695
    %v1901 = vpow.pop %v1900
    %v1902 = vmul.f32 %v1893, 1.442695
    %v1903 = vpow.pop %v1902
    %v1904 = vmul.f32 %v1894, 1.442695
    %v1905 = vpow.pop %v1904
    %v1906 = vmul.f32 %v1895, 1.442695
    %v1907 = vpow.pop %v1906
    %v1908 = vmul.f32 %v1896, 1.442695
    %v1909 = vpow.pop %v1908
    %v1910 = vmul.f32 %v1897, 1.442695
    %v1911 = vpow.pop %v1910
    %v1912 = vmul.f32 %v1898, 1.442695
    %v1913 = vpow.pop %v1912
    %v1914 = vmul.f32 %v1899, 1.442695
    %v1915 = vpow.pop %v1914
    %v1916 = vsel %vm568, %v1901, 0.0
    %1917 = vadd.xlane.f32.xlu0 %v1916
    %v1918 = vpop.xlane.xlu0 %1917
    %v1919 = vsel %vm568, %v1903, 0.0
    %1920 = vadd.xlane.f32.xlu0 %v1919
    %v1921 = vpop.xlane.xlu0 %1920
    %v1922 = vsel %vm568, %v1905, 0.0
    %1923 = vadd.xlane.f32.xlu0 %v1922
    %v1924 = vpop.xlane.xlu0 %1923
    %v1925 = vsel %vm568, %v1907, 0.0
    %1926 = vadd.xlane.f32.xlu0 %v1925
    %v1927 = vpop.xlane.xlu0 %1926
    %v1928 = vsel %vm568, %v1909, 0.0
    %1929 = vadd.xlane.f32.xlu0 %v1928
    %v1930 = vpop.xlane.xlu0 %1929
    %v1931 = vsel %vm568, %v1911, 0.0
    %1932 = vadd.xlane.f32.xlu0 %v1931
    %v1933 = vpop.xlane.xlu0 %1932
    %v1934 = vsel %vm568, %v1913, 0.0
    %1935 = vadd.xlane.f32.xlu0 %v1934
    %v1936 = vpop.xlane.xlu0 %1935
    %v1937 = vsel %vm568, %v1915, 0.0
    %1938 = vadd.xlane.f32.xlu0 %v1937
    %v1939 = vpop.xlane.xlu0 %1938
    %v1940 = vrcp.pop %v1918
    %v1941 = vrcp.pop %v1921
    %v1942 = vrcp.pop %v1924
    %v1943 = vrcp.pop %v1927
    %v1944 = vrcp.pop %v1930
    %v1945 = vrcp.pop %v1933
    %v1946 = vrcp.pop %v1936
    %v1947 = vrcp.pop %v1939
    %v1948 = vmul.f32 %v1901, %v1940
    %v1949 = vmul.f32 %v1903, %v1941
    %v1950 = vmul.f32 %v1905, %v1942
    %v1951 = vmul.f32 %v1907, %v1943
    %v1952 = vmul.f32 %v1909, %v1944
    %v1953 = vmul.f32 %v1911, %v1945
    %v1954 = vmul.f32 %v1913, %v1946
    %v1955 = vmul.f32 %v1915, %v1947
    %1956 = vrot.lane.b32.xlu0 %v1498, 64
    %v1957 = vpop.permute.xlu0 %1956
    %1958 = vrot.lane.b32.xlu0 %v1503, 64
    %v1959 = vpop.permute.xlu0 %1958
    %v1963 = vsel %vm568, %v1948, 0
    %v1966 = vsel %vm568, %v1949, 0
    %1968 = vmatprep.subr.mxu0 0.0
    %1969 = vmatpush1.msra.mxu0 0.0
    %1970 = vmatprep.subr.mxu0 0.0
    %1971 = vmatpush1.msra.mxu0 0.0
    %1972 = vmatprep.subr.mxu0 0.0
    %1973 = vmatpush1.msra.mxu0 0.0
    %1974 = vmatprep.subr.mxu0 0.0
    %1975 = vmatpush1.msra.mxu0 0.0
    %1976 = vmatprep.subr.mxu0 0.0
    %1977 = vmatpush1.msra.mxu0 0.0
    %1978 = vmatprep.subr.mxu0 0.0
    %1979 = vmatpush1.msra.mxu0 0.0
    %1980 = vmatprep.subr.mxu0 0.0
    %1981 = vmatpush1.msra.mxu0 0.0
    %1982 = vmatprep.subr.mxu0 0.0
    %1983 = vmatpush1.msra.mxu0 0.0
    %1984 = vmatprep.subr.mxu0 0.0
    %1985 = vmatpush1.msra.mxu0 0.0
    %1986 = vmatprep.subr.mxu0 0.0
    %1987 = vmatpush1.msra.mxu0 0.0
    %1988 = vmatprep.subr.mxu0 0.0
    %1989 = vmatpush1.msra.mxu0 0.0
    %1990 = vmatprep.subr.mxu0 0.0
    %1991 = vmatpush1.msra.mxu0 0.0
    %1992 = vmatprep.subr.mxu0 0.0
    %1993 = vmatpush1.msra.mxu0 0.0
    %1994 = vmatprep.subr.mxu0 0.0
    %1995 = vmatpush1.msra.mxu0 0.0
    %1996 = vmatprep.subr.mxu0 0.0
    %1997 = vmatpush1.msra.mxu0 %v1959
    %1998 = vmatprep.subr.mxu0 0.0
    %1999 = vmatpush1.msra.mxu0 %v1957
    %2000 = vmatprep.subr.mxu0 0.0
    %2001 = vmatpush2.msra.mxu0 0.0
    %2002 = vmatprep.subr.mxu0 0.0
    %2003 = vmatpush2.msra.mxu0 0.0
    %2004 = vmatprep.subr.mxu0 0.0
    %2005 = vmatpush2.msra.mxu0 0.0
    %2006 = vmatprep.subr.mxu0 0.0
    %2007 = vmatpush2.msra.mxu0 0.0
    %2008 = vmatprep.subr.mxu0 0.0
    %2009 = vmatpush2.msra.mxu0 0.0
    %2010 = vmatprep.subr.mxu0 0.0
    %2011 = vmatpush2.msra.mxu0 0.0
    %2012 = vmatprep.subr.mxu0 0.0
    %2013 = vmatpush2.msra.mxu0 0.0
    %2014 = vmatprep.subr.mxu0 0.0
    %2015 = vmatpush2.msra.mxu0 0.0
    %2016 = vmatprep.subr.mxu0 0.0
    %2017 = vmatpush2.msra.mxu0 0.0
    %2018 = vmatprep.subr.mxu0 0.0
    %2019 = vmatpush2.msra.mxu0 0.0
    %2020 = vmatprep.subr.mxu0 0.0
    %2021 = vmatpush2.msra.mxu0 0.0
    %2022 = vmatprep.subr.mxu0 0.0
    %2023 = vmatpush2.msra.mxu0 0.0
    %2024 = vmatprep.subr.mxu0 0.0
    %2025 = vmatpush2.msra.mxu0 0.0
    %2026 = vmatprep.subr.mxu0 0.0
    %2027 = vmatpush2.msra.mxu0 0.0
    %2028 = vmatprep.subr.mxu0 0.0
    %2029 = vmatpush2.msra.mxu0 0.0
    %2030 = vmatprep.subr.mxu0 0.0
    %2031 = vmatpush2.msra.mxu0 0.0
    %2032 = vmatprep.mubr.f32.mxu0 0.0
    %2033 = vmatmul.mubr.f32.gmra.mxu0 %v1963
    %v2034 = vpop.f32.mrf.mxu0
    %v2035 = vadd.f32 0.0, %v2034
    %v2036 = vpop.f32.mrf.mxu0
    %2037 = vmatprep.mubr.f32.mxu0 0.0
    %2038 = vmatmul.mubr.f32.gmra.mxu0 %v1966
    %v2039 = vpop.f32.mrf.mxu0
    %v2040 = vadd.f32 0.0, %v2039
    %v2041 = vpop.f32.mrf.mxu0
    %2042 = vdwg.mxu0
    %2043 = vrot.lane.b32.xlu0 %v1509, 64
    %v2044 = vpop.permute.xlu0 %2043
    %2045 = vrot.lane.b32.xlu0 %v1511, 64
    %v2046 = vpop.permute.xlu0 %2045
    %v2050 = vsel %vm568, %v1950, 0
    %v2053 = vsel %vm568, %v1951, 0
    %2055 = vmatprep.subr.mxu0 0.0
    %2056 = vmatpush1.msra.mxu0 0.0
    %2057 = vmatprep.subr.mxu0 0.0
    %2058 = vmatpush1.msra.mxu0 0.0
    %2059 = vmatprep.subr.mxu0 0.0
    %2060 = vmatpush1.msra.mxu0 0.0
    %2061 = vmatprep.subr.mxu0 0.0
    %2062 = vmatpush1.msra.mxu0 0.0
    %2063 = vmatprep.subr.mxu0 0.0
    %2064 = vmatpush1.msra.mxu0 0.0
    %2065 = vmatprep.subr.mxu0 0.0
    %2066 = vmatpush1.msra.mxu0 0.0
    %2067 = vmatprep.subr.mxu0 0.0
    %2068 = vmatpush1.msra.mxu0 0.0
    %2069 = vmatprep.subr.mxu0 0.0
    %2070 = vmatpush1.msra.mxu0 0.0
    %2071 = vmatprep.subr.mxu0 0.0
    %2072 = vmatpush1.msra.mxu0 0.0
    %2073 = vmatprep.subr.mxu0 0.0
    %2074 = vmatpush1.msra.mxu0 0.0
    %2075 = vmatprep.subr.mxu0 0.0
    %2076 = vmatpush1.msra.mxu0 0.0
    %2077 = vmatprep.subr.mxu0 0.0
    %2078 = vmatpush1.msra.mxu0 0.0
    %2079 = vmatprep.subr.mxu0 0.0
    %2080 = vmatpush1.msra.mxu0 0.0
    %2081 = vmatprep.subr.mxu0 0.0
    %2082 = vmatpush1.msra.mxu0 0.0
    %2083 = vmatprep.subr.mxu0 0.0
    %2084 = vmatpush1.msra.mxu0 %v2046
    %2085 = vmatprep.subr.mxu0 0.0
    %2086 = vmatpush1.msra.mxu0 %v2044
    %2087 = vmatprep.subr.mxu0 0.0
    %2088 = vmatpush2.msra.mxu0 0.0
    %2089 = vmatprep.subr.mxu0 0.0
    %2090 = vmatpush2.msra.mxu0 0.0
    %2091 = vmatprep.subr.mxu0 0.0
    %2092 = vmatpush2.msra.mxu0 0.0
    %2093 = vmatprep.subr.mxu0 0.0
    %2094 = vmatpush2.msra.mxu0 0.0
    %2095 = vmatprep.subr.mxu0 0.0
    %2096 = vmatpush2.msra.mxu0 0.0
    %2097 = vmatprep.subr.mxu0 0.0
    %2098 = vmatpush2.msra.mxu0 0.0
    %2099 = vmatprep.subr.mxu0 0.0
    %2100 = vmatpush2.msra.mxu0 0.0
    %2101 = vmatprep.subr.mxu0 0.0
    %2102 = vmatpush2.msra.mxu0 0.0
    %2103 = vmatprep.subr.mxu0 0.0
    %2104 = vmatpush2.msra.mxu0 0.0
    %2105 = vmatprep.subr.mxu0 0.0
    %2106 = vmatpush2.msra.mxu0 0.0
    %2107 = vmatprep.subr.mxu0 0.0
    %2108 = vmatpush2.msra.mxu0 0.0
    %2109 = vmatprep.subr.mxu0 0.0
    %2110 = vmatpush2.msra.mxu0 0.0
    %2111 = vmatprep.subr.mxu0 0.0
    %2112 = vmatpush2.msra.mxu0 0.0
    %2113 = vmatprep.subr.mxu0 0.0
    %2114 = vmatpush2.msra.mxu0 0.0
    %2115 = vmatprep.subr.mxu0 0.0
    %2116 = vmatpush2.msra.mxu0 0.0
    %2117 = vmatprep.subr.mxu0 0.0
    %2118 = vmatpush2.msra.mxu0 0.0
    %2119 = vmatprep.mubr.f32.mxu0 0.0
    %2120 = vmatmul.mubr.f32.gmra.mxu0 %v2050
    %v2121 = vpop.f32.mrf.mxu0
    %v2122 = vadd.f32 0.0, %v2121
    %v2123 = vpop.f32.mrf.mxu0
    %2124 = vmatprep.mubr.f32.mxu0 0.0
    %2125 = vmatmul.mubr.f32.gmra.mxu0 %v2053
    %v2126 = vpop.f32.mrf.mxu0
    %v2127 = vadd.f32 0.0, %v2126
    %v2128 = vpop.f32.mrf.mxu0
    %2129 = vdwg.mxu0
    %2130 = vrot.lane.b32.xlu0 %v1513, 64
    %v2131 = vpop.permute.xlu0 %2130
    %2132 = vrot.lane.b32.xlu0 %v1515, 64
    %v2133 = vpop.permute.xlu0 %2132
    %v2137 = vsel %vm568, %v1952, 0
    %v2140 = vsel %vm568, %v1953, 0
    %2142 = vmatprep.subr.mxu0 0.0
    %2143 = vmatpush1.msra.mxu0 0.0
    %2144 = vmatprep.subr.mxu0 0.0
    %2145 = vmatpush1.msra.mxu0 0.0
    %2146 = vmatprep.subr.mxu0 0.0
    %2147 = vmatpush1.msra.mxu0 0.0
    %2148 = vmatprep.subr.mxu0 0.0
    %2149 = vmatpush1.msra.mxu0 0.0
    %2150 = vmatprep.subr.mxu0 0.0
    %2151 = vmatpush1.msra.mxu0 0.0
    %2152 = vmatprep.subr.mxu0 0.0
    %2153 = vmatpush1.msra.mxu0 0.0
    %2154 = vmatprep.subr.mxu0 0.0
    %2155 = vmatpush1.msra.mxu0 0.0
    %2156 = vmatprep.subr.mxu0 0.0
    %2157 = vmatpush1.msra.mxu0 0.0
    %2158 = vmatprep.subr.mxu0 0.0
    %2159 = vmatpush1.msra.mxu0 0.0
    %2160 = vmatprep.subr.mxu0 0.0
    %2161 = vmatpush1.msra.mxu0 0.0
    %2162 = vmatprep.subr.mxu0 0.0
    %2163 = vmatpush1.msra.mxu0 0.0
    %2164 = vmatprep.subr.mxu0 0.0
    %2165 = vmatpush1.msra.mxu0 0.0
    %2166 = vmatprep.subr.mxu0 0.0
    %2167 = vmatpush1.msra.mxu0 0.0
    %2168 = vmatprep.subr.mxu0 0.0
    %2169 = vmatpush1.msra.mxu0 0.0
    %2170 = vmatprep.subr.mxu0 0.0
    %2171 = vmatpush1.msra.mxu0 %v2133
    %2172 = vmatprep.subr.mxu0 0.0
    %2173 = vmatpush1.msra.mxu0 %v2131
    %2174 = vmatprep.subr.mxu0 0.0
    %2175 = vmatpush2.msra.mxu0 0.0
    %2176 = vmatprep.subr.mxu0 0.0
    %2177 = vmatpush2.msra.mxu0 0.0
    %2178 = vmatprep.subr.mxu0 0.0
    %2179 = vmatpush2.msra.mxu0 0.0
    %2180 = vmatprep.subr.mxu0 0.0
    %2181 = vmatpush2.msra.mxu0 0.0
    %2182 = vmatprep.subr.mxu0 0.0
    %2183 = vmatpush2.msra.mxu0 0.0
    %2184 = vmatprep.subr.mxu0 0.0
    %2185 = vmatpush2.msra.mxu0 0.0
    %2186 = vmatprep.subr.mxu0 0.0
    %2187 = vmatpush2.msra.mxu0 0.0
    %2188 = vmatprep.subr.mxu0 0.0
    %2189 = vmatpush2.msra.mxu0 0.0
    %2190 = vmatprep.subr.mxu0 0.0
    %2191 = vmatpush2.msra.mxu0 0.0
    %2192 = vmatprep.subr.mxu0 0.0
    %2193 = vmatpush2.msra.mxu0 0.0
    %2194 = vmatprep.subr.mxu0 0.0
    %2195 = vmatpush2.msra.mxu0 0.0
    %2196 = vmatprep.subr.mxu0 0.0
    %2197 = vmatpush2.msra.mxu0 0.0
    %2198 = vmatprep.subr.mxu0 0.0
    %2199 = vmatpush2.msra.mxu0 0.0
    %2200 = vmatprep.subr.mxu0 0.0
    %2201 = vmatpush2.msra.mxu0 0.0
    %2202 = vmatprep.subr.mxu0 0.0
    %2203 = vmatpush2.msra.mxu0 0.0
    %2204 = vmatprep.subr.mxu0 0.0
    %2205 = vmatpush2.msra.mxu0 0.0
    %2206 = vmatprep.mubr.f32.mxu0 0.0
    %2207 = vmatmul.mubr.f32.gmra.mxu0 %v2137
    %v2208 = vpop.f32.mrf.mxu0
    %v2209 = vadd.f32 0.0, %v2208
    %v2210 = vpop.f32.mrf.mxu0
    %2211 = vmatprep.mubr.f32.mxu0 0.0
    %2212 = vmatmul.mubr.f32.gmra.mxu0 %v2140
    %v2213 = vpop.f32.mrf.mxu0
    %v2214 = vadd.f32 0.0, %v2213
    %v2215 = vpop.f32.mrf.mxu0
    %2216 = vdwg.mxu0
    %2217 = vrot.lane.b32.xlu0 %v1517, 64
    %v2218 = vpop.permute.xlu0 %2217
    %2219 = vrot.lane.b32.xlu0 %v1519, 64
    %v2220 = vpop.permute.xlu0 %2219
    %v2224 = vsel %vm568, %v1954, 0
    %v2227 = vsel %vm568, %v1955, 0
    %2229 = vmatprep.subr.mxu0 0.0
    %2230 = vmatpush1.msra.mxu0 0.0
    %2231 = vmatprep.subr.mxu0 0.0
    %2232 = vmatpush1.msra.mxu0 0.0
    %2233 = vmatprep.subr.mxu0 0.0
    %2234 = vmatpush1.msra.mxu0 0.0
    %2235 = vmatprep.subr.mxu0 0.0
    %2236 = vmatpush1.msra.mxu0 0.0
    %2237 = vmatprep.subr.mxu0 0.0
    %2238 = vmatpush1.msra.mxu0 0.0
    %2239 = vmatprep.subr.mxu0 0.0
    %2240 = vmatpush1.msra.mxu0 0.0
    %2241 = vmatprep.subr.mxu0 0.0
    %2242 = vmatpush1.msra.mxu0 0.0
    %2243 = vmatprep.subr.mxu0 0.0
    %2244 = vmatpush1.msra.mxu0 0.0
    %2245 = vmatprep.subr.mxu0 0.0
    %2246 = vmatpush1.msra.mxu0 0.0
    %2247 = vmatprep.subr.mxu0 0.0
    %2248 = vmatpush1.msra.mxu0 0.0
    %2249 = vmatprep.subr.mxu0 0.0
    %2250 = vmatpush1.msra.mxu0 0.0
    %2251 = vmatprep.subr.mxu0 0.0
    %2252 = vmatpush1.msra.mxu0 0.0
    %2253 = vmatprep.subr.mxu0 0.0
    %2254 = vmatpush1.msra.mxu0 0.0
    %2255 = vmatprep.subr.mxu0 0.0
    %2256 = vmatpush1.msra.mxu0 0.0
    %2257 = vmatprep.subr.mxu0 0.0
    %2258 = vmatpush1.msra.mxu0 %v2220
    %2259 = vmatprep.subr.mxu0 0.0
    %2260 = vmatpush1.msra.mxu0 %v2218
    %2261 = vmatprep.subr.mxu0 0.0
    %2262 = vmatpush2.msra.mxu0 0.0
    %2263 = vmatprep.subr.mxu0 0.0
    %2264 = vmatpush2.msra.mxu0 0.0
    %2265 = vmatprep.subr.mxu0 0.0
    %2266 = vmatpush2.msra.mxu0 0.0
    %2267 = vmatprep.subr.mxu0 0.0
    %2268 = vmatpush2.msra.mxu0 0.0
    %2269 = vmatprep.subr.mxu0 0.0
    %2270 = vmatpush2.msra.mxu0 0.0
    %2271 = vmatprep.subr.mxu0 0.0
    %2272 = vmatpush2.msra.mxu0 0.0
    %2273 = vmatprep.subr.mxu0 0.0
    %2274 = vmatpush2.msra.mxu0 0.0
    %2275 = vmatprep.subr.mxu0 0.0
    %2276 = vmatpush2.msra.mxu0 0.0
    %2277 = vmatprep.subr.mxu0 0.0
    %2278 = vmatpush2.msra.mxu0 0.0
    %2279 = vmatprep.subr.mxu0 0.0
    %2280 = vmatpush2.msra.mxu0 0.0
    %2281 = vmatprep.subr.mxu0 0.0
    %2282 = vmatpush2.msra.mxu0 0.0
    %2283 = vmatprep.subr.mxu0 0.0
    %2284 = vmatpush2.msra.mxu0 0.0
    %2285 = vmatprep.subr.mxu0 0.0
    %2286 = vmatpush2.msra.mxu0 0.0
    %2287 = vmatprep.subr.mxu0 0.0
    %2288 = vmatpush2.msra.mxu0 0.0
    %2289 = vmatprep.subr.mxu0 0.0
    %2290 = vmatpush2.msra.mxu0 0.0
    %2291 = vmatprep.subr.mxu0 0.0
    %2292 = vmatpush2.msra.mxu0 0.0
    %2293 = vmatprep.mubr.f32.mxu0 0.0
    %2294 = vmatmul.mubr.f32.gmra.mxu0 %v2224
    %v2295 = vpop.f32.mrf.mxu0
    %v2296 = vadd.f32 0.0, %v2295
    %v2297 = vpop.f32.mrf.mxu0
    %2298 = vmatprep.mubr.f32.mxu0 0.0
    %2299 = vmatmul.mubr.f32.gmra.mxu0 %v2227
    %v2300 = vpop.f32.mrf.mxu0
    %v2301 = vadd.f32 0.0, %v2300
    %v2302 = vpop.f32.mrf.mxu0
    %2303 = vdwg.mxu0
    %2306 = vrot.lane.b32.xlu0 %v2122, 8
    %v2307 = vpop.permute.xlu0 %2306
    %2308 = vrot.lane.b32.xlu0 %v2127, 8
    %v2309 = vpop.permute.xlu0 %2308
    %2314 = vrot.lane.b32.xlu0 %v2209, 16
    %v2315 = vpop.permute.xlu0 %2314
    %2316 = vrot.lane.b32.xlu0 %v2214, 16
    %v2317 = vpop.permute.xlu0 %2316
    %2322 = vrot.lane.b32.xlu0 %v2296, 24
    %v2323 = vpop.permute.xlu0 %2322
    %2324 = vrot.lane.b32.xlu0 %v2301, 24
    %v2325 = vpop.permute.xlu0 %2324
    %v2328 = vsel %vm223, %v2035, %v2307
    %v2329 = vsel %vm223, %v2040, %v2309
    %v2330 = vsel %vm568, %v2328, %v2315
    %v2331 = vsel %vm568, %v2329, %v2317
    %v2332 = vsel %vm1033, %v2330, %v2323
    %v2333 = vsel %vm1033, %v2331, %v2325
    %s2334 = scalar_lea.vmem %s3, 32
    %v2335 = vld [vmem:[%s2334] sm:$0xff]
    %v2336 = vld [vmem:[%s2334 + $0x8] sm:$0xff]
    %v2337 = vld [vmem:[%s2334 + $0x10] sm:$0xff]
    %v2338 = vld [vmem:[%s2334 + $0x18] sm:$0xff]
    %s2339 = scalar_lea.vmem %s4, 1
    %v2340 = vld [vmem:[%s2339] sm:$0x1]
    %v2342 = vlaneseq
    %v2343 = vshrl.u32 %v2342, 7
    %v2344 = vsub.s32 0, %v2343
    %v2345 = vrot.slane %v2340, %v2344
    %v2348 = vsel %vm123, %v2332, 0
    %v2351 = vsel %vm123, %v2333, 0
    %2353 = vmatprep.subr.mxu0 0.0
    %2354 = vmatpush1.msra.mxu0 0.0
    %2355 = vmatprep.subr.mxu0 0.0
    %2356 = vmatpush1.msra.mxu0 0.0
    %2357 = vmatprep.subr.mxu0 0.0
    %2358 = vmatpush1.msra.mxu0 0.0
    %2359 = vmatprep.subr.mxu0 0.0
    %2360 = vmatpush1.msra.mxu0 0.0
    %2361 = vmatprep.subr.mxu0 0.0
    %2362 = vmatpush1.msra.mxu0 0.0
    %2363 = vmatprep.subr.mxu0 0.0
    %2364 = vmatpush1.msra.mxu0 0.0
    %2365 = vmatprep.subr.mxu0 0.0
    %2366 = vmatpush1.msra.mxu0 0.0
    %2367 = vmatprep.subr.mxu0 0.0
    %2368 = vmatpush1.msra.mxu0 0.0
    %2369 = vmatprep.subr.mxu0 0.0
    %2370 = vmatpush1.msra.mxu0 0.0
    %2371 = vmatprep.subr.mxu0 0.0
    %2372 = vmatpush1.msra.mxu0 0.0
    %2373 = vmatprep.subr.mxu0 0.0
    %2374 = vmatpush1.msra.mxu0 0.0
    %2375 = vmatprep.subr.mxu0 0.0
    %2376 = vmatpush1.msra.mxu0 0.0
    %2377 = vmatprep.subr.mxu0 0.0
    %2378 = vmatpush1.msra.mxu0 %v2338
    %2379 = vmatprep.subr.mxu0 0.0
    %2380 = vmatpush1.msra.mxu0 %v2337
    %2381 = vmatprep.subr.mxu0 0.0
    %2382 = vmatpush1.msra.mxu0 %v2336
    %2383 = vmatprep.subr.mxu0 0.0
    %2384 = vmatpush1.msra.mxu0 %v2335
    %2385 = vmatprep.subr.mxu0 0.0
    %2386 = vmatpush2.msra.mxu0 0.0
    %2387 = vmatprep.subr.mxu0 0.0
    %2388 = vmatpush2.msra.mxu0 0.0
    %2389 = vmatprep.subr.mxu0 0.0
    %2390 = vmatpush2.msra.mxu0 0.0
    %2391 = vmatprep.subr.mxu0 0.0
    %2392 = vmatpush2.msra.mxu0 0.0
    %2393 = vmatprep.subr.mxu0 0.0
    %2394 = vmatpush2.msra.mxu0 0.0
    %2395 = vmatprep.subr.mxu0 0.0
    %2396 = vmatpush2.msra.mxu0 0.0
    %2397 = vmatprep.subr.mxu0 0.0
    %2398 = vmatpush2.msra.mxu0 0.0
    %2399 = vmatprep.subr.mxu0 0.0
    %2400 = vmatpush2.msra.mxu0 0.0
    %2401 = vmatprep.subr.mxu0 0.0
    %2402 = vmatpush2.msra.mxu0 0.0
    %2403 = vmatprep.subr.mxu0 0.0
    %2404 = vmatpush2.msra.mxu0 0.0
    %2405 = vmatprep.subr.mxu0 0.0
    %2406 = vmatpush2.msra.mxu0 0.0
    %2407 = vmatprep.subr.mxu0 0.0
    %2408 = vmatpush2.msra.mxu0 0.0
    %2409 = vmatprep.subr.mxu0 0.0
    %2410 = vmatpush2.msra.mxu0 0.0
    %2411 = vmatprep.subr.mxu0 0.0
    %2412 = vmatpush2.msra.mxu0 0.0
    %2413 = vmatprep.subr.mxu0 0.0
    %2414 = vmatpush2.msra.mxu0 0.0
    %2415 = vmatprep.subr.mxu0 0.0
    %2416 = vmatpush2.msra.mxu0 0.0
    %2417 = vmatprep.mubr.f32.mxu0 0.0
    %2418 = vmatmul.mubr.f32.gmra.mxu0 %v2348
    %v2419 = vpop.f32.mrf.mxu0
    %v2420 = vadd.f32 %v2345, %v2419
    %v2421 = vpop.f32.mrf.mxu0
    %2422 = vmatprep.mubr.f32.mxu0 0.0
    %2423 = vmatmul.mubr.f32.gmra.mxu0 %v2351
    %v2424 = vpop.f32.mrf.mxu0
    %v2425 = vadd.f32 %v2345, %v2424
    %v2426 = vpop.f32.mrf.mxu0
    %2427 = vdwg.mxu0
    %v2428 = vadd.f32 %v1410, %v2420
    %v2429 = vadd.f32 %v1411, %v2425
    %s2430 = scalar_lea.vmem %s5, 1
    %v2431 = vld [vmem:[%s2430] sm:$0x1]
    %s2432 = scalar_lea.vmem %s6, 1
    %v2433 = vld [vmem:[%s2432] sm:$0x1]
    %v2434 = vsel %vm123, %v2428, 0.0
    %2435 = vadd.xlane.f32.xlu0 %v2434
    %v2436 = vpop.xlane.xlu0 %2435
    %v2437 = vsel %vm123, %v2429, 0.0
    %2438 = vadd.xlane.f32.xlu0 %v2437
    %v2439 = vpop.xlane.xlu0 %2438
    %v2440 = vmul.f32 %v2436, %v1138
    %v2441 = vmul.f32 %v2439, %v1138
    %v2442 = vsub.f32 %v2428, %v2440
    %v2443 = vsub.f32 %v2429, %v2441
    %v2444 = vmul.f32 %v2442, %v2442
    %v2445 = vmul.f32 %v2443, %v2443
    %v2446 = vsel %vm123, %v2444, 0.0
    %2447 = vadd.xlane.f32.xlu0 %v2446
    %v2448 = vpop.xlane.xlu0 %2447
    %v2449 = vsel %vm123, %v2445, 0.0
    %2450 = vadd.xlane.f32.xlu0 %v2449
    %v2451 = vpop.xlane.xlu0 %2450
    %v2452 = vmul.f32 %v2448, %v1138
    %v2453 = vmul.f32 %v2451, %v1138
    %v2454 = vadd.f32 %v2452, 1e-05
    %v2455 = vadd.f32 %v2453, 1e-05
    %v2456 = vrsqrt.pop %v2454
    %v2457 = vrsqrt.pop %v2455
    %v2458 = vmul.f32 %v2442, %v2456
    %v2459 = vmul.f32 %v2443, %v2457
    %v2461 = vlaneseq
    %v2462 = vshrl.u32 %v2461, 7
    %v2463 = vsub.s32 0, %v2462
    %v2464 = vrot.slane %v2431, %v2463
    %v2466 = vmul.f32 %v2458, %v2464
    %v2467 = vmul.f32 %v2459, %v2464
    %v2469 = vlaneseq
    %v2470 = vshrl.u32 %v2469, 7
    %v2471 = vsub.s32 0, %v2470
    %v2472 = vrot.slane %v2433, %v2471
    %v2474 = vadd.f32 %v2466, %v2472
    %v2475 = vadd.f32 %v2467, %v2472
    %s2476 = scalar_lea.vmem %s7, 32
    %v2477 = vld [vmem:[%s2476] sm:$0xff]
    %v2478 = vld [vmem:[%s2476 + $0x8] sm:$0xff]
    %v2479 = vld [vmem:[%s2476 + $0x10] sm:$0xff]
    %v2480 = vld [vmem:[%s2476 + $0x18] sm:$0xff]
    %s2481 = scalar_lea.vmem %s8, 1
    %v2482 = vld [vmem:[%s2481] sm:$0x1]
    %v2484 = vlaneseq
    %v2485 = vshrl.u32 %v2484, 7
    %v2486 = vsub.s32 0, %v2485
    %v2487 = vrot.slane %v2482, %v2486
    %v2490 = vsel %vm123, %v2474, 0
    %v2493 = vsel %vm123, %v2475, 0
    %2495 = vmatprep.subr.mxu0 0.0
    %2496 = vmatpush1.msra.mxu0 0.0
    %2497 = vmatprep.subr.mxu0 0.0
    %2498 = vmatpush1.msra.mxu0 0.0
    %2499 = vmatprep.subr.mxu0 0.0
    %2500 = vmatpush1.msra.mxu0 0.0
    %2501 = vmatprep.subr.mxu0 0.0
    %2502 = vmatpush1.msra.mxu0 0.0
    %2503 = vmatprep.subr.mxu0 0.0
    %2504 = vmatpush1.msra.mxu0 0.0
    %2505 = vmatprep.subr.mxu0 0.0
    %2506 = vmatpush1.msra.mxu0 0.0
    %2507 = vmatprep.subr.mxu0 0.0
    %2508 = vmatpush1.msra.mxu0 0.0
    %2509 = vmatprep.subr.mxu0 0.0
    %2510 = vmatpush1.msra.mxu0 0.0
    %2511 = vmatprep.subr.mxu0 0.0
    %2512 = vmatpush1.msra.mxu0 0.0
    %2513 = vmatprep.subr.mxu0 0.0
    %2514 = vmatpush1.msra.mxu0 0.0
    %2515 = vmatprep.subr.mxu0 0.0
    %2516 = vmatpush1.msra.mxu0 0.0
    %2517 = vmatprep.subr.mxu0 0.0
    %2518 = vmatpush1.msra.mxu0 0.0
    %2519 = vmatprep.subr.mxu0 0.0
    %2520 = vmatpush1.msra.mxu0 %v2480
    %2521 = vmatprep.subr.mxu0 0.0
    %2522 = vmatpush1.msra.mxu0 %v2479
    %2523 = vmatprep.subr.mxu0 0.0
    %2524 = vmatpush1.msra.mxu0 %v2478
    %2525 = vmatprep.subr.mxu0 0.0
    %2526 = vmatpush1.msra.mxu0 %v2477
    %2527 = vmatprep.subr.mxu0 0.0
    %2528 = vmatpush2.msra.mxu0 0.0
    %2529 = vmatprep.subr.mxu0 0.0
    %2530 = vmatpush2.msra.mxu0 0.0
    %2531 = vmatprep.subr.mxu0 0.0
    %2532 = vmatpush2.msra.mxu0 0.0
    %2533 = vmatprep.subr.mxu0 0.0
    %2534 = vmatpush2.msra.mxu0 0.0
    %2535 = vmatprep.subr.mxu0 0.0
    %2536 = vmatpush2.msra.mxu0 0.0
    %2537 = vmatprep.subr.mxu0 0.0
    %2538 = vmatpush2.msra.mxu0 0.0
    %2539 = vmatprep.subr.mxu0 0.0
    %2540 = vmatpush2.msra.mxu0 0.0
    %2541 = vmatprep.subr.mxu0 0.0
    %2542 = vmatpush2.msra.mxu0 0.0
    %2543 = vmatprep.subr.mxu0 0.0
    %2544 = vmatpush2.msra.mxu0 0.0
    %2545 = vmatprep.subr.mxu0 0.0
    %2546 = vmatpush2.msra.mxu0 0.0
    %2547 = vmatprep.subr.mxu0 0.0
    %2548 = vmatpush2.msra.mxu0 0.0
    %2549 = vmatprep.subr.mxu0 0.0
    %2550 = vmatpush2.msra.mxu0 0.0
    %2551 = vmatprep.subr.mxu0 0.0
    %2552 = vmatpush2.msra.mxu0 0.0
    %2553 = vmatprep.subr.mxu0 0.0
    %2554 = vmatpush2.msra.mxu0 0.0
    %2555 = vmatprep.subr.mxu0 0.0
    %2556 = vmatpush2.msra.mxu0 0.0
    %2557 = vmatprep.subr.mxu0 0.0
    %2558 = vmatpush2.msra.mxu0 0.0
    %2559 = vmatprep.mubr.f32.mxu0 0.0
    %2560 = vmatmul.mubr.f32.gmra.mxu0 %v2490
    %v2561 = vpop.f32.mrf.mxu0
    %v2562 = vadd.f32 %v2487, %v2561
    %v2563 = vpop.f32.mrf.mxu0
    %2564 = vmatprep.mubr.f32.mxu0 0.0
    %2565 = vmatmul.mubr.f32.gmra.mxu0 %v2493
    %v2566 = vpop.f32.mrf.mxu0
    %v2567 = vadd.f32 %v2487, %v2566
    %v2568 = vpop.f32.mrf.mxu0
    %2569 = vdwg.mxu0
    %v2570 = vmax.f32 %v2562, 0.0
    %v2571 = vmax.f32 %v2567, 0.0
    %s2572 = scalar_lea.vmem %s9, 64
    %v2573 = vld [vmem:[%s2572] sm:$0xff]
    %v2574 = vld [vmem:[%s2572 + $0x8] sm:$0xff]
    %v2575 = vld [vmem:[%s2572 + $0x10] sm:$0xff]
    %v2576 = vld [vmem:[%s2572 + $0x18] sm:$0xff]
    %v2577 = vld [vmem:[%s2572 + $0x20] sm:$0xff]
    %v2578 = vld [vmem:[%s2572 + $0x28] sm:$0xff]
    %v2579 = vld [vmem:[%s2572 + $0x30] sm:$0xff]
    %v2580 = vld [vmem:[%s2572 + $0x38] sm:$0xff]
    %s2581 = scalar_lea.vmem %s10, 1
    %v2582 = vld [vmem:[%s2581] sm:$0x1]
    %v2584 = vlaneseq
    %v2585 = vshrl.u32 %v2584, 7
    %v2586 = vsub.s32 0, %v2585
    %v2587 = vrot.slane %v2582, %v2586
    %v2590 = vsel %vm1284, %v2570, 0
    %v2593 = vsel %vm1284, %v2571, 0
    %2595 = vmatprep.subr.mxu0 0.0
    %2596 = vmatpush1.msra.mxu0 0.0
    %2597 = vmatprep.subr.mxu0 0.0
    %2598 = vmatpush1.msra.mxu0 0.0
    %2599 = vmatprep.subr.mxu0 0.0
    %2600 = vmatpush1.msra.mxu0 0.0
    %2601 = vmatprep.subr.mxu0 0.0
    %2602 = vmatpush1.msra.mxu0 0.0
    %2603 = vmatprep.subr.mxu0 0.0
    %2604 = vmatpush1.msra.mxu0 0.0
    %2605 = vmatprep.subr.mxu0 0.0
    %2606 = vmatpush1.msra.mxu0 0.0
    %2607 = vmatprep.subr.mxu0 0.0
    %2608 = vmatpush1.msra.mxu0 0.0
    %2609 = vmatprep.subr.mxu0 0.0
    %2610 = vmatpush1.msra.mxu0 0.0
    %2611 = vmatprep.subr.mxu0 0.0
    %2612 = vmatpush1.msra.mxu0 %v2580
    %2613 = vmatprep.subr.mxu0 0.0
    %2614 = vmatpush1.msra.mxu0 %v2579
    %2615 = vmatprep.subr.mxu0 0.0
    %2616 = vmatpush1.msra.mxu0 %v2578
    %2617 = vmatprep.subr.mxu0 0.0
    %2618 = vmatpush1.msra.mxu0 %v2577
    %2619 = vmatprep.subr.mxu0 0.0
    %2620 = vmatpush1.msra.mxu0 %v2576
    %2621 = vmatprep.subr.mxu0 0.0
    %2622 = vmatpush1.msra.mxu0 %v2575
    %2623 = vmatprep.subr.mxu0 0.0
    %2624 = vmatpush1.msra.mxu0 %v2574
    %2625 = vmatprep.subr.mxu0 0.0
    %2626 = vmatpush1.msra.mxu0 %v2573
    %2627 = vmatprep.subr.mxu0 0.0
    %2628 = vmatpush2.msra.mxu0 0.0
    %2629 = vmatprep.subr.mxu0 0.0
    %2630 = vmatpush2.msra.mxu0 0.0
    %2631 = vmatprep.subr.mxu0 0.0
    %2632 = vmatpush2.msra.mxu0 0.0
    %2633 = vmatprep.subr.mxu0 0.0
    %2634 = vmatpush2.msra.mxu0 0.0
    %2635 = vmatprep.subr.mxu0 0.0
    %2636 = vmatpush2.msra.mxu0 0.0
    %2637 = vmatprep.subr.mxu0 0.0
    %2638 = vmatpush2.msra.mxu0 0.0
    %2639 = vmatprep.subr.mxu0 0.0
    %2640 = vmatpush2.msra.mxu0 0.0
    %2641 = vmatprep.subr.mxu0 0.0
    %2642 = vmatpush2.msra.mxu0 0.0
    %2643 = vmatprep.subr.mxu0 0.0
    %2644 = vmatpush2.msra.mxu0 0.0
    %2645 = vmatprep.subr.mxu0 0.0
    %2646 = vmatpush2.msra.mxu0 0.0
    %2647 = vmatprep.subr.mxu0 0.0
    %2648 = vmatpush2.msra.mxu0 0.0
    %2649 = vmatprep.subr.mxu0 0.0
    %2650 = vmatpush2.msra.mxu0 0.0
    %2651 = vmatprep.subr.mxu0 0.0
    %2652 = vmatpush2.msra.mxu0 0.0
    %2653 = vmatprep.subr.mxu0 0.0
    %2654 = vmatpush2.msra.mxu0 0.0
    %2655 = vmatprep.subr.mxu0 0.0
    %2656 = vmatpush2.msra.mxu0 0.0
    %2657 = vmatprep.subr.mxu0 0.0
    %2658 = vmatpush2.msra.mxu0 0.0
    %2659 = vmatprep.mubr.f32.mxu0 0.0
    %2660 = vmatmul.mubr.f32.gmra.mxu0 %v2590
    %v2661 = vpop.f32.mrf.mxu0
    %v2662 = vadd.f32 %v2587, %v2661
    %v2663 = vpop.f32.mrf.mxu0
    %2664 = vmatprep.mubr.f32.mxu0 0.0
    %2665 = vmatmul.mubr.f32.gmra.mxu0 %v2593
    %v2666 = vpop.f32.mrf.mxu0
    %v2667 = vadd.f32 %v2587, %v2666
    %v2668 = vpop.f32.mrf.mxu0
    %2669 = vdwg.mxu0
    %v2670 = vadd.f32 %v2474, %v2662
    %v2671 = vadd.f32 %v2475, %v2667
    %s2672 = scalar_lea.vmem %s11, 1
    %v2673 = vld [vmem:[%s2672] sm:$0x1]
    %s2674 = scalar_lea.vmem %s12, 1
    %v2675 = vld [vmem:[%s2674] sm:$0x1]
    %v2676 = vsel %vm123, %v2670, 0.0
    %2677 = vadd.xlane.f32.xlu0 %v2676
    %v2678 = vpop.xlane.xlu0 %2677
    %v2679 = vsel %vm123, %v2671, 0.0
    %2680 = vadd.xlane.f32.xlu0 %v2679
    %v2681 = vpop.xlane.xlu0 %2680
    %v2682 = vmul.f32 %v2678, %v1138
    %v2683 = vmul.f32 %v2681, %v1138
    %v2684 = vsub.f32 %v2670, %v2682
    %v2685 = vsub.f32 %v2671, %v2683
    %v2686 = vmul.f32 %v2684, %v2684
    %v2687 = vmul.f32 %v2685, %v2685
    %v2688 = vsel %vm123, %v2686, 0.0
    %2689 = vadd.xlane.f32.xlu0 %v2688
    %v2690 = vpop.xlane.xlu0 %2689
    %v2691 = vsel %vm123, %v2687, 0.0
    %2692 = vadd.xlane.f32.xlu0 %v2691
    %v2693 = vpop.xlane.xlu0 %2692
    %v2694 = vmul.f32 %v2690, %v1138
    %v2695 = vmul.f32 %v2693, %v1138
    %v2696 = vadd.f32 %v2694, 1e-05
    %v2697 = vadd.f32 %v2695, 1e-05
    %v2698 = vrsqrt.pop %v2696
    %v2699 = vrsqrt.pop %v2697
    %v2700 = vmul.f32 %v2684, %v2698
    %v2701 = vmul.f32 %v2685, %v2699
    %v2703 = vlaneseq
    %v2704 = vshrl.u32 %v2703, 7
    %v2705 = vsub.s32 0, %v2704
    %v2706 = vrot.slane %v2673, %v2705
    %v2708 = vmul.f32 %v2700, %v2706
    %v2709 = vmul.f32 %v2701, %v2706
    %v2711 = vlaneseq
    %v2712 = vshrl.u32 %v2711, 7
    %v2713 = vsub.s32 0, %v2712
    %v2714 = vrot.slane %v2675, %v2713
    %v2716 = vadd.f32 %v2708, %v2714
    %v2717 = vadd.f32 %v2709, %v2714
    %v2718 = vld [vmem:[%s13] sm:$0x1]
    %v2719 = vld [vmem:[%s14] sm:$0x1]
    %v2720 = vsel %vm123, %v2716, 0.0
    %2721 = vadd.xlane.f32.xlu0 %v2720
    %v2722 = vpop.xlane.xlu0 %2721
    %v2723 = vsel %vm123, %v2717, 0.0
    %2724 = vadd.xlane.f32.xlu0 %v2723
    %v2725 = vpop.xlane.xlu0 %2724
    %v2726 = vmul.f32 %v2722, %v1138
    %v2727 = vmul.f32 %v2725, %v1138
    %v2728 = vsub.f32 %v2716, %v2726
    %v2729 = vsub.f32 %v2717, %v2727
    %v2730 = vmul.f32 %v2728, %v2728
    %v2731 = vmul.f32 %v2729, %v2729
    %v2732 = vsel %vm123, %v2730, 0.0
    %2733 = vadd.xlane.f32.xlu0 %v2732
    %v2734 = vpop.xlane.xlu0 %2733
    %v2735 = vsel %vm123, %v2731, 0.0
    %2736 = vadd.xlane.f32.xlu0 %v2735
    %v2737 = vpop.xlane.xlu0 %2736
    %v2738 = vmul.f32 %v2734, %v1138
    %v2739 = vmul.f32 %v2737, %v1138
    %v2740 = vadd.f32 %v2738, 1e-05
    %v2741 = vadd.f32 %v2739, 1e-05
    %v2742 = vrsqrt.pop %v2740
    %v2743 = vrsqrt.pop %v2741
    %v2744 = vmul.f32 %v2728, %v2742
    %v2745 = vmul.f32 %v2729, %v2743
    %v2747 = vlaneseq
    %v2748 = vshrl.u32 %v2747, 7
    %v2749 = vsub.s32 0, %v2748
    %v2750 = vrot.slane %v2718, %v2749
    %v2752 = vmul.f32 %v2744, %v2750
    %v2753 = vmul.f32 %v2745, %v2750
    %v2755 = vlaneseq
    %v2756 = vshrl.u32 %v2755, 7
    %v2757 = vsub.s32 0, %v2756
    %v2758 = vrot.slane %v2719, %v2757
    %v2760 = vadd.f32 %v2752, %v2758
    %v2761 = vadd.f32 %v2753, %v2758
    %2762 = vst.msk [vmem:[#allocation5] sm:$0xff] %vm123, %v2760
    %2763 = vst.msk [vmem:[#allocation5 + $0x8] sm:$0xff] %vm123, %v2761
    // Predicated region
    $region66: #{transformer_encoder_forward.1} parent=1 // pred_check
      _
    $region67: #{transformer_encoder_forward.1} parent=1 // pred_check_branch
      %2765 = sbr.rel (0) target = $region69
    $region68: #{transformer_encoder_forward.1} parent=1 // pred_region
      %s2767 = ssub.s32 256, 256
      %2768 = vsyncadd [#allocation4], %s2767
      %s2769 = sshll.u32 [#allocation5], 4
      %s2770 = int_to_ptr.vmem [resolvable:$true] %s2769
      %2775 = dma.vmem_to_hbm [thread:$0]  %s2770, 256, %s15, [#allocation4], 128, 128, 8
    $region69: #{transformer_encoder_forward.1} parent=1 // pred_fallthru
      _
    // Predicated region
    $region70: #{transformer_encoder_forward.1} parent=1 // pred_check
      _
    $region71: #{transformer_encoder_forward.1} parent=1 // pred_check_branch
      %2777 = sbr.rel (0) target = $region73
    $region72: #{transformer_encoder_forward.1} parent=1 // pred_region
      %2778 = dma.done [#allocation4], 256
    $region73: #{transformer_encoder_forward.1} parent=1 // pred_fallthru
      _
    %2779 = vsyncpa [#allocation3], 1
    %2780 = vsyncpa [#allocation4], 1

</llo_original>
